<compile_context>
chip_gen: v6e
topology: v6e:2x2x1
jax: 0.10.0
libtpu: 0.0.40
codegen_flags: <defaults>
</compile_context>

<pallas_src>
import functools

import jax
import jax.numpy as jnp
from jax.experimental import pallas as pl
from jax.experimental.pallas import tpu as pltpu


# ----------------------------------------------------------------------------
# helpers
# ----------------------------------------------------------------------------
def _interp_matrix(n_in, n_out, align_corners=True, dtype=jnp.float32):
    """(n_out, n_in) 1-D linear interpolation matrix."""
    if n_in == 1:
        return jnp.ones((n_out, 1), dtype)
    if align_corners:
        pos = jnp.arange(n_out, dtype=jnp.float32) * (n_in - 1) / max(n_out - 1, 1)
    else:
        pos = (jnp.arange(n_out, dtype=jnp.float32) + 0.5) * (n_in / n_out) - 0.5
        pos = jnp.clip(pos, 0.0, n_in - 1)
    i0 = jnp.clip(jnp.floor(pos).astype(jnp.int32), 0, n_in - 2)
    frac = pos - i0.astype(jnp.float32)
    cols = jnp.arange(n_in, dtype=jnp.int32)
    m = ((cols[None, :] == i0[:, None]) * (1.0 - frac)[:, None]
         + (cols[None, :] == (i0 + 1)[:, None]) * frac[:, None])
    return m.astype(dtype)


def _vmem_limit_bytes():
    """Generation-aware scoped-VMEM limit (v5e/v6e: 128 MiB, v7x: 64 MiB)."""
    cap = 128 * 1024 * 1024
    try:
        cap = int(pltpu.get_tpu_info().vmem_capacity_bytes)
    except Exception:
        pass
    return int(max(32 * 1024 * 1024, min(cap * 3 // 4, 96 * 1024 * 1024)))


def _tile_budget_bytes():
    return int(min(_vmem_limit_bytes() // 6, 8 * 1024 * 1024))


def _pick_tile(n, row_bytes):
    """Largest divisor of n whose rows fit the budget; prefer >= 2 grid steps
    so a "parallel" axis can shard across v7x's two TensorCores."""
    budget = _tile_budget_bytes()
    divs = [t for t in range(1, n + 1) if n % t == 0]
    fit = [t for t in divs if t * max(row_bytes, 1) <= budget] or [1]
    pref = [t for t in fit if n // t >= 2] or fit
    return max(pref)


def _mosaic_params(semantics):
    return pltpu.CompilerParams(dimension_semantics=semantics,
                                vmem_limit_bytes=_vmem_limit_bytes())


# ----------------------------------------------------------------------------
# trilinear 2x upsample (single fused pallas_call, D-padded bf16 output)
# ----------------------------------------------------------------------------
def _upsample_kernel(x_ref, mwt_ref, mh_ref, md_ref, o_ref):
    # x: (t, D, H, W)  mwt: (W, Wo)  mh: (Ho, H)  md: (Do, D)
    # o: (t, Do + 2, Ho*Wo)   (planes 0 and Do+1 are the zero D-halo)
    t, D, H, W = x_ref.shape
    Wo = mwt_ref.shape[1]
    Ho = mh_ref.shape[0]
    Do = md_ref.shape[0]
    n = Ho * Wo

    x = x_ref[...].astype(jnp.float32)
    # W axis: one large 2D MXU matmul.
    xw = jnp.dot(x.reshape(t * D * H, W), mwt_ref[...],
                 preferred_element_type=jnp.float32)            # (t*D*H, Wo)
    # H axis: batched matmul over the t*D planes.
    xw = xw.reshape(t * D, H, Wo)
    mh_b = jnp.broadcast_to(mh_ref[...], (t * D, Ho, H))
    xh = jnp.einsum("boh,bhv->bov", mh_b, xw,
                    preferred_element_type=jnp.float32)          # (t*D, Ho, Wo)
    # D axis: lane-dense (last dim = Ho*Wo) batched matmul.
    xh = xh.reshape(t, D, n)
    md_b = jnp.broadcast_to(md_ref[...], (t, Do, D))
    u = jnp.einsum("bpd,bdn->bpn", md_b, xh,
                   preferred_element_type=jnp.float32)           # (t, Do, n)

    o_ref[:, 1:Do + 1, :] = u.astype(o_ref.dtype)
    o_ref[:, 0:1, :] = jnp.zeros((t, 1, n), o_ref.dtype)
    o_ref[:, Do + 1:Do + 2, :] = jnp.zeros((t, 1, n), o_ref.dtype)


def upsample_trilinear_2x_padded(x, align_corners=True, out_dtype=None):
    """F.interpolate(x, scale_factor=2, mode='trilinear'), NCDHW, returned as a
    (B*C, 2D + 2, 2H * 2W) tensor with zero D-halo planes at both ends."""
    B, C, D, H, W = x.shape
    Do, Ho, Wo = 2 * D, 2 * H, 2 * W
    N = Ho * Wo
    R = B * C
    if out_dtype is None:
        out_dtype = jnp.bfloat16 if x.dtype == jnp.float32 else x.dtype
    in_itm = jnp.dtype(x.dtype).itemsize
    out_itm = jnp.dtype(out_dtype).itemsize

    mwt = _interp_matrix(W, Wo, align_corners).T         # (W, Wo)
    mh = _interp_matrix(H, Ho, align_corners)            # (Ho, H)
    md = _interp_matrix(D, Do, align_corners)            # (Do, D)

    # per-row VMEM estimate: double-buffered in/out blocks + in-kernel temps.
    row_bytes = (2 * D * H * W * in_itm + 4 * D * H * Wo + 4 * D * Ho * H
                 + 12 * D * Ho * Wo + 4 * Do * D + 4 * Do * N
                 + 2 * (Do + 2) * N * out_itm)
    t = _pick_tile(R, row_bytes)

    return pl.pallas_call(
        _upsample_kernel,
        out_shape=jax.ShapeDtypeStruct((R, Do + 2, N), out_dtype),
        grid=(R // t,),
        in_specs=[
            pl.BlockSpec((t, D, H, W), lambda i: (i, 0, 0, 0)),
            pl.BlockSpec((W, Wo), lambda i: (0, 0)),
            pl.BlockSpec((Ho, H), lambda i: (0, 0)),
            pl.BlockSpec((Do, D), lambda i: (0, 0)),
        ],
        out_specs=pl.BlockSpec((t, Do + 2, N), lambda i: (i, 0, 0)),
        compiler_params=_mosaic_params(("parallel",)),
        cost_estimate=pl.CostEstimate(
            flops=int(2 * R * (D * H * Wo * W + D * Ho * Wo * H + Do * N * D)),
            transcendentals=0,
            bytes_accessed=int(R * (D * H * W * in_itm + (Do + 2) * N * out_itm))),
    )(x.reshape(R, D, H, W), mwt, mh, md)


# ----------------------------------------------------------------------------
# fused Conv3d(3,1,1) + bias (im2col matmul, K = 27*Cin) with per-slab stats
# ----------------------------------------------------------------------------
def _conv_stats_kernel(u_hbm, w_ref, b_ref, y_ref, st_ref, u3_ref, *, Ho, Wo):
    bi = pl.program_id(0)
    j = pl.program_id(1)
    cin = u3_ref.shape[0]
    td = u3_ref.shape[1] - 2
    n = Ho * Wo

    # Fetch the D-halo'd slab: padded planes [j*td, j*td + td + 2) of this
    # batch's channels (u_hbm is already zero-padded in D).
    pltpu.sync_copy(
        u_hbm.at[pl.ds(bi * cin, cin), pl.ds(j * td, td + 2), :], u3_ref)

    # In-plane boundary masks, generated in-kernel from iota (no mask input).
    pos = jax.lax.broadcasted_iota(jnp.int32, (1, 1, n), 2)
    hh = pos // Wo
    ww = pos % Wo

    full = u3_ref[...]                                   # (Cin, td+2, N) bf16
    shifted = {}
    for dh in (-1, 0, 1):
        for dw in (-1, 0, 1):
            off = dh * Wo + dw
            s = full if off == 0 else pltpu.roll(full, (-off) % n, 2)
            if off != 0:
                ok = ((hh + dh >= 0) & (hh + dh < Ho)
                      & (ww + dw >= 0) & (ww + dw < Wo))
                s = jnp.where(ok, s, jnp.zeros_like(s))
            shifted[(dh, dw)] = s

    w = w_ref[...]                                       # (Cout, 27*Cin) bf16
    bvec = b_ref[...].astype(jnp.float32)                # (Cout, 1)
    cout = w.shape[0]
    s1 = jnp.zeros((cout, 1), jnp.float32)
    s2 = jnp.zeros((cout, 1), jnp.float32)
    planes = []
    for t in range(td):                                  # per output D plane
        rows = [shifted[(dh, dw)][:, t + dd + 1, :]
                for dd in (-1, 0, 1) for dh in (-1, 0, 1) for dw in (-1, 0, 1)]
        col = jnp.concatenate(rows, axis=0)              # (27*Cin, N) im2col
        acc = jnp.dot(w, col, preferred_element_type=jnp.float32) + bvec
        s1 = s1 + jnp.sum(acc, axis=1, keepdims=True)
        s2 = s2 + jnp.sum(acc * acc, axis=1, keepdims=True)
        planes.append(acc)

    y_ref[0] = jnp.stack(planes, axis=1).astype(y_ref.dtype)   # (Cout, td, N)
    st_ref[0, 0] = jnp.concatenate([s1, s2], axis=1)           # (Cout, 2)


def _norm_lrelu_kernel(y_ref, sc_ref, sh_ref, o_ref, *, slope):
    v = y_ref[...] * sc_ref[...] + sh_ref[...]
    o_ref[...] = jnp.where(v >= 0.0, v, slope * v).astype(o_ref.dtype)


def conv3_instancenorm_lrelu(u_pad, weight, bias, gamma, beta, *, B, Ho, Wo,
                             eps=1e-5, slope=0.01, out_dtype=jnp.float32):
    """3x3x3 Conv3d(pad=1) + InstanceNorm3d(affine) + LeakyReLU.

    `u_pad` is the D-zero-padded, flattened upsampled volume of shape
    (B*Cin, Do + 2, Ho*Wo)."""
    Cout, Cin = weight.shape[0], weight.shape[1]
    Do = u_pad.shape[1] - 2
    N = Ho * Wo
    assert u_pad.shape == (B * Cin, Do + 2, N)
    u_itm = jnp.dtype(u_pad.dtype).itemsize

    # D-slab size: a multiple of 8 (y block legality) or the full Do.
    td = 8 if Do % 8 == 0 else Do
    nslab = Do // td

    # tap-major flattened weights: column = ((kd*3 + kh)*3 + kw)*Cin + ci
    w_flat = jnp.transpose(weight, (0, 2, 3, 4, 1)).reshape(
        Cout, 27 * Cin).astype(u_pad.dtype)
    b2 = bias.reshape(Cout, 1).astype(jnp.float32)

    y, stats = pl.pallas_call(
        functools.partial(_conv_stats_kernel, Ho=Ho, Wo=Wo),
        out_shape=(jax.ShapeDtypeStruct((B, Cout, Do, N), jnp.float32),
                   jax.ShapeDtypeStruct((B, nslab, Cout, 2), jnp.float32)),
        grid=(B, nslab),
        in_specs=[
            pl.BlockSpec(memory_space=pl.ANY),               # u_pad stays in HBM
            pl.BlockSpec((Cout, 27 * Cin), lambda b, j: (0, 0)),
            pl.BlockSpec((Cout, 1), lambda b, j: (0, 0)),
        ],
        out_specs=(
            pl.BlockSpec((1, Cout, td, N), lambda b, j: (b, 0, j, 0)),
            pl.BlockSpec((1, 1, Cout, 2), lambda b, j: (b, j, 0, 0)),
        ),
        scratch_shapes=[pltpu.VMEM((Cin, td + 2, N), u_pad.dtype)],
        compiler_params=_mosaic_params(("parallel", "parallel")),
        cost_estimate=pl.CostEstimate(
            flops=int(2 * B * Do * N * Cout * 27 * Cin),
            transcendentals=0,
            bytes_accessed=int(B * Cin * (Do + 2) * N * u_itm * (td + 2) // td
                               + B * Cout * Do * N * 4)),
    )(u_pad, w_flat, b2)

    # InstanceNorm statistics (per-instance, biased variance — PyTorch train
    # behavior); tiny reduction over the slab axis done in plain JAX.
    cnt = float(Do * N)
    s1 = stats[..., 0].sum(axis=1)                       # (B, Cout)
    s2 = stats[..., 1].sum(axis=1)
    mean = s1 / cnt
    var = jnp.maximum(s2 / cnt - mean * mean, 0.0)
    scale = gamma[None, :] * jax.lax.rsqrt(var + eps)    # (B, Cout)
    shift = beta[None, :] - mean * scale

    rows = B * Cout
    yr = y.reshape(rows, Do, N)
    sc = scale.reshape(rows, 1, 1).astype(jnp.float32)
    sh = shift.reshape(rows, 1, 1).astype(jnp.float32)
    tb = _pick_tile(rows, Do * N * 4 * 4)

    out = pl.pallas_call(
        functools.partial(_norm_lrelu_kernel, slope=slope),
        out_shape=jax.ShapeDtypeStruct((rows, Do, N), out_dtype),
        grid=(rows // tb,),
        in_specs=[
            pl.BlockSpec((tb, Do, N), lambda i: (i, 0, 0)),
            pl.BlockSpec((tb, 1, 1), lambda i: (i, 0, 0)),
            pl.BlockSpec((tb, 1, 1), lambda i: (i, 0, 0)),
        ],
        out_specs=pl.BlockSpec((tb, Do, N), lambda i: (i, 0, 0)),
        compiler_params=_mosaic_params(("parallel",)),
    )(yr, sc, sh)

    return out.reshape(B, Cout, Do, Ho, Wo)


# ----------------------------------------------------------------------------
# module wrappers (mirror the PyTorch classes)
# ----------------------------------------------------------------------------
class Upsample:
    def __init__(self, size=None, scale_factor=None, mode="nearest",
                 align_corners=True):
        self.size = size
        self.scale_factor = scale_factor
        self.mode = mode
        self.align_corners = align_corners

    def __call__(self, x):
        # TODO(synk): only the configuration used by UpsamplingModule
        # (scale_factor=2, mode='trilinear') is implemented.
        assert self.size is None and self.scale_factor == 2 and self.mode == "trilinear"
        B, C, D, H, W = x.shape
        up = upsample_trilinear_2x_padded(x, align_corners=self.align_corners,
                                          out_dtype=x.dtype)
        return up[:, 1:2 * D + 1, :].reshape(B, C, 2 * D, 2 * H, 2 * W)


class UpsamplingModule:
    """JAX/Pallas counterpart of pydactim's UpsamplingModule (forward only)."""

    def __init__(self, in_channels, out_channels, leakiness=0.01, conv_bias=True,
                 inst_norm_affine=True, lrelu_inplace=True, key=None):
        if key is None:
            key = jax.random.PRNGKey(0)
        kw, kb = jax.random.split(key)
        bound = 1.0 / float((in_channels * 27) ** 0.5)
        self.weight = jax.random.uniform(
            kw, (out_channels, in_channels, 3, 3, 3), jnp.float32, -bound, bound)
        self.bias = (jax.random.uniform(kb, (out_channels,), jnp.float32, -bound, bound)
                     if conv_bias else jnp.zeros((out_channels,), jnp.float32))
        self.gamma = jnp.ones((out_channels,), jnp.float32)
        self.beta = jnp.zeros((out_channels,), jnp.float32)
        self.leakiness = leakiness
        self.upsample = Upsample(scale_factor=2, mode="trilinear", align_corners=True)

    def __call__(self, x):
        B, Cin, D, H, W = x.shape
        # Fused path: the upsample writes a D-padded bf16 volume consumed
        # directly by the conv kernel (no unpadded intermediate is formed).
        u_pad = upsample_trilinear_2x_padded(
            x, align_corners=self.upsample.align_corners)
        return conv3_instancenorm_lrelu(
            u_pad, self.weight, self.bias, self.gamma, self.beta,
            B=B, Ho=2 * H, Wo=2 * W, slope=self.leakiness, out_dtype=x.dtype)


# ----------------------------------------------------------------------------
# pure-JAX reference + smoke test
# ----------------------------------------------------------------------------
def _reference_forward(x, weight, bias, gamma, beta, slope=0.01, eps=1e-5):
    B, Cin, D, H, W = x.shape
    md = _interp_matrix(D, 2 * D)
    mh = _interp_matrix(H, 2 * H)
    mw = _interp_matrix(W, 2 * W)
    hp = jax.lax.Precision.HIGHEST
    u = jnp.einsum("pd,bcdhw->bcphw", md, x, precision=hp)
    u = jnp.einsum("qh,bcphw->bcpqw", mh, u, precision=hp)
    u = jnp.einsum("rw,bcpqw->bcpqr", mw, u, precision=hp)
    y = jax.lax.conv_general_dilated(
        u, weight, window_strides=(1, 1, 1),
        padding=((1, 1), (1, 1), (1, 1)),
        dimension_numbers=("NCDHW", "OIDHW", "NCDHW"),
        precision=hp)
    y = y + bias[None, :, None, None, None]
    mean = y.mean(axis=(2, 3, 4), keepdims=True)
    var = jnp.mean(jnp.square(y - mean), axis=(2, 3, 4), keepdims=True)
    y = (y - mean) * jax.lax.rsqrt(var + eps)
    y = gamma[None, :, None, None, None] * y + beta[None, :, None, None, None]
    return jnp.where(y >= 0, y, slope * y)


if __name__ == "__main__":
    key = jax.random.PRNGKey(0)
    kx, kw, kb, kg, kbt = jax.random.split(key, 5)
    B, Cin, Cout, D, H, W = 2, 4, 8, 8, 8, 8

    x = jax.random.normal(kx, (B, Cin, D, H, W), jnp.float32)
    weight = 0.1 * jax.random.normal(kw, (Cout, Cin, 3, 3, 3), jnp.float32)
    bias = 0.1 * jax.random.normal(kb, (Cout,), jnp.float32)
    gamma = 1.0 + 0.1 * jax.random.normal(kg, (Cout,), jnp.float32)
    beta = 0.1 * jax.random.normal(kbt, (Cout,), jnp.float32)

    mod = UpsamplingModule(Cin, Cout)
    mod.weight, mod.bias, mod.gamma, mod.beta = weight, bias, gamma, beta

    out = jax.block_until_ready(mod(x))
    assert out.shape == (B, Cout, 2 * D, 2 * H, 2 * W), out.shape

    ref = jax.block_until_ready(_reference_forward(x, weight, bias, gamma, beta))
    max_err = float(jnp.max(jnp.abs(out - ref)))
    # bf16 is used for the upsampled HBM intermediate and the conv MXU operands
    # (f32 accumulation / statistics), so allow a slightly looser tolerance.
    assert max_err < 6e-2, max_err

    print("KERNEL_OK")
</pallas_src>

<mosaic_0001>
module attributes {stable_mosaic.version = 11 : i64} {
  func.func @_upsample_kernel(%arg0: i32, %arg1: memref<4x8x8x8xf32, #tpu.memory_space<vmem>>, %arg2: memref<8x16xf32, #tpu.memory_space<vmem>>, %arg3: memref<16x8xf32, #tpu.memory_space<vmem>>, %arg4: memref<16x8xf32, #tpu.memory_space<vmem>>, %arg5: memref<4x18x256xbf16, #tpu.memory_space<vmem>>) attributes {dimension_semantics = [#tpu.dimension_semantics<parallel>], iteration_bounds = array<i64: 2>, scalar_prefetch = 0 : i64, scratch_operands = 0 : i64, tpu.core_type = #tpu.core_type<tc>, window_params = [{transform_indices = @transform_0, window_bounds = array<i64: 4, 8, 8, 8>}, {pipeline_mode = #tpu.pipeline_mode<synchronous>, transform_indices = @transform_1, window_bounds = array<i64: 8, 16>}, {pipeline_mode = #tpu.pipeline_mode<synchronous>, transform_indices = @transform_2, window_bounds = array<i64: 16, 8>}, {pipeline_mode = #tpu.pipeline_mode<synchronous>, transform_indices = @transform_3, window_bounds = array<i64: 16, 8>}, {transform_indices = @transform_4, window_bounds = array<i64: 4, 18, 256>}]} {
    %c0 = arith.constant 0 : index
    %c0_0 = arith.constant 0 : index
    %c0_1 = arith.constant 0 : index
    %c0_2 = arith.constant 0 : index
    %0 = vector.load %arg1[%c0, %c0_0, %c0_1, %c0_2] : memref<4x8x8x8xf32, #tpu.memory_space<vmem>>, vector<4x8x8x8xf32>
    %1 = vector.shape_cast %0 : vector<4x8x8x8xf32> to vector<256x8xf32>
    %c0_3 = arith.constant 0 : index
    %c0_4 = arith.constant 0 : index
    %2 = vector.load %arg2[%c0_3, %c0_4] : memref<8x16xf32, #tpu.memory_space<vmem>>, vector<8x16xf32>
    %cst = arith.constant dense<0.000000e+00> : vector<256x16xf32>
    %3 = tpu.matmul %1, %2, %cst {dimension_numbers = #tpu.dot_dimension_numbers<[1], [0], [0], [1], [0, 0, 1, 1], [], []>} : vector<256x8xf32>, vector<8x16xf32>, vector<256x16xf32> -> vector<256x16xf32>
    %4 = vector.shape_cast %3 : vector<256x16xf32> to vector<32x8x16xf32>
    %c0_5 = arith.constant 0 : index
    %c0_6 = arith.constant 0 : index
    %5 = vector.load %arg3[%c0_5, %c0_6] : memref<16x8xf32, #tpu.memory_space<vmem>>, vector<16x8xf32>
    %6 = vector.shape_cast %5 : vector<16x8xf32> to vector<1x16x8xf32>
    %7 = vector.broadcast %6 : vector<1x16x8xf32> to vector<32x16x8xf32>
    "tpu.trace_start"() <{level = 10 : i32, message = "boh,bhv->bov"}> : () -> ()
    %cst_7 = arith.constant dense<0.000000e+00> : vector<32x16x16xf32>
    %8 = tpu.matmul %7, %4, %cst_7 {dimension_numbers = #tpu.dot_dimension_numbers<[2], [1], [1], [2], [0, 0, 0, 1, 1, 2], [0], [0]>} : vector<32x16x8xf32>, vector<32x8x16xf32>, vector<32x16x16xf32> -> vector<32x16x16xf32>
    "tpu.trace_stop"() : () -> ()
    %9 = vector.shape_cast %8 : vector<32x16x16xf32> to vector<4x8x256xf32>
    %c0_8 = arith.constant 0 : index
    %c0_9 = arith.constant 0 : index
    %10 = vector.load %arg4[%c0_8, %c0_9] : memref<16x8xf32, #tpu.memory_space<vmem>>, vector<16x8xf32>
    %11 = vector.shape_cast %10 : vector<16x8xf32> to vector<1x16x8xf32>
    %12 = vector.broadcast %11 : vector<1x16x8xf32> to vector<4x16x8xf32>
    "tpu.trace_start"() <{level = 10 : i32, message = "bpd,bdn->bpn"}> : () -> ()
    %cst_10 = arith.constant dense<0.000000e+00> : vector<4x16x256xf32>
    %13 = tpu.matmul %12, %9, %cst_10 {dimension_numbers = #tpu.dot_dimension_numbers<[2], [1], [1], [2], [0, 0, 0, 1, 1, 2], [0], [0]>} : vector<4x16x8xf32>, vector<4x8x256xf32>, vector<4x16x256xf32> -> vector<4x16x256xf32>
    "tpu.trace_stop"() : () -> ()
    %14 = arith.truncf %13 : vector<4x16x256xf32> to vector<4x16x256xbf16>
    %c0_11 = arith.constant 0 : index
    %c1 = arith.constant 1 : index
    %c0_12 = arith.constant 0 : index
    %15 = vector.load %arg5[%c0_11, %c1, %c0_12] : memref<4x18x256xbf16, #tpu.memory_space<vmem>>, vector<4x16x256xbf16>
    tpu.vector_store %arg5[%c0_11, %c1, %c0_12], %14 {strides = array<i32>} : memref<4x18x256xbf16, #tpu.memory_space<vmem>>, vector<4x16x256xbf16>,
    %cst_13 = arith.constant 0.000000e+00 : bf16
    %16 = vector.broadcast %cst_13 : bf16 to vector<4x1x256xbf16>
    %c0_14 = arith.constant 0 : index
    %c0_15 = arith.constant 0 : index
    %c0_16 = arith.constant 0 : index
    %17 = vector.load %arg5[%c0_14, %c0_15, %c0_16] : memref<4x18x256xbf16, #tpu.memory_space<vmem>>, vector<4x1x256xbf16>
    tpu.vector_store %arg5[%c0_14, %c0_15, %c0_16], %16 {strides = array<i32>} : memref<4x18x256xbf16, #tpu.memory_space<vmem>>, vector<4x1x256xbf16>,
    %cst_17 = arith.constant 0.000000e+00 : bf16
    %18 = vector.broadcast %cst_17 : bf16 to vector<4x1x256xbf16>
    %c0_18 = arith.constant 0 : index
    %c17 = arith.constant 17 : index
    %c0_19 = arith.constant 0 : index
    %19 = vector.load %arg5[%c0_18, %c17, %c0_19] : memref<4x18x256xbf16, #tpu.memory_space<vmem>>, vector<4x1x256xbf16>
    tpu.vector_store %arg5[%c0_18, %c17, %c0_19], %18 {strides = array<i32>} : memref<4x18x256xbf16, #tpu.memory_space<vmem>>, vector<4x1x256xbf16>,
    return
  }
  func.func @transform_0(%arg0: i32) -> (i32, i32, i32, i32) {
    %c0_i32 = arith.constant 0 : i32
    %c0_i32_0 = arith.constant 0 : i32
    %c0_i32_1 = arith.constant 0 : i32
    %c0_i32_2 = arith.constant 0 : i32
    return %arg0, %c0_i32, %c0_i32_0, %c0_i32_1 : i32, i32, i32, i32
  }
  func.func @transform_1(%arg0: i32) -> (i32, i32) {
    %c0_i32 = arith.constant 0 : i32
    %c0_i32_0 = arith.constant 0 : i32
    %c0_i32_1 = arith.constant 0 : i32
    return %c0_i32, %c0_i32_0 : i32, i32
  }
  func.func @transform_2(%arg0: i32) -> (i32, i32) {
    %c0_i32 = arith.constant 0 : i32
    %c0_i32_0 = arith.constant 0 : i32
    %c0_i32_1 = arith.constant 0 : i32
    return %c0_i32, %c0_i32_0 : i32, i32
  }
  func.func @transform_3(%arg0: i32) -> (i32, i32) {
    %c0_i32 = arith.constant 0 : i32
    %c0_i32_0 = arith.constant 0 : i32
    %c0_i32_1 = arith.constant 0 : i32
    return %c0_i32, %c0_i32_0 : i32, i32
  }
  func.func @transform_4(%arg0: i32) -> (i32, i32, i32) {
    %c0_i32 = arith.constant 0 : i32
    %c0_i32_0 = arith.constant 0 : i32
    %c0_i32_1 = arith.constant 0 : i32
    return %arg0, %c0_i32, %c0_i32_0 : i32, i32, i32
  }
}

</mosaic_0001>

<llo_original>
// kernel: tpu_custom_call.1
$region0: #{tpu_custom_call.1}
  #allocation0 [shape = 'u32[]', space=smem, size = 0x4, offset = 0x4, fixed_abs, tag = 'smem constant byte address 0x4 - core index']
  #allocation1 [shape = 'u32[144,128]{1,0:T(1,128)}', space=vmem, size = 0x12000, scoped, tag = 'internal scratch']
  %s0 = inlined_call_operand.hbm [shape: f32[8,8,8,8], index: 0, kind: input, shape index: {}]
  %s1 = inlined_call_operand.vmem [shape: f32[8,16], index: 1, kind: input, shape index: {}]
  %s2 = inlined_call_operand.vmem [shape: f32[16,8], index: 2, kind: input, shape index: {}]
  %s3 = inlined_call_operand.vmem [shape: f32[16,8], index: 3, kind: input, shape index: {}]
  %s4 = inlined_call_operand.vmem [shape: bf16[8,18,256], index: 4, kind: output, shape index: {}]
  %s5 = sld [smem:[#allocation0]]
  $region53: #{tpu_custom_call.1} parent=0
    _
  %s7 = ssub.s32 1, %s5
  %s8 = scalar_select 0, %s7, %s5
  $region1: #{tpu_custom_call.1} parent=0
    #allocation2 [shape = 'u8[262144]{0}', space=vmem, size = 0x40000, scoped, tag = 'input window, operand 0']
    #allocation3 [shape = 's32[2]{0}', space=sflag, size = 0x8, scoped, tag = 'scoped memory for tpu_custom_call.1']
    %9 = vsyncpa [#allocation3], 0
    %s10 = scalar_lea.sflag [#allocation3], 1
    %11 = vsyncpa %s10, 0
    loop: start=0, step=1, limit=4
    $region2: #{tpu_custom_call.1} parent=1 // loop_pre_header
      _
    $region3: #{tpu_custom_call.1} parent=1 // loop_header
      %s13 = sphi 0, %s17
      %p14 = scmp.ge.s32.totalorder %s13, 4
      %s23 = sphi 0, %s25
      %s26 = sphi 0, %s23
      %s27 = sphi 0, %s26
      %s43 = sphi 0, %s27
      %s47 = sphi 0, %s47
      %s49 = sphi 0, %s47
      %s50 = sphi 0, %s49
      %s64 = sphi 0, %s50
      %s68 = sphi 0, %s68
      %s70 = sphi 0, %s68
      %s71 = sphi 0, %s70
      %s85 = sphi 0, %s71
      %s89 = sphi 0, %s89
      %s91 = sphi 0, %s89
      %s92 = sphi 0, %s91
      %s106 = sphi 0, %s92
      %s112 = sphi 0, %s114
      %s115 = sphi 0, %s112
      %s116 = sphi 0, %s115
      %s132 = sphi 0, %s116
    $region4: #{tpu_custom_call.1} parent=1 // loop_header_branch
      %16 = sbr.rel (%p14) target = $region8
    $region5: #{tpu_custom_call.1} parent=1 // loop_body
      %s18 = ssub.s32 %s13, 1
      %s19 = ssub.s32 %s13, 2
      %s20 = sadd.s32 %s13, 1
      %s21 = ssub.s32 %s13, %s20
      %p22 = scmp.eq.s32.totalorder %s21, 0
      %s24 = sadd.s32 %s23, 1
      %s25 = scalar_select %p22, %s23, %s24
      %p28 = pneg %p22
      %p29 = scmp.eq.s32.totalorder %s13, 1
      %p30 = por %p28, %p29
      %p31 = scmp.ne.s32.totalorder %s23, %s26
      %p32 = scmp.eq.s32.totalorder %s13, 0
      %p33 = por %p31, %p32
      %p34 = scmp.ne.s32.totalorder %s23, %s26
      %p35 = scmp.eq.s32.totalorder %s18, 1
      %p36 = por %p34, %p35
      %p37 = scmp.ne.s32.totalorder %s26, %s27
      %p38 = scmp.eq.s32.totalorder %s18, 0
      %p39 = por %p37, %p38
      %p40 = scmp.ne.s32.totalorder %s26, %s27
      %p41 = scmp.eq.s32.totalorder %s19, 1
      %p42 = por %p40, %p41
      %p44 = scmp.ne.s32.totalorder %s27, %s43
      %p45 = scmp.eq.s32.totalorder %s19, 0
      %p46 = por %p44, %p45
      %s48 = sadd.s32 %s47, 1
      %p51 = scmp.eq.s32.totalorder %s13, 1
      %p52 = scmp.ne.s32.totalorder %s47, %s49
      %p53 = scmp.eq.s32.totalorder %s13, 0
      %p54 = por %p52, %p53
      %p55 = scmp.ne.s32.totalorder %s47, %s49
      %p56 = scmp.eq.s32.totalorder %s18, 1
      %p57 = por %p55, %p56
      %p58 = scmp.ne.s32.totalorder %s49, %s50
      %p59 = scmp.eq.s32.totalorder %s18, 0
      %p60 = por %p58, %p59
      %p61 = scmp.ne.s32.totalorder %s49, %s50
      %p62 = scmp.eq.s32.totalorder %s19, 1
      %p63 = por %p61, %p62
      %p65 = scmp.ne.s32.totalorder %s50, %s64
      %p66 = scmp.eq.s32.totalorder %s19, 0
      %p67 = por %p65, %p66
      %s69 = sadd.s32 %s68, 1
      %p72 = scmp.eq.s32.totalorder %s13, 1
      %p73 = scmp.ne.s32.totalorder %s68, %s70
      %p74 = scmp.eq.s32.totalorder %s13, 0
      %p75 = por %p73, %p74
      %p76 = scmp.ne.s32.totalorder %s68, %s70
      %p77 = scmp.eq.s32.totalorder %s18, 1
      %p78 = por %p76, %p77
      %p79 = scmp.ne.s32.totalorder %s70, %s71
      %p80 = scmp.eq.s32.totalorder %s18, 0
      %p81 = por %p79, %p80
      %p82 = scmp.ne.s32.totalorder %s70, %s71
      %p83 = scmp.eq.s32.totalorder %s19, 1
      %p84 = por %p82, %p83
      %p86 = scmp.ne.s32.totalorder %s71, %s85
      %p87 = scmp.eq.s32.totalorder %s19, 0
      %p88 = por %p86, %p87
      %s90 = sadd.s32 %s89, 1
      %p93 = scmp.eq.s32.totalorder %s13, 1
      %p94 = scmp.ne.s32.totalorder %s89, %s91
      %p95 = scmp.eq.s32.totalorder %s13, 0
      %p96 = por %p94, %p95
      %p97 = scmp.ne.s32.totalorder %s89, %s91
      %p98 = scmp.eq.s32.totalorder %s18, 1
      %p99 = por %p97, %p98
      %p100 = scmp.ne.s32.totalorder %s91, %s92
      %p101 = scmp.eq.s32.totalorder %s18, 0
      %p102 = por %p100, %p101
      %p103 = scmp.ne.s32.totalorder %s91, %s92
      %p104 = scmp.eq.s32.totalorder %s19, 1
      %p105 = por %p103, %p104
      %p107 = scmp.ne.s32.totalorder %s92, %s106
      %p108 = scmp.eq.s32.totalorder %s19, 0
      %p109 = por %p107, %p108
      %s110 = ssub.s32 %s13, %s20
      %p111 = scmp.eq.s32.totalorder %s110, 0
      %s113 = sadd.s32 %s112, 1
      %s114 = scalar_select %p111, %s112, %s113
      %p117 = pneg %p111
      %p118 = scmp.eq.s32.totalorder %s13, 1
      %p119 = por %p117, %p118
      %p120 = scmp.ne.s32.totalorder %s112, %s115
      %p121 = scmp.eq.s32.totalorder %s13, 0
      %p122 = por %p120, %p121
      %p123 = scmp.ne.s32.totalorder %s112, %s115
      %p124 = scmp.eq.s32.totalorder %s18, 1
      %p125 = por %p123, %p124
      %p126 = scmp.ne.s32.totalorder %s115, %s116
      %p127 = scmp.eq.s32.totalorder %s18, 0
      %p128 = por %p126, %p127
      %p129 = scmp.ne.s32.totalorder %s115, %s116
      %p130 = scmp.eq.s32.totalorder %s19, 1
      %p131 = por %p129, %p130
      %p133 = scmp.ne.s32.totalorder %s116, %s132
      %p134 = scmp.eq.s32.totalorder %s19, 0
      %p135 = por %p133, %p134
      %p136 = scmp.le.s32.totalorder 1, %s13
      %p137 = scmp.lt.s32.totalorder %s13, 3
      %p138 = pnand %p136, %p137
      %p139 = pneg %p138
      // Predicated region
      $region9: #{tpu_custom_call.1} parent=5 // pred_check
        _
      $region10: #{tpu_custom_call.1} parent=5 // pred_check_branch
        %141 = sbr.rel (%p138) target = $region12
      $region11: #{tpu_custom_call.1} parent=5 // pred_region
        %s142 = ssub.s32 %s13, 1
        // Predicated region
        $region13: #{tpu_custom_call.1} parent=11 // pred_check
          %p143 = pneg %p60
        $region14: #{tpu_custom_call.1} parent=11 // pred_check_branch
          %145 = sbr.rel (%p143) target = $region16
        $region15: #{tpu_custom_call.1} parent=11 // pred_region
          _
        $region16: #{tpu_custom_call.1} parent=11 // pred_fallthru
          _
        // Predicated region
        $region17: #{tpu_custom_call.1} parent=11 // pred_check
          %p146 = pneg %p81
        $region18: #{tpu_custom_call.1} parent=11 // pred_check_branch
          %148 = sbr.rel (%p146) target = $region20
        $region19: #{tpu_custom_call.1} parent=11 // pred_region
          _
        $region20: #{tpu_custom_call.1} parent=11 // pred_fallthru
          _
        // Predicated region
        $region21: #{tpu_custom_call.1} parent=11 // pred_check
          %p149 = pneg %p102
        $region22: #{tpu_custom_call.1} parent=11 // pred_check_branch
          %151 = sbr.rel (%p149) target = $region24
        $region23: #{tpu_custom_call.1} parent=11 // pred_region
          _
        $region24: #{tpu_custom_call.1} parent=11 // pred_fallthru
          _
      $region12: #{tpu_custom_call.1} parent=5 // pred_fallthru
        _
      %p152 = scmp.lt.s32.totalorder %s13, 2
      // Predicated region
      $region25: #{tpu_custom_call.1} parent=5 // pred_check
        %p153 = pneg %p152
      $region26: #{tpu_custom_call.1} parent=5 // pred_check_branch
        %155 = sbr.rel (%p153) target = $region28
      $region27: #{tpu_custom_call.1} parent=5 // pred_region
        // Predicated region
        $region29: #{tpu_custom_call.1} parent=27 // pred_check
          %p156 = pneg %p33
        $region30: #{tpu_custom_call.1} parent=27 // pred_check_branch
          %158 = sbr.rel (%p156) target = $region32
        $region31: #{tpu_custom_call.1} parent=27 // pred_region
          %s159 = sand.u32 %s23, 1
          %s160 = scalar_lea.sflag [#allocation3], %s159
          %s161 = sand.u32 %s23, 1
          %s162 = smul.addr %s161, 256
          %s163 = scalar_lea.vmem [#allocation2], %s162
          %s164 = smul.u32 4, %s13
          %s166 = ssub.s32 4096, 4096
          %167 = vsyncadd %s160, %s166
          %s168 = smul.addr %s164, 8
          %s169 = smul.addr %s168, 128
          %s170 = scalar_lea.hbm %s0, %s169
          %s171 = sshll.u32 %s163, 4
          %s172 = int_to_ptr.vmem [resolvable:$true] %s171
          %177 = dma.hbm_to_vmem [thread:$0]  %s170, 4096, %s172, %s160, 128, 128, 8
        $region32: #{tpu_custom_call.1} parent=27 // pred_fallthru
          _
      $region28: #{tpu_custom_call.1} parent=5 // pred_fallthru
        _
      %p178 = scmp.le.s32.totalorder 1, %s13
      %p179 = scmp.lt.s32.totalorder %s13, 3
      %p180 = pnand %p178, %p179
      %p181 = pneg %p180
      // Predicated region
      $region33: #{tpu_custom_call.1} parent=5 // pred_check
        _
      $region34: #{tpu_custom_call.1} parent=5 // pred_check_branch
        %183 = sbr.rel (%p180) target = $region36
      $region35: #{tpu_custom_call.1} parent=5 // pred_region
        %s184 = ssub.s32 %s13, 1
        %s185 = sand.u32 %s26, 1
        %s186 = scalar_lea.sflag [#allocation3], %s185
        %s187 = sand.u32 %s26, 1
        %s188 = smul.addr %s187, 256
        %s189 = scalar_lea.vmem [#allocation2], %s188
        // Predicated region
        $region37: #{tpu_custom_call.1} parent=35 // pred_check
          %p190 = pneg %p39
        $region38: #{tpu_custom_call.1} parent=35 // pred_check_branch
          %192 = sbr.rel (%p190) target = $region40
        $region39: #{tpu_custom_call.1} parent=35 // pred_region
          %193 = dma.done %s186, 4096
        $region40: #{tpu_custom_call.1} parent=35 // pred_fallthru
          _
        %s194 = sand.u32 %s26, 1
        %s195 = scalar_lea.sflag [#allocation3], %s194
        %s196 = sand.u32 %s26, 1
        %s197 = smul.addr %s196, 256
        %s198 = scalar_lea.vmem [#allocation2], %s197
        %p199 = pneg %p39
        %p200 = pneg %p36
        %p201 = pneg %p60
        %p202 = pneg %p57
        %p203 = pneg %p81
        %p204 = pneg %p78
        %p205 = pneg %p102
        %p206 = pneg %p99
        %p207 = pneg %p128
        %p208 = pneg %p125
        %s209 = smul.u32 4, %s18
        %p210 = scmp.lt.s32.totalorder %s209, 7
        %s211 = scalar_select %p210, %s209, 7
        %s212 = smul.addr %s211, 6
        %s213 = smul.addr %s212, 4
        %s214 = scalar_lea.vmem %s4, %s213
        %s215 = smul.u32 4, %s18
        %s216 = smul.u32 4, %s18
        %p217 = scmp.lt.s32.totalorder %s216, 7
        %s218 = scalar_select %p217, %s216, 7
        %s219 = smul.addr %s218, 6
        %s220 = smul.addr %s219, 4
        %s221 = scalar_lea.vmem %s4, %s220
        %s222 = smul.u32 4, %s18
        %v224 = vld [vmem:[%s189] sm:$0xff]
        %v225 = vld [vmem:[%s189 + $0x8] sm:$0xff]
        %v226 = vld [vmem:[%s189 + $0x10] sm:$0xff]
        %v227 = vld [vmem:[%s189 + $0x18] sm:$0xff]
        %v228 = vld [vmem:[%s189 + $0x20] sm:$0xff]
        %v229 = vld [vmem:[%s189 + $0x28] sm:$0xff]
        %v230 = vld [vmem:[%s189 + $0x30] sm:$0xff]
        %v231 = vld [vmem:[%s189 + $0x38] sm:$0xff]
        %v232 = vld [vmem:[%s189 + $0x40] sm:$0xff]
        %v233 = vld [vmem:[%s189 + $0x48] sm:$0xff]
        %v234 = vld [vmem:[%s189 + $0x50] sm:$0xff]
        %v235 = vld [vmem:[%s189 + $0x58] sm:$0xff]
        %v236 = vld [vmem:[%s189 + $0x60] sm:$0xff]
        %v237 = vld [vmem:[%s189 + $0x68] sm:$0xff]
        %v238 = vld [vmem:[%s189 + $0x70] sm:$0xff]
        %v239 = vld [vmem:[%s189 + $0x78] sm:$0xff]
        %v240 = vld [vmem:[%s189 + $0x80] sm:$0xff]
        %v241 = vld [vmem:[%s189 + $0x88] sm:$0xff]
        %v242 = vld [vmem:[%s189 + $0x90] sm:$0xff]
        %v243 = vld [vmem:[%s189 + $0x98] sm:$0xff]
        %v244 = vld [vmem:[%s189 + $0xa0] sm:$0xff]
        %v245 = vld [vmem:[%s189 + $0xa8] sm:$0xff]
        %v246 = vld [vmem:[%s189 + $0xb0] sm:$0xff]
        %v247 = vld [vmem:[%s189 + $0xb8] sm:$0xff]
        %v248 = vld [vmem:[%s189 + $0xc0] sm:$0xff]
        %v249 = vld [vmem:[%s189 + $0xc8] sm:$0xff]
        %v250 = vld [vmem:[%s189 + $0xd0] sm:$0xff]
        %v251 = vld [vmem:[%s189 + $0xd8] sm:$0xff]
        %v252 = vld [vmem:[%s189 + $0xe0] sm:$0xff]
        %v253 = vld [vmem:[%s189 + $0xe8] sm:$0xff]
        %v254 = vld [vmem:[%s189 + $0xf0] sm:$0xff]
        %v255 = vld [vmem:[%s189 + $0xf8] sm:$0xff]
        %v256 = vld [vmem:[%s1] sm:$0xff]
        %vm257 = vcmask 64512
        %v259 = vsel %vm257, %v224, 0
        %v262 = vsel %vm257, %v225, 0
        %v265 = vsel %vm257, %v226, 0
        %v268 = vsel %vm257, %v227, 0
        %v271 = vsel %vm257, %v228, 0
        %v274 = vsel %vm257, %v229, 0
        %v277 = vsel %vm257, %v230, 0
        %v280 = vsel %vm257, %v231, 0
        %v283 = vsel %vm257, %v232, 0
        %v286 = vsel %vm257, %v233, 0
        %v289 = vsel %vm257, %v234, 0
        %v292 = vsel %vm257, %v235, 0
        %v295 = vsel %vm257, %v236, 0
        %v298 = vsel %vm257, %v237, 0
        %v301 = vsel %vm257, %v238, 0
        %v304 = vsel %vm257, %v239, 0
        %v307 = vsel %vm257, %v240, 0
        %v310 = vsel %vm257, %v241, 0
        %v313 = vsel %vm257, %v242, 0
        %v316 = vsel %vm257, %v243, 0
        %v319 = vsel %vm257, %v244, 0
        %v322 = vsel %vm257, %v245, 0
        %v325 = vsel %vm257, %v246, 0
        %v328 = vsel %vm257, %v247, 0
        %v331 = vsel %vm257, %v248, 0
        %v334 = vsel %vm257, %v249, 0
        %v337 = vsel %vm257, %v250, 0
        %v340 = vsel %vm257, %v251, 0
        %v343 = vsel %vm257, %v252, 0
        %v346 = vsel %vm257, %v253, 0
        %v349 = vsel %vm257, %v254, 0
        %v352 = vsel %vm257, %v255, 0
        %354 = vmatprep.subr.mxu0 0.0
        %355 = vmatpush1.msra.mxu0 0.0
        %356 = vmatprep.subr.mxu0 0.0
        %357 = vmatpush1.msra.mxu0 0.0
        %358 = vmatprep.subr.mxu0 0.0
        %359 = vmatpush1.msra.mxu0 0.0
        %360 = vmatprep.subr.mxu0 0.0
        %361 = vmatpush1.msra.mxu0 0.0
        %362 = vmatprep.subr.mxu0 0.0
        %363 = vmatpush1.msra.mxu0 0.0
        %364 = vmatprep.subr.mxu0 0.0
        %365 = vmatpush1.msra.mxu0 0.0
        %366 = vmatprep.subr.mxu0 0.0
        %367 = vmatpush1.msra.mxu0 0.0
        %368 = vmatprep.subr.mxu0 0.0
        %369 = vmatpush1.msra.mxu0 0.0
        %370 = vmatprep.subr.mxu0 0.0
        %371 = vmatpush1.msra.mxu0 0.0
        %372 = vmatprep.subr.mxu0 0.0
        %373 = vmatpush1.msra.mxu0 0.0
        %374 = vmatprep.subr.mxu0 0.0
        %375 = vmatpush1.msra.mxu0 0.0
        %376 = vmatprep.subr.mxu0 0.0
        %377 = vmatpush1.msra.mxu0 0.0
        %378 = vmatprep.subr.mxu0 0.0
        %379 = vmatpush1.msra.mxu0 0.0
        %380 = vmatprep.subr.mxu0 0.0
        %381 = vmatpush1.msra.mxu0 0.0
        %382 = vmatprep.subr.mxu0 0.0
        %383 = vmatpush1.msra.mxu0 0.0
        %384 = vmatprep.subr.mxu0 0.0
        %385 = vmatpush1.msra.mxu0 %v256
        %386 = vmatprep.subr.mxu0 0.0
        %387 = vmatpush2.msra.mxu0 0.0
        %388 = vmatprep.subr.mxu0 0.0
        %389 = vmatpush2.msra.mxu0 0.0
        %390 = vmatprep.subr.mxu0 0.0
        %391 = vmatpush2.msra.mxu0 0.0
        %392 = vmatprep.subr.mxu0 0.0
        %393 = vmatpush2.msra.mxu0 0.0
        %394 = vmatprep.subr.mxu0 0.0
        %395 = vmatpush2.msra.mxu0 0.0
        %396 = vmatprep.subr.mxu0 0.0
        %397 = vmatpush2.msra.mxu0 0.0
        %398 = vmatprep.subr.mxu0 0.0
        %399 = vmatpush2.msra.mxu0 0.0
        %400 = vmatprep.subr.mxu0 0.0
        %401 = vmatpush2.msra.mxu0 0.0
        %402 = vmatprep.subr.mxu0 0.0
        %403 = vmatpush2.msra.mxu0 0.0
        %404 = vmatprep.subr.mxu0 0.0
        %405 = vmatpush2.msra.mxu0 0.0
        %406 = vmatprep.subr.mxu0 0.0
        %407 = vmatpush2.msra.mxu0 0.0
        %408 = vmatprep.subr.mxu0 0.0
        %409 = vmatpush2.msra.mxu0 0.0
        %410 = vmatprep.subr.mxu0 0.0
        %411 = vmatpush2.msra.mxu0 0.0
        %412 = vmatprep.subr.mxu0 0.0
        %413 = vmatpush2.msra.mxu0 0.0
        %414 = vmatprep.subr.mxu0 0.0
        %415 = vmatpush2.msra.mxu0 0.0
        %416 = vmatprep.subr.mxu0 0.0
        %417 = vmatpush2.msra.mxu0 0.0
        %418 = vmatprep.mubr.f32.mxu0 0.0
        %419 = vmatmul.mubr.f32.gmra.mxu0 %v259
        %v420 = vpop.f32.mrf.mxu0
        %v421 = vadd.f32 0.0, %v420
        %v422 = vpop.f32.mrf.mxu0
        %423 = vmatprep.mubr.f32.mxu0 0.0
        %424 = vmatmul.mubr.f32.gmra.mxu0 %v262
        %v425 = vpop.f32.mrf.mxu0
        %v426 = vadd.f32 0.0, %v425
        %v427 = vpop.f32.mrf.mxu0
        %428 = vmatprep.mubr.f32.mxu0 0.0
        %429 = vmatmul.mubr.f32.gmra.mxu0 %v265
        %v430 = vpop.f32.mrf.mxu0
        %v431 = vadd.f32 0.0, %v430
        %v432 = vpop.f32.mrf.mxu0
        %433 = vmatprep.mubr.f32.mxu0 0.0
        %434 = vmatmul.mubr.f32.gmra.mxu0 %v268
        %v435 = vpop.f32.mrf.mxu0
        %v436 = vadd.f32 0.0, %v435
        %v437 = vpop.f32.mrf.mxu0
        %438 = vmatprep.mubr.f32.mxu0 0.0
        %439 = vmatmul.mubr.f32.gmra.mxu0 %v271
        %v440 = vpop.f32.mrf.mxu0
        %v441 = vadd.f32 0.0, %v440
        %v442 = vpop.f32.mrf.mxu0
        %443 = vmatprep.mubr.f32.mxu0 0.0
        %444 = vmatmul.mubr.f32.gmra.mxu0 %v274
        %v445 = vpop.f32.mrf.mxu0
        %v446 = vadd.f32 0.0, %v445
        %v447 = vpop.f32.mrf.mxu0
        %448 = vmatprep.mubr.f32.mxu0 0.0
        %449 = vmatmul.mubr.f32.gmra.mxu0 %v277
        %v450 = vpop.f32.mrf.mxu0
        %v451 = vadd.f32 0.0, %v450
        %v452 = vpop.f32.mrf.mxu0
        %453 = vmatprep.mubr.f32.mxu0 0.0
        %454 = vmatmul.mubr.f32.gmra.mxu0 %v280
        %v455 = vpop.f32.mrf.mxu0
        %v456 = vadd.f32 0.0, %v455
        %v457 = vpop.f32.mrf.mxu0
        %458 = vmatprep.mubr.f32.mxu0 0.0
        %459 = vmatmul.mubr.f32.gmra.mxu0 %v283
        %v460 = vpop.f32.mrf.mxu0
        %v461 = vadd.f32 0.0, %v460
        %v462 = vpop.f32.mrf.mxu0
        %463 = vmatprep.mubr.f32.mxu0 0.0
        %464 = vmatmul.mubr.f32.gmra.mxu0 %v286
        %v465 = vpop.f32.mrf.mxu0
        %v466 = vadd.f32 0.0, %v465
        %v467 = vpop.f32.mrf.mxu0
        %468 = vmatprep.mubr.f32.mxu0 0.0
        %469 = vmatmul.mubr.f32.gmra.mxu0 %v289
        %v470 = vpop.f32.mrf.mxu0
        %v471 = vadd.f32 0.0, %v470
        %v472 = vpop.f32.mrf.mxu0
        %473 = vmatprep.mubr.f32.mxu0 0.0
        %474 = vmatmul.mubr.f32.gmra.mxu0 %v292
        %v475 = vpop.f32.mrf.mxu0
        %v476 = vadd.f32 0.0, %v475
        %v477 = vpop.f32.mrf.mxu0
        %478 = vmatprep.mubr.f32.mxu0 0.0
        %479 = vmatmul.mubr.f32.gmra.mxu0 %v295
        %v480 = vpop.f32.mrf.mxu0
        %v481 = vadd.f32 0.0, %v480
        %v482 = vpop.f32.mrf.mxu0
        %483 = vmatprep.mubr.f32.mxu0 0.0
        %484 = vmatmul.mubr.f32.gmra.mxu0 %v298
        %v485 = vpop.f32.mrf.mxu0
        %v486 = vadd.f32 0.0, %v485
        %v487 = vpop.f32.mrf.mxu0
        %488 = vmatprep.mubr.f32.mxu0 0.0
        %489 = vmatmul.mubr.f32.gmra.mxu0 %v301
        %v490 = vpop.f32.mrf.mxu0
        %v491 = vadd.f32 0.0, %v490
        %v492 = vpop.f32.mrf.mxu0
        %493 = vmatprep.mubr.f32.mxu0 0.0
        %494 = vmatmul.mubr.f32.gmra.mxu0 %v304
        %v495 = vpop.f32.mrf.mxu0
        %v496 = vadd.f32 0.0, %v495
        %v497 = vpop.f32.mrf.mxu0
        %498 = vmatprep.mubr.f32.mxu0 0.0
        %499 = vmatmul.mubr.f32.gmra.mxu0 %v307
        %v500 = vpop.f32.mrf.mxu0
        %v501 = vadd.f32 0.0, %v500
        %v502 = vpop.f32.mrf.mxu0
        %503 = vmatprep.mubr.f32.mxu0 0.0
        %504 = vmatmul.mubr.f32.gmra.mxu0 %v310
        %v505 = vpop.f32.mrf.mxu0
        %v506 = vadd.f32 0.0, %v505
        %v507 = vpop.f32.mrf.mxu0
        %508 = vmatprep.mubr.f32.mxu0 0.0
        %509 = vmatmul.mubr.f32.gmra.mxu0 %v313
        %v510 = vpop.f32.mrf.mxu0
        %v511 = vadd.f32 0.0, %v510
        %v512 = vpop.f32.mrf.mxu0
        %513 = vmatprep.mubr.f32.mxu0 0.0
        %514 = vmatmul.mubr.f32.gmra.mxu0 %v316
        %v515 = vpop.f32.mrf.mxu0
        %v516 = vadd.f32 0.0, %v515
        %v517 = vpop.f32.mrf.mxu0
        %518 = vmatprep.mubr.f32.mxu0 0.0
        %519 = vmatmul.mubr.f32.gmra.mxu0 %v319
        %v520 = vpop.f32.mrf.mxu0
        %v521 = vadd.f32 0.0, %v520
        %v522 = vpop.f32.mrf.mxu0
        %523 = vmatprep.mubr.f32.mxu0 0.0
        %524 = vmatmul.mubr.f32.gmra.mxu0 %v322
        %v525 = vpop.f32.mrf.mxu0
        %v526 = vadd.f32 0.0, %v525
        %v527 = vpop.f32.mrf.mxu0
        %528 = vmatprep.mubr.f32.mxu0 0.0
        %529 = vmatmul.mubr.f32.gmra.mxu0 %v325
        %v530 = vpop.f32.mrf.mxu0
        %v531 = vadd.f32 0.0, %v530
        %v532 = vpop.f32.mrf.mxu0
        %533 = vmatprep.mubr.f32.mxu0 0.0
        %534 = vmatmul.mubr.f32.gmra.mxu0 %v328
        %v535 = vpop.f32.mrf.mxu0
        %v536 = vadd.f32 0.0, %v535
        %v537 = vpop.f32.mrf.mxu0
        %538 = vmatprep.mubr.f32.mxu0 0.0
        %539 = vmatmul.mubr.f32.gmra.mxu0 %v331
        %v540 = vpop.f32.mrf.mxu0
        %v541 = vadd.f32 0.0, %v540
        %v542 = vpop.f32.mrf.mxu0
        %543 = vmatprep.mubr.f32.mxu0 0.0
        %544 = vmatmul.mubr.f32.gmra.mxu0 %v334
        %v545 = vpop.f32.mrf.mxu0
        %v546 = vadd.f32 0.0, %v545
        %v547 = vpop.f32.mrf.mxu0
        %548 = vmatprep.mubr.f32.mxu0 0.0
        %549 = vmatmul.mubr.f32.gmra.mxu0 %v337
        %v550 = vpop.f32.mrf.mxu0
        %v551 = vadd.f32 0.0, %v550
        %v552 = vpop.f32.mrf.mxu0
        %553 = vmatprep.mubr.f32.mxu0 0.0
        %554 = vmatmul.mubr.f32.gmra.mxu0 %v340
        %v555 = vpop.f32.mrf.mxu0
        %v556 = vadd.f32 0.0, %v555
        %v557 = vpop.f32.mrf.mxu0
        %558 = vmatprep.mubr.f32.mxu0 0.0
        %559 = vmatmul.mubr.f32.gmra.mxu0 %v343
        %v560 = vpop.f32.mrf.mxu0
        %v561 = vadd.f32 0.0, %v560
        %v562 = vpop.f32.mrf.mxu0
        %563 = vmatprep.mubr.f32.mxu0 0.0
        %564 = vmatmul.mubr.f32.gmra.mxu0 %v346
        %v565 = vpop.f32.mrf.mxu0
        %v566 = vadd.f32 0.0, %v565
        %v567 = vpop.f32.mrf.mxu0
        %568 = vmatprep.mubr.f32.mxu0 0.0
        %569 = vmatmul.mubr.f32.gmra.mxu0 %v349
        %v570 = vpop.f32.mrf.mxu0
        %v571 = vadd.f32 0.0, %v570
        %v572 = vpop.f32.mrf.mxu0
        %573 = vmatprep.mubr.f32.mxu0 0.0
        %574 = vmatmul.mubr.f32.gmra.mxu0 %v352
        %v575 = vpop.f32.mrf.mxu0
        %v576 = vadd.f32 0.0, %v575
        %v577 = vpop.f32.mrf.mxu0
        %578 = vdwg.mxu0
        %v579 = vld [vmem:[%s2] sm:$0xff]
        %v580 = vld [vmem:[%s2 + $0x8] sm:$0xff]
        %v582 = vsel %vm257, %v579, 0
        %v585 = vsel %vm257, %v580, 0
        %587 = vmatprep.subr.mxu0 0.0
        %588 = vmatpush1.msra.mxu0 0.0
        %589 = vmatprep.subr.mxu0 0.0
        %590 = vmatpush1.msra.mxu0 0.0
        %591 = vmatprep.subr.mxu0 0.0
        %592 = vmatpush1.msra.mxu0 0.0
        %593 = vmatprep.subr.mxu0 0.0
        %594 = vmatpush1.msra.mxu0 0.0
        %595 = vmatprep.subr.mxu0 0.0
        %596 = vmatpush1.msra.mxu0 0.0
        %597 = vmatprep.subr.mxu0 0.0
        %598 = vmatpush1.msra.mxu0 0.0
        %599 = vmatprep.subr.mxu0 0.0
        %600 = vmatpush1.msra.mxu0 0.0
        %601 = vmatprep.subr.mxu0 0.0
        %602 = vmatpush1.msra.mxu0 0.0
        %603 = vmatprep.subr.mxu0 0.0
        %604 = vmatpush1.msra.mxu0 0.0
        %605 = vmatprep.subr.mxu0 0.0
        %606 = vmatpush1.msra.mxu0 0.0
        %607 = vmatprep.subr.mxu0 0.0
        %608 = vmatpush1.msra.mxu0 0.0
        %609 = vmatprep.subr.mxu0 0.0
        %610 = vmatpush1.msra.mxu0 0.0
        %611 = vmatprep.subr.mxu0 0.0
        %612 = vmatpush1.msra.mxu0 0.0
        %613 = vmatprep.subr.mxu0 0.0
        %614 = vmatpush1.msra.mxu0 0.0
        %615 = vmatprep.subr.mxu0 0.0
        %616 = vmatpush1.msra.mxu0 0.0
        %617 = vmatprep.subr.mxu0 0.0
        %618 = vmatpush1.msra.mxu0 %v421
        %619 = vmatprep.subr.mxu0 0.0
        %620 = vmatpush2.msra.mxu0 0.0
        %621 = vmatprep.subr.mxu0 0.0
        %622 = vmatpush2.msra.mxu0 0.0
        %623 = vmatprep.subr.mxu0 0.0
        %624 = vmatpush2.msra.mxu0 0.0
        %625 = vmatprep.subr.mxu0 0.0
        %626 = vmatpush2.msra.mxu0 0.0
        %627 = vmatprep.subr.mxu0 0.0
        %628 = vmatpush2.msra.mxu0 0.0
        %629 = vmatprep.subr.mxu0 0.0
        %630 = vmatpush2.msra.mxu0 0.0
        %631 = vmatprep.subr.mxu0 0.0
        %632 = vmatpush2.msra.mxu0 0.0
        %633 = vmatprep.subr.mxu0 0.0
        %634 = vmatpush2.msra.mxu0 0.0
        %635 = vmatprep.subr.mxu0 0.0
        %636 = vmatpush2.msra.mxu0 0.0
        %637 = vmatprep.subr.mxu0 0.0
        %638 = vmatpush2.msra.mxu0 0.0
        %639 = vmatprep.subr.mxu0 0.0
        %640 = vmatpush2.msra.mxu0 0.0
        %641 = vmatprep.subr.mxu0 0.0
        %642 = vmatpush2.msra.mxu0 0.0
        %643 = vmatprep.subr.mxu0 0.0
        %644 = vmatpush2.msra.mxu0 0.0
        %645 = vmatprep.subr.mxu0 0.0
        %646 = vmatpush2.msra.mxu0 0.0
        %647 = vmatprep.subr.mxu0 0.0
        %648 = vmatpush2.msra.mxu0 0.0
        %649 = vmatprep.subr.mxu0 0.0
        %650 = vmatpush2.msra.mxu0 0.0
        %651 = vmatprep.mubr.f32.mxu0 0.0
        %652 = vmatmul.mubr.f32.gmra.mxu0 %v582
        %v653 = vpop.f32.mrf.mxu0
        %v654 = vadd.f32 0.0, %v653
        %v655 = vpop.f32.mrf.mxu0
        %656 = vmatprep.mubr.f32.mxu0 0.0
        %657 = vmatmul.mubr.f32.gmra.mxu0 %v585
        %v658 = vpop.f32.mrf.mxu0
        %v659 = vadd.f32 0.0, %v658
        %v660 = vpop.f32.mrf.mxu0
        %661 = vdwg.mxu0
        %662 = vmatprep.subr.mxu0 0.0
        %663 = vmatpush1.msra.mxu0 0.0
        %664 = vmatprep.subr.mxu0 0.0
        %665 = vmatpush1.msra.mxu0 0.0
        %666 = vmatprep.subr.mxu0 0.0
        %667 = vmatpush1.msra.mxu0 0.0
        %668 = vmatprep.subr.mxu0 0.0
        %669 = vmatpush1.msra.mxu0 0.0
        %670 = vmatprep.subr.mxu0 0.0
        %671 = vmatpush1.msra.mxu0 0.0
        %672 = vmatprep.subr.mxu0 0.0
        %673 = vmatpush1.msra.mxu0 0.0
        %674 = vmatprep.subr.mxu0 0.0
        %675 = vmatpush1.msra.mxu0 0.0
        %676 = vmatprep.subr.mxu0 0.0
        %677 = vmatpush1.msra.mxu0 0.0
        %678 = vmatprep.subr.mxu0 0.0
        %679 = vmatpush1.msra.mxu0 0.0
        %680 = vmatprep.subr.mxu0 0.0
        %681 = vmatpush1.msra.mxu0 0.0
        %682 = vmatprep.subr.mxu0 0.0
        %683 = vmatpush1.msra.mxu0 0.0
        %684 = vmatprep.subr.mxu0 0.0
        %685 = vmatpush1.msra.mxu0 0.0
        %686 = vmatprep.subr.mxu0 0.0
        %687 = vmatpush1.msra.mxu0 0.0
        %688 = vmatprep.subr.mxu0 0.0
        %689 = vmatpush1.msra.mxu0 0.0
        %690 = vmatprep.subr.mxu0 0.0
        %691 = vmatpush1.msra.mxu0 0.0
        %692 = vmatprep.subr.mxu0 0.0
        %693 = vmatpush1.msra.mxu0 %v426
        %694 = vmatprep.subr.mxu0 0.0
        %695 = vmatpush2.msra.mxu0 0.0
        %696 = vmatprep.subr.mxu0 0.0
        %697 = vmatpush2.msra.mxu0 0.0
        %698 = vmatprep.subr.mxu0 0.0
        %699 = vmatpush2.msra.mxu0 0.0
        %700 = vmatprep.subr.mxu0 0.0
        %701 = vmatpush2.msra.mxu0 0.0
        %702 = vmatprep.subr.mxu0 0.0
        %703 = vmatpush2.msra.mxu0 0.0
        %704 = vmatprep.subr.mxu0 0.0
        %705 = vmatpush2.msra.mxu0 0.0
        %706 = vmatprep.subr.mxu0 0.0
        %707 = vmatpush2.msra.mxu0 0.0
        %708 = vmatprep.subr.mxu0 0.0
        %709 = vmatpush2.msra.mxu0 0.0
        %710 = vmatprep.subr.mxu0 0.0
        %711 = vmatpush2.msra.mxu0 0.0
        %712 = vmatprep.subr.mxu0 0.0
        %713 = vmatpush2.msra.mxu0 0.0
        %714 = vmatprep.subr.mxu0 0.0
        %715 = vmatpush2.msra.mxu0 0.0
        %716 = vmatprep.subr.mxu0 0.0
        %717 = vmatpush2.msra.mxu0 0.0
        %718 = vmatprep.subr.mxu0 0.0
        %719 = vmatpush2.msra.mxu0 0.0
        %720 = vmatprep.subr.mxu0 0.0
        %721 = vmatpush2.msra.mxu0 0.0
        %722 = vmatprep.subr.mxu0 0.0
        %723 = vmatpush2.msra.mxu0 0.0
        %724 = vmatprep.subr.mxu0 0.0
        %725 = vmatpush2.msra.mxu0 0.0
        %726 = vmatprep.mubr.f32.mxu0 0.0
        %727 = vmatmul.mubr.f32.gmra.mxu0 %v582
        %v728 = vpop.f32.mrf.mxu0
        %v729 = vadd.f32 0.0, %v728
        %v730 = vpop.f32.mrf.mxu0
        %731 = vmatprep.mubr.f32.mxu0 0.0
        %732 = vmatmul.mubr.f32.gmra.mxu0 %v585
        %v733 = vpop.f32.mrf.mxu0
        %v734 = vadd.f32 0.0, %v733
        %v735 = vpop.f32.mrf.mxu0
        %736 = vdwg.mxu0
        %737 = vmatprep.subr.mxu0 0.0
        %738 = vmatpush1.msra.mxu0 0.0
        %739 = vmatprep.subr.mxu0 0.0
        %740 = vmatpush1.msra.mxu0 0.0
        %741 = vmatprep.subr.mxu0 0.0
        %742 = vmatpush1.msra.mxu0 0.0
        %743 = vmatprep.subr.mxu0 0.0
        %744 = vmatpush1.msra.mxu0 0.0
        %745 = vmatprep.subr.mxu0 0.0
        %746 = vmatpush1.msra.mxu0 0.0
        %747 = vmatprep.subr.mxu0 0.0
        %748 = vmatpush1.msra.mxu0 0.0
        %749 = vmatprep.subr.mxu0 0.0
        %750 = vmatpush1.msra.mxu0 0.0
        %751 = vmatprep.subr.mxu0 0.0
        %752 = vmatpush1.msra.mxu0 0.0
        %753 = vmatprep.subr.mxu0 0.0
        %754 = vmatpush1.msra.mxu0 0.0
        %755 = vmatprep.subr.mxu0 0.0
        %756 = vmatpush1.msra.mxu0 0.0
        %757 = vmatprep.subr.mxu0 0.0
        %758 = vmatpush1.msra.mxu0 0.0
        %759 = vmatprep.subr.mxu0 0.0
        %760 = vmatpush1.msra.mxu0 0.0
        %761 = vmatprep.subr.mxu0 0.0
        %762 = vmatpush1.msra.mxu0 0.0
        %763 = vmatprep.subr.mxu0 0.0
        %764 = vmatpush1.msra.mxu0 0.0
        %765 = vmatprep.subr.mxu0 0.0
        %766 = vmatpush1.msra.mxu0 0.0
        %767 = vmatprep.subr.mxu0 0.0
        %768 = vmatpush1.msra.mxu0 %v431
        %769 = vmatprep.subr.mxu0 0.0
        %770 = vmatpush2.msra.mxu0 0.0
        %771 = vmatprep.subr.mxu0 0.0
        %772 = vmatpush2.msra.mxu0 0.0
        %773 = vmatprep.subr.mxu0 0.0
        %774 = vmatpush2.msra.mxu0 0.0
        %775 = vmatprep.subr.mxu0 0.0
        %776 = vmatpush2.msra.mxu0 0.0
        %777 = vmatprep.subr.mxu0 0.0
        %778 = vmatpush2.msra.mxu0 0.0
        %779 = vmatprep.subr.mxu0 0.0
        %780 = vmatpush2.msra.mxu0 0.0
        %781 = vmatprep.subr.mxu0 0.0
        %782 = vmatpush2.msra.mxu0 0.0
        %783 = vmatprep.subr.mxu0 0.0
        %784 = vmatpush2.msra.mxu0 0.0
        %785 = vmatprep.subr.mxu0 0.0
        %786 = vmatpush2.msra.mxu0 0.0
        %787 = vmatprep.subr.mxu0 0.0
        %788 = vmatpush2.msra.mxu0 0.0
        %789 = vmatprep.subr.mxu0 0.0
        %790 = vmatpush2.msra.mxu0 0.0
        %791 = vmatprep.subr.mxu0 0.0
        %792 = vmatpush2.msra.mxu0 0.0
        %793 = vmatprep.subr.mxu0 0.0
        %794 = vmatpush2.msra.mxu0 0.0
        %795 = vmatprep.subr.mxu0 0.0
        %796 = vmatpush2.msra.mxu0 0.0
        %797 = vmatprep.subr.mxu0 0.0
        %798 = vmatpush2.msra.mxu0 0.0
        %799 = vmatprep.subr.mxu0 0.0
        %800 = vmatpush2.msra.mxu0 0.0
        %801 = vmatprep.mubr.f32.mxu0 0.0
        %802 = vmatmul.mubr.f32.gmra.mxu0 %v582
        %v803 = vpop.f32.mrf.mxu0
        %v804 = vadd.f32 0.0, %v803
        %v805 = vpop.f32.mrf.mxu0
        %806 = vmatprep.mubr.f32.mxu0 0.0
        %807 = vmatmul.mubr.f32.gmra.mxu0 %v585
        %v808 = vpop.f32.mrf.mxu0
        %v809 = vadd.f32 0.0, %v808
        %v810 = vpop.f32.mrf.mxu0
        %811 = vdwg.mxu0
        %812 = vmatprep.subr.mxu0 0.0
        %813 = vmatpush1.msra.mxu0 0.0
        %814 = vmatprep.subr.mxu0 0.0
        %815 = vmatpush1.msra.mxu0 0.0
        %816 = vmatprep.subr.mxu0 0.0
        %817 = vmatpush1.msra.mxu0 0.0
        %818 = vmatprep.subr.mxu0 0.0
        %819 = vmatpush1.msra.mxu0 0.0
        %820 = vmatprep.subr.mxu0 0.0
        %821 = vmatpush1.msra.mxu0 0.0
        %822 = vmatprep.subr.mxu0 0.0
        %823 = vmatpush1.msra.mxu0 0.0
        %824 = vmatprep.subr.mxu0 0.0
        %825 = vmatpush1.msra.mxu0 0.0
        %826 = vmatprep.subr.mxu0 0.0
        %827 = vmatpush1.msra.mxu0 0.0
        %828 = vmatprep.subr.mxu0 0.0
        %829 = vmatpush1.msra.mxu0 0.0
        %830 = vmatprep.subr.mxu0 0.0
        %831 = vmatpush1.msra.mxu0 0.0
        %832 = vmatprep.subr.mxu0 0.0
        %833 = vmatpush1.msra.mxu0 0.0
        %834 = vmatprep.subr.mxu0 0.0
        %835 = vmatpush1.msra.mxu0 0.0
        %836 = vmatprep.subr.mxu0 0.0
        %837 = vmatpush1.msra.mxu0 0.0
        %838 = vmatprep.subr.mxu0 0.0
        %839 = vmatpush1.msra.mxu0 0.0
        %840 = vmatprep.subr.mxu0 0.0
        %841 = vmatpush1.msra.mxu0 0.0
        %842 = vmatprep.subr.mxu0 0.0
        %843 = vmatpush1.msra.mxu0 %v436
        %844 = vmatprep.subr.mxu0 0.0
        %845 = vmatpush2.msra.mxu0 0.0
        %846 = vmatprep.subr.mxu0 0.0
        %847 = vmatpush2.msra.mxu0 0.0
        %848 = vmatprep.subr.mxu0 0.0
        %849 = vmatpush2.msra.mxu0 0.0
        %850 = vmatprep.subr.mxu0 0.0
        %851 = vmatpush2.msra.mxu0 0.0
        %852 = vmatprep.subr.mxu0 0.0
        %853 = vmatpush2.msra.mxu0 0.0
        %854 = vmatprep.subr.mxu0 0.0
        %855 = vmatpush2.msra.mxu0 0.0
        %856 = vmatprep.subr.mxu0 0.0
        %857 = vmatpush2.msra.mxu0 0.0
        %858 = vmatprep.subr.mxu0 0.0
        %859 = vmatpush2.msra.mxu0 0.0
        %860 = vmatprep.subr.mxu0 0.0
        %861 = vmatpush2.msra.mxu0 0.0
        %862 = vmatprep.subr.mxu0 0.0
        %863 = vmatpush2.msra.mxu0 0.0
        %864 = vmatprep.subr.mxu0 0.0
        %865 = vmatpush2.msra.mxu0 0.0
        %866 = vmatprep.subr.mxu0 0.0
        %867 = vmatpush2.msra.mxu0 0.0
        %868 = vmatprep.subr.mxu0 0.0
        %869 = vmatpush2.msra.mxu0 0.0
        %870 = vmatprep.subr.mxu0 0.0
        %871 = vmatpush2.msra.mxu0 0.0
        %872 = vmatprep.subr.mxu0 0.0
        %873 = vmatpush2.msra.mxu0 0.0
        %874 = vmatprep.subr.mxu0 0.0
        %875 = vmatpush2.msra.mxu0 0.0
        %876 = vmatprep.mubr.f32.mxu0 0.0
        %877 = vmatmul.mubr.f32.gmra.mxu0 %v582
        %v878 = vpop.f32.mrf.mxu0
        %v879 = vadd.f32 0.0, %v878
        %v880 = vpop.f32.mrf.mxu0
        %881 = vmatprep.mubr.f32.mxu0 0.0
        %882 = vmatmul.mubr.f32.gmra.mxu0 %v585
        %v883 = vpop.f32.mrf.mxu0
        %v884 = vadd.f32 0.0, %v883
        %v885 = vpop.f32.mrf.mxu0
        %886 = vdwg.mxu0
        %887 = vmatprep.subr.mxu0 0.0
        %888 = vmatpush1.msra.mxu0 0.0
        %889 = vmatprep.subr.mxu0 0.0
        %890 = vmatpush1.msra.mxu0 0.0
        %891 = vmatprep.subr.mxu0 0.0
        %892 = vmatpush1.msra.mxu0 0.0
        %893 = vmatprep.subr.mxu0 0.0
        %894 = vmatpush1.msra.mxu0 0.0
        %895 = vmatprep.subr.mxu0 0.0
        %896 = vmatpush1.msra.mxu0 0.0
        %897 = vmatprep.subr.mxu0 0.0
        %898 = vmatpush1.msra.mxu0 0.0
        %899 = vmatprep.subr.mxu0 0.0
        %900 = vmatpush1.msra.mxu0 0.0
        %901 = vmatprep.subr.mxu0 0.0
        %902 = vmatpush1.msra.mxu0 0.0
        %903 = vmatprep.subr.mxu0 0.0
        %904 = vmatpush1.msra.mxu0 0.0
        %905 = vmatprep.subr.mxu0 0.0
        %906 = vmatpush1.msra.mxu0 0.0
        %907 = vmatprep.subr.mxu0 0.0
        %908 = vmatpush1.msra.mxu0 0.0
        %909 = vmatprep.subr.mxu0 0.0
        %910 = vmatpush1.msra.mxu0 0.0
        %911 = vmatprep.subr.mxu0 0.0
        %912 = vmatpush1.msra.mxu0 0.0
        %913 = vmatprep.subr.mxu0 0.0
        %914 = vmatpush1.msra.mxu0 0.0
        %915 = vmatprep.subr.mxu0 0.0
        %916 = vmatpush1.msra.mxu0 0.0
        %917 = vmatprep.subr.mxu0 0.0
        %918 = vmatpush1.msra.mxu0 %v441
        %919 = vmatprep.subr.mxu0 0.0
        %920 = vmatpush2.msra.mxu0 0.0
        %921 = vmatprep.subr.mxu0 0.0
        %922 = vmatpush2.msra.mxu0 0.0
        %923 = vmatprep.subr.mxu0 0.0
        %924 = vmatpush2.msra.mxu0 0.0
        %925 = vmatprep.subr.mxu0 0.0
        %926 = vmatpush2.msra.mxu0 0.0
        %927 = vmatprep.subr.mxu0 0.0
        %928 = vmatpush2.msra.mxu0 0.0
        %929 = vmatprep.subr.mxu0 0.0
        %930 = vmatpush2.msra.mxu0 0.0
        %931 = vmatprep.subr.mxu0 0.0
        %932 = vmatpush2.msra.mxu0 0.0
        %933 = vmatprep.subr.mxu0 0.0
        %934 = vmatpush2.msra.mxu0 0.0
        %935 = vmatprep.subr.mxu0 0.0
        %936 = vmatpush2.msra.mxu0 0.0
        %937 = vmatprep.subr.mxu0 0.0
        %938 = vmatpush2.msra.mxu0 0.0
        %939 = vmatprep.subr.mxu0 0.0
        %940 = vmatpush2.msra.mxu0 0.0
        %941 = vmatprep.subr.mxu0 0.0
        %942 = vmatpush2.msra.mxu0 0.0
        %943 = vmatprep.subr.mxu0 0.0
        %944 = vmatpush2.msra.mxu0 0.0
        %945 = vmatprep.subr.mxu0 0.0
        %946 = vmatpush2.msra.mxu0 0.0
        %947 = vmatprep.subr.mxu0 0.0
        %948 = vmatpush2.msra.mxu0 0.0
        %949 = vmatprep.subr.mxu0 0.0
        %950 = vmatpush2.msra.mxu0 0.0
        %951 = vmatprep.mubr.f32.mxu0 0.0
        %952 = vmatmul.mubr.f32.gmra.mxu0 %v582
        %v953 = vpop.f32.mrf.mxu0
        %v954 = vadd.f32 0.0, %v953
        %v955 = vpop.f32.mrf.mxu0
        %956 = vmatprep.mubr.f32.mxu0 0.0
        %957 = vmatmul.mubr.f32.gmra.mxu0 %v585
        %v958 = vpop.f32.mrf.mxu0
        %v959 = vadd.f32 0.0, %v958
        %v960 = vpop.f32.mrf.mxu0
        %961 = vdwg.mxu0
        %962 = vmatprep.subr.mxu0 0.0
        %963 = vmatpush1.msra.mxu0 0.0
        %964 = vmatprep.subr.mxu0 0.0
        %965 = vmatpush1.msra.mxu0 0.0
        %966 = vmatprep.subr.mxu0 0.0
        %967 = vmatpush1.msra.mxu0 0.0
        %968 = vmatprep.subr.mxu0 0.0
        %969 = vmatpush1.msra.mxu0 0.0
        %970 = vmatprep.subr.mxu0 0.0
        %971 = vmatpush1.msra.mxu0 0.0
        %972 = vmatprep.subr.mxu0 0.0
        %973 = vmatpush1.msra.mxu0 0.0
        %974 = vmatprep.subr.mxu0 0.0
        %975 = vmatpush1.msra.mxu0 0.0
        %976 = vmatprep.subr.mxu0 0.0
        %977 = vmatpush1.msra.mxu0 0.0
        %978 = vmatprep.subr.mxu0 0.0
        %979 = vmatpush1.msra.mxu0 0.0
        %980 = vmatprep.subr.mxu0 0.0
        %981 = vmatpush1.msra.mxu0 0.0
        %982 = vmatprep.subr.mxu0 0.0
        %983 = vmatpush1.msra.mxu0 0.0
        %984 = vmatprep.subr.mxu0 0.0
        %985 = vmatpush1.msra.mxu0 0.0
        %986 = vmatprep.subr.mxu0 0.0
        %987 = vmatpush1.msra.mxu0 0.0
        %988 = vmatprep.subr.mxu0 0.0
        %989 = vmatpush1.msra.mxu0 0.0
        %990 = vmatprep.subr.mxu0 0.0
        %991 = vmatpush1.msra.mxu0 0.0
        %992 = vmatprep.subr.mxu0 0.0
        %993 = vmatpush1.msra.mxu0 %v446
        %994 = vmatprep.subr.mxu0 0.0
        %995 = vmatpush2.msra.mxu0 0.0
        %996 = vmatprep.subr.mxu0 0.0
        %997 = vmatpush2.msra.mxu0 0.0
        %998 = vmatprep.subr.mxu0 0.0
        %999 = vmatpush2.msra.mxu0 0.0
        %1000 = vmatprep.subr.mxu0 0.0
        %1001 = vmatpush2.msra.mxu0 0.0
        %1002 = vmatprep.subr.mxu0 0.0
        %1003 = vmatpush2.msra.mxu0 0.0
        %1004 = vmatprep.subr.mxu0 0.0
        %1005 = vmatpush2.msra.mxu0 0.0
        %1006 = vmatprep.subr.mxu0 0.0
        %1007 = vmatpush2.msra.mxu0 0.0
        %1008 = vmatprep.subr.mxu0 0.0
        %1009 = vmatpush2.msra.mxu0 0.0
        %1010 = vmatprep.subr.mxu0 0.0
        %1011 = vmatpush2.msra.mxu0 0.0
        %1012 = vmatprep.subr.mxu0 0.0
        %1013 = vmatpush2.msra.mxu0 0.0
        %1014 = vmatprep.subr.mxu0 0.0
        %1015 = vmatpush2.msra.mxu0 0.0
        %1016 = vmatprep.subr.mxu0 0.0
        %1017 = vmatpush2.msra.mxu0 0.0
        %1018 = vmatprep.subr.mxu0 0.0
        %1019 = vmatpush2.msra.mxu0 0.0
        %1020 = vmatprep.subr.mxu0 0.0
        %1021 = vmatpush2.msra.mxu0 0.0
        %1022 = vmatprep.subr.mxu0 0.0
        %1023 = vmatpush2.msra.mxu0 0.0
        %1024 = vmatprep.subr.mxu0 0.0
        %1025 = vmatpush2.msra.mxu0 0.0
        %1026 = vmatprep.mubr.f32.mxu0 0.0
        %1027 = vmatmul.mubr.f32.gmra.mxu0 %v582
        %v1028 = vpop.f32.mrf.mxu0
        %v1029 = vadd.f32 0.0, %v1028
        %v1030 = vpop.f32.mrf.mxu0
        %1031 = vmatprep.mubr.f32.mxu0 0.0
        %1032 = vmatmul.mubr.f32.gmra.mxu0 %v585
        %v1033 = vpop.f32.mrf.mxu0
        %v1034 = vadd.f32 0.0, %v1033
        %v1035 = vpop.f32.mrf.mxu0
        %1036 = vdwg.mxu0
        %1037 = vmatprep.subr.mxu0 0.0
        %1038 = vmatpush1.msra.mxu0 0.0
        %1039 = vmatprep.subr.mxu0 0.0
        %1040 = vmatpush1.msra.mxu0 0.0
        %1041 = vmatprep.subr.mxu0 0.0
        %1042 = vmatpush1.msra.mxu0 0.0
        %1043 = vmatprep.subr.mxu0 0.0
        %1044 = vmatpush1.msra.mxu0 0.0
        %1045 = vmatprep.subr.mxu0 0.0
        %1046 = vmatpush1.msra.mxu0 0.0
        %1047 = vmatprep.subr.mxu0 0.0
        %1048 = vmatpush1.msra.mxu0 0.0
        %1049 = vmatprep.subr.mxu0 0.0
        %1050 = vmatpush1.msra.mxu0 0.0
        %1051 = vmatprep.subr.mxu0 0.0
        %1052 = vmatpush1.msra.mxu0 0.0
        %1053 = vmatprep.subr.mxu0 0.0
        %1054 = vmatpush1.msra.mxu0 0.0
        %1055 = vmatprep.subr.mxu0 0.0
        %1056 = vmatpush1.msra.mxu0 0.0
        %1057 = vmatprep.subr.mxu0 0.0
        %1058 = vmatpush1.msra.mxu0 0.0
        %1059 = vmatprep.subr.mxu0 0.0
        %1060 = vmatpush1.msra.mxu0 0.0
        %1061 = vmatprep.subr.mxu0 0.0
        %1062 = vmatpush1.msra.mxu0 0.0
        %1063 = vmatprep.subr.mxu0 0.0
        %1064 = vmatpush1.msra.mxu0 0.0
        %1065 = vmatprep.subr.mxu0 0.0
        %1066 = vmatpush1.msra.mxu0 0.0
        %1067 = vmatprep.subr.mxu0 0.0
        %1068 = vmatpush1.msra.mxu0 %v451
        %1069 = vmatprep.subr.mxu0 0.0
        %1070 = vmatpush2.msra.mxu0 0.0
        %1071 = vmatprep.subr.mxu0 0.0
        %1072 = vmatpush2.msra.mxu0 0.0
        %1073 = vmatprep.subr.mxu0 0.0
        %1074 = vmatpush2.msra.mxu0 0.0
        %1075 = vmatprep.subr.mxu0 0.0
        %1076 = vmatpush2.msra.mxu0 0.0
        %1077 = vmatprep.subr.mxu0 0.0
        %1078 = vmatpush2.msra.mxu0 0.0
        %1079 = vmatprep.subr.mxu0 0.0
        %1080 = vmatpush2.msra.mxu0 0.0
        %1081 = vmatprep.subr.mxu0 0.0
        %1082 = vmatpush2.msra.mxu0 0.0
        %1083 = vmatprep.subr.mxu0 0.0
        %1084 = vmatpush2.msra.mxu0 0.0
        %1085 = vmatprep.subr.mxu0 0.0
        %1086 = vmatpush2.msra.mxu0 0.0
        %1087 = vmatprep.subr.mxu0 0.0
        %1088 = vmatpush2.msra.mxu0 0.0
        %1089 = vmatprep.subr.mxu0 0.0
        %1090 = vmatpush2.msra.mxu0 0.0
        %1091 = vmatprep.subr.mxu0 0.0
        %1092 = vmatpush2.msra.mxu0 0.0
        %1093 = vmatprep.subr.mxu0 0.0
        %1094 = vmatpush2.msra.mxu0 0.0
        %1095 = vmatprep.subr.mxu0 0.0
        %1096 = vmatpush2.msra.mxu0 0.0
        %1097 = vmatprep.subr.mxu0 0.0
        %1098 = vmatpush2.msra.mxu0 0.0
        %1099 = vmatprep.subr.mxu0 0.0
        %1100 = vmatpush2.msra.mxu0 0.0
        %1101 = vmatprep.mubr.f32.mxu0 0.0
        %1102 = vmatmul.mubr.f32.gmra.mxu0 %v582
        %v1103 = vpop.f32.mrf.mxu0
        %v1104 = vadd.f32 0.0, %v1103
        %v1105 = vpop.f32.mrf.mxu0
        %1106 = vmatprep.mubr.f32.mxu0 0.0
        %1107 = vmatmul.mubr.f32.gmra.mxu0 %v585
        %v1108 = vpop.f32.mrf.mxu0
        %v1109 = vadd.f32 0.0, %v1108
        %v1110 = vpop.f32.mrf.mxu0
        %1111 = vdwg.mxu0
        %1112 = vmatprep.subr.mxu0 0.0
        %1113 = vmatpush1.msra.mxu0 0.0
        %1114 = vmatprep.subr.mxu0 0.0
        %1115 = vmatpush1.msra.mxu0 0.0
        %1116 = vmatprep.subr.mxu0 0.0
        %1117 = vmatpush1.msra.mxu0 0.0
        %1118 = vmatprep.subr.mxu0 0.0
        %1119 = vmatpush1.msra.mxu0 0.0
        %1120 = vmatprep.subr.mxu0 0.0
        %1121 = vmatpush1.msra.mxu0 0.0
        %1122 = vmatprep.subr.mxu0 0.0
        %1123 = vmatpush1.msra.mxu0 0.0
        %1124 = vmatprep.subr.mxu0 0.0
        %1125 = vmatpush1.msra.mxu0 0.0
        %1126 = vmatprep.subr.mxu0 0.0
        %1127 = vmatpush1.msra.mxu0 0.0
        %1128 = vmatprep.subr.mxu0 0.0
        %1129 = vmatpush1.msra.mxu0 0.0
        %1130 = vmatprep.subr.mxu0 0.0
        %1131 = vmatpush1.msra.mxu0 0.0
        %1132 = vmatprep.subr.mxu0 0.0
        %1133 = vmatpush1.msra.mxu0 0.0
        %1134 = vmatprep.subr.mxu0 0.0
        %1135 = vmatpush1.msra.mxu0 0.0
        %1136 = vmatprep.subr.mxu0 0.0
        %1137 = vmatpush1.msra.mxu0 0.0
        %1138 = vmatprep.subr.mxu0 0.0
        %1139 = vmatpush1.msra.mxu0 0.0
        %1140 = vmatprep.subr.mxu0 0.0
        %1141 = vmatpush1.msra.mxu0 0.0
        %1142 = vmatprep.subr.mxu0 0.0
        %1143 = vmatpush1.msra.mxu0 %v456
        %1144 = vmatprep.subr.mxu0 0.0
        %1145 = vmatpush2.msra.mxu0 0.0
        %1146 = vmatprep.subr.mxu0 0.0
        %1147 = vmatpush2.msra.mxu0 0.0
        %1148 = vmatprep.subr.mxu0 0.0
        %1149 = vmatpush2.msra.mxu0 0.0
        %1150 = vmatprep.subr.mxu0 0.0
        %1151 = vmatpush2.msra.mxu0 0.0
        %1152 = vmatprep.subr.mxu0 0.0
        %1153 = vmatpush2.msra.mxu0 0.0
        %1154 = vmatprep.subr.mxu0 0.0
        %1155 = vmatpush2.msra.mxu0 0.0
        %1156 = vmatprep.subr.mxu0 0.0
        %1157 = vmatpush2.msra.mxu0 0.0
        %1158 = vmatprep.subr.mxu0 0.0
        %1159 = vmatpush2.msra.mxu0 0.0
        %1160 = vmatprep.subr.mxu0 0.0
        %1161 = vmatpush2.msra.mxu0 0.0
        %1162 = vmatprep.subr.mxu0 0.0
        %1163 = vmatpush2.msra.mxu0 0.0
        %1164 = vmatprep.subr.mxu0 0.0
        %1165 = vmatpush2.msra.mxu0 0.0
        %1166 = vmatprep.subr.mxu0 0.0
        %1167 = vmatpush2.msra.mxu0 0.0
        %1168 = vmatprep.subr.mxu0 0.0
        %1169 = vmatpush2.msra.mxu0 0.0
        %1170 = vmatprep.subr.mxu0 0.0
        %1171 = vmatpush2.msra.mxu0 0.0
        %1172 = vmatprep.subr.mxu0 0.0
        %1173 = vmatpush2.msra.mxu0 0.0
        %1174 = vmatprep.subr.mxu0 0.0
        %1175 = vmatpush2.msra.mxu0 0.0
        %1176 = vmatprep.mubr.f32.mxu0 0.0
        %1177 = vmatmul.mubr.f32.gmra.mxu0 %v582
        %v1178 = vpop.f32.mrf.mxu0
        %v1179 = vadd.f32 0.0, %v1178
        %v1180 = vpop.f32.mrf.mxu0
        %1181 = vmatprep.mubr.f32.mxu0 0.0
        %1182 = vmatmul.mubr.f32.gmra.mxu0 %v585
        %v1183 = vpop.f32.mrf.mxu0
        %v1184 = vadd.f32 0.0, %v1183
        %v1185 = vpop.f32.mrf.mxu0
        %1186 = vdwg.mxu0
        %1187 = vmatprep.subr.mxu0 0.0
        %1188 = vmatpush1.msra.mxu0 0.0
        %1189 = vmatprep.subr.mxu0 0.0
        %1190 = vmatpush1.msra.mxu0 0.0
        %1191 = vmatprep.subr.mxu0 0.0
        %1192 = vmatpush1.msra.mxu0 0.0
        %1193 = vmatprep.subr.mxu0 0.0
        %1194 = vmatpush1.msra.mxu0 0.0
        %1195 = vmatprep.subr.mxu0 0.0
        %1196 = vmatpush1.msra.mxu0 0.0
        %1197 = vmatprep.subr.mxu0 0.0
        %1198 = vmatpush1.msra.mxu0 0.0
        %1199 = vmatprep.subr.mxu0 0.0
        %1200 = vmatpush1.msra.mxu0 0.0
        %1201 = vmatprep.subr.mxu0 0.0
        %1202 = vmatpush1.msra.mxu0 0.0
        %1203 = vmatprep.subr.mxu0 0.0
        %1204 = vmatpush1.msra.mxu0 0.0
        %1205 = vmatprep.subr.mxu0 0.0
        %1206 = vmatpush1.msra.mxu0 0.0
        %1207 = vmatprep.subr.mxu0 0.0
        %1208 = vmatpush1.msra.mxu0 0.0
        %1209 = vmatprep.subr.mxu0 0.0
        %1210 = vmatpush1.msra.mxu0 0.0
        %1211 = vmatprep.subr.mxu0 0.0
        %1212 = vmatpush1.msra.mxu0 0.0
        %1213 = vmatprep.subr.mxu0 0.0
        %1214 = vmatpush1.msra.mxu0 0.0
        %1215 = vmatprep.subr.mxu0 0.0
        %1216 = vmatpush1.msra.mxu0 0.0
        %1217 = vmatprep.subr.mxu0 0.0
        %1218 = vmatpush1.msra.mxu0 %v461
        %1219 = vmatprep.subr.mxu0 0.0
        %1220 = vmatpush2.msra.mxu0 0.0
        %1221 = vmatprep.subr.mxu0 0.0
        %1222 = vmatpush2.msra.mxu0 0.0
        %1223 = vmatprep.subr.mxu0 0.0
        %1224 = vmatpush2.msra.mxu0 0.0
        %1225 = vmatprep.subr.mxu0 0.0
        %1226 = vmatpush2.msra.mxu0 0.0
        %1227 = vmatprep.subr.mxu0 0.0
        %1228 = vmatpush2.msra.mxu0 0.0
        %1229 = vmatprep.subr.mxu0 0.0
        %1230 = vmatpush2.msra.mxu0 0.0
        %1231 = vmatprep.subr.mxu0 0.0
        %1232 = vmatpush2.msra.mxu0 0.0
        %1233 = vmatprep.subr.mxu0 0.0
        %1234 = vmatpush2.msra.mxu0 0.0
        %1235 = vmatprep.subr.mxu0 0.0
        %1236 = vmatpush2.msra.mxu0 0.0
        %1237 = vmatprep.subr.mxu0 0.0
        %1238 = vmatpush2.msra.mxu0 0.0
        %1239 = vmatprep.subr.mxu0 0.0
        %1240 = vmatpush2.msra.mxu0 0.0
        %1241 = vmatprep.subr.mxu0 0.0
        %1242 = vmatpush2.msra.mxu0 0.0
        %1243 = vmatprep.subr.mxu0 0.0
        %1244 = vmatpush2.msra.mxu0 0.0
        %1245 = vmatprep.subr.mxu0 0.0
        %1246 = vmatpush2.msra.mxu0 0.0
        %1247 = vmatprep.subr.mxu0 0.0
        %1248 = vmatpush2.msra.mxu0 0.0
        %1249 = vmatprep.subr.mxu0 0.0
        %1250 = vmatpush2.msra.mxu0 0.0
        %1251 = vmatprep.mubr.f32.mxu0 0.0
        %1252 = vmatmul.mubr.f32.gmra.mxu0 %v582
        %v1253 = vpop.f32.mrf.mxu0
        %v1254 = vadd.f32 0.0, %v1253
        %v1255 = vpop.f32.mrf.mxu0
        %1256 = vmatprep.mubr.f32.mxu0 0.0
        %1257 = vmatmul.mubr.f32.gmra.mxu0 %v585
        %v1258 = vpop.f32.mrf.mxu0
        %v1259 = vadd.f32 0.0, %v1258
        %v1260 = vpop.f32.mrf.mxu0
        %1261 = vdwg.mxu0
        %1262 = vmatprep.subr.mxu0 0.0
        %1263 = vmatpush1.msra.mxu0 0.0
        %1264 = vmatprep.subr.mxu0 0.0
        %1265 = vmatpush1.msra.mxu0 0.0
        %1266 = vmatprep.subr.mxu0 0.0
        %1267 = vmatpush1.msra.mxu0 0.0
        %1268 = vmatprep.subr.mxu0 0.0
        %1269 = vmatpush1.msra.mxu0 0.0
        %1270 = vmatprep.subr.mxu0 0.0
        %1271 = vmatpush1.msra.mxu0 0.0
        %1272 = vmatprep.subr.mxu0 0.0
        %1273 = vmatpush1.msra.mxu0 0.0
        %1274 = vmatprep.subr.mxu0 0.0
        %1275 = vmatpush1.msra.mxu0 0.0
        %1276 = vmatprep.subr.mxu0 0.0
        %1277 = vmatpush1.msra.mxu0 0.0
        %1278 = vmatprep.subr.mxu0 0.0
        %1279 = vmatpush1.msra.mxu0 0.0
        %1280 = vmatprep.subr.mxu0 0.0
        %1281 = vmatpush1.msra.mxu0 0.0
        %1282 = vmatprep.subr.mxu0 0.0
        %1283 = vmatpush1.msra.mxu0 0.0
        %1284 = vmatprep.subr.mxu0 0.0
        %1285 = vmatpush1.msra.mxu0 0.0
        %1286 = vmatprep.subr.mxu0 0.0
        %1287 = vmatpush1.msra.mxu0 0.0
        %1288 = vmatprep.subr.mxu0 0.0
        %1289 = vmatpush1.msra.mxu0 0.0
        %1290 = vmatprep.subr.mxu0 0.0
        %1291 = vmatpush1.msra.mxu0 0.0
        %1292 = vmatprep.subr.mxu0 0.0
        %1293 = vmatpush1.msra.mxu0 %v466
        %1294 = vmatprep.subr.mxu0 0.0
        %1295 = vmatpush2.msra.mxu0 0.0
        %1296 = vmatprep.subr.mxu0 0.0
        %1297 = vmatpush2.msra.mxu0 0.0
        %1298 = vmatprep.subr.mxu0 0.0
        %1299 = vmatpush2.msra.mxu0 0.0
        %1300 = vmatprep.subr.mxu0 0.0
        %1301 = vmatpush2.msra.mxu0 0.0
        %1302 = vmatprep.subr.mxu0 0.0
        %1303 = vmatpush2.msra.mxu0 0.0
        %1304 = vmatprep.subr.mxu0 0.0
        %1305 = vmatpush2.msra.mxu0 0.0
        %1306 = vmatprep.subr.mxu0 0.0
        %1307 = vmatpush2.msra.mxu0 0.0
        %1308 = vmatprep.subr.mxu0 0.0
        %1309 = vmatpush2.msra.mxu0 0.0
        %1310 = vmatprep.subr.mxu0 0.0
        %1311 = vmatpush2.msra.mxu0 0.0
        %1312 = vmatprep.subr.mxu0 0.0
        %1313 = vmatpush2.msra.mxu0 0.0
        %1314 = vmatprep.subr.mxu0 0.0
        %1315 = vmatpush2.msra.mxu0 0.0
        %1316 = vmatprep.subr.mxu0 0.0
        %1317 = vmatpush2.msra.mxu0 0.0
        %1318 = vmatprep.subr.mxu0 0.0
        %1319 = vmatpush2.msra.mxu0 0.0
        %1320 = vmatprep.subr.mxu0 0.0
        %1321 = vmatpush2.msra.mxu0 0.0
        %1322 = vmatprep.subr.mxu0 0.0
        %1323 = vmatpush2.msra.mxu0 0.0
        %1324 = vmatprep.subr.mxu0 0.0
        %1325 = vmatpush2.msra.mxu0 0.0
        %1326 = vmatprep.mubr.f32.mxu0 0.0
        %1327 = vmatmul.mubr.f32.gmra.mxu0 %v582
        %v1328 = vpop.f32.mrf.mxu0
        %v1329 = vadd.f32 0.0, %v1328
        %v1330 = vpop.f32.mrf.mxu0
        %1331 = vmatprep.mubr.f32.mxu0 0.0
        %1332 = vmatmul.mubr.f32.gmra.mxu0 %v585
        %v1333 = vpop.f32.mrf.mxu0
        %v1334 = vadd.f32 0.0, %v1333
        %v1335 = vpop.f32.mrf.mxu0
        %1336 = vdwg.mxu0
        %1337 = vmatprep.subr.mxu0 0.0
        %1338 = vmatpush1.msra.mxu0 0.0
        %1339 = vmatprep.subr.mxu0 0.0
        %1340 = vmatpush1.msra.mxu0 0.0
        %1341 = vmatprep.subr.mxu0 0.0
        %1342 = vmatpush1.msra.mxu0 0.0
        %1343 = vmatprep.subr.mxu0 0.0
        %1344 = vmatpush1.msra.mxu0 0.0
        %1345 = vmatprep.subr.mxu0 0.0
        %1346 = vmatpush1.msra.mxu0 0.0
        %1347 = vmatprep.subr.mxu0 0.0
        %1348 = vmatpush1.msra.mxu0 0.0
        %1349 = vmatprep.subr.mxu0 0.0
        %1350 = vmatpush1.msra.mxu0 0.0
        %1351 = vmatprep.subr.mxu0 0.0
        %1352 = vmatpush1.msra.mxu0 0.0
        %1353 = vmatprep.subr.mxu0 0.0
        %1354 = vmatpush1.msra.mxu0 0.0
        %1355 = vmatprep.subr.mxu0 0.0
        %1356 = vmatpush1.msra.mxu0 0.0
        %1357 = vmatprep.subr.mxu0 0.0
        %1358 = vmatpush1.msra.mxu0 0.0
        %1359 = vmatprep.subr.mxu0 0.0
        %1360 = vmatpush1.msra.mxu0 0.0
        %1361 = vmatprep.subr.mxu0 0.0
        %1362 = vmatpush1.msra.mxu0 0.0
        %1363 = vmatprep.subr.mxu0 0.0
        %1364 = vmatpush1.msra.mxu0 0.0
        %1365 = vmatprep.subr.mxu0 0.0
        %1366 = vmatpush1.msra.mxu0 0.0
        %1367 = vmatprep.subr.mxu0 0.0
        %1368 = vmatpush1.msra.mxu0 %v471
        %1369 = vmatprep.subr.mxu0 0.0
        %1370 = vmatpush2.msra.mxu0 0.0
        %1371 = vmatprep.subr.mxu0 0.0
        %1372 = vmatpush2.msra.mxu0 0.0
        %1373 = vmatprep.subr.mxu0 0.0
        %1374 = vmatpush2.msra.mxu0 0.0
        %1375 = vmatprep.subr.mxu0 0.0
        %1376 = vmatpush2.msra.mxu0 0.0
        %1377 = vmatprep.subr.mxu0 0.0
        %1378 = vmatpush2.msra.mxu0 0.0
        %1379 = vmatprep.subr.mxu0 0.0
        %1380 = vmatpush2.msra.mxu0 0.0
        %1381 = vmatprep.subr.mxu0 0.0
        %1382 = vmatpush2.msra.mxu0 0.0
        %1383 = vmatprep.subr.mxu0 0.0
        %1384 = vmatpush2.msra.mxu0 0.0
        %1385 = vmatprep.subr.mxu0 0.0
        %1386 = vmatpush2.msra.mxu0 0.0
        %1387 = vmatprep.subr.mxu0 0.0
        %1388 = vmatpush2.msra.mxu0 0.0
        %1389 = vmatprep.subr.mxu0 0.0
        %1390 = vmatpush2.msra.mxu0 0.0
        %1391 = vmatprep.subr.mxu0 0.0
        %1392 = vmatpush2.msra.mxu0 0.0
        %1393 = vmatprep.subr.mxu0 0.0
        %1394 = vmatpush2.msra.mxu0 0.0
        %1395 = vmatprep.subr.mxu0 0.0
        %1396 = vmatpush2.msra.mxu0 0.0
        %1397 = vmatprep.subr.mxu0 0.0
        %1398 = vmatpush2.msra.mxu0 0.0
        %1399 = vmatprep.subr.mxu0 0.0
        %1400 = vmatpush2.msra.mxu0 0.0
        %1401 = vmatprep.mubr.f32.mxu0 0.0
        %1402 = vmatmul.mubr.f32.gmra.mxu0 %v582
        %v1403 = vpop.f32.mrf.mxu0
        %v1404 = vadd.f32 0.0, %v1403
        %v1405 = vpop.f32.mrf.mxu0
        %1406 = vmatprep.mubr.f32.mxu0 0.0
        %1407 = vmatmul.mubr.f32.gmra.mxu0 %v585
        %v1408 = vpop.f32.mrf.mxu0
        %v1409 = vadd.f32 0.0, %v1408
        %v1410 = vpop.f32.mrf.mxu0
        %1411 = vdwg.mxu0
        %1412 = vmatprep.subr.mxu0 0.0
        %1413 = vmatpush1.msra.mxu0 0.0
        %1414 = vmatprep.subr.mxu0 0.0
        %1415 = vmatpush1.msra.mxu0 0.0
        %1416 = vmatprep.subr.mxu0 0.0
        %1417 = vmatpush1.msra.mxu0 0.0
        %1418 = vmatprep.subr.mxu0 0.0
        %1419 = vmatpush1.msra.mxu0 0.0
        %1420 = vmatprep.subr.mxu0 0.0
        %1421 = vmatpush1.msra.mxu0 0.0
        %1422 = vmatprep.subr.mxu0 0.0
        %1423 = vmatpush1.msra.mxu0 0.0
        %1424 = vmatprep.subr.mxu0 0.0
        %1425 = vmatpush1.msra.mxu0 0.0
        %1426 = vmatprep.subr.mxu0 0.0
        %1427 = vmatpush1.msra.mxu0 0.0
        %1428 = vmatprep.subr.mxu0 0.0
        %1429 = vmatpush1.msra.mxu0 0.0
        %1430 = vmatprep.subr.mxu0 0.0
        %1431 = vmatpush1.msra.mxu0 0.0
        %1432 = vmatprep.subr.mxu0 0.0
        %1433 = vmatpush1.msra.mxu0 0.0
        %1434 = vmatprep.subr.mxu0 0.0
        %1435 = vmatpush1.msra.mxu0 0.0
        %1436 = vmatprep.subr.mxu0 0.0
        %1437 = vmatpush1.msra.mxu0 0.0
        %1438 = vmatprep.subr.mxu0 0.0
        %1439 = vmatpush1.msra.mxu0 0.0
        %1440 = vmatprep.subr.mxu0 0.0
        %1441 = vmatpush1.msra.mxu0 0.0
        %1442 = vmatprep.subr.mxu0 0.0
        %1443 = vmatpush1.msra.mxu0 %v476
        %1444 = vmatprep.subr.mxu0 0.0
        %1445 = vmatpush2.msra.mxu0 0.0
        %1446 = vmatprep.subr.mxu0 0.0
        %1447 = vmatpush2.msra.mxu0 0.0
        %1448 = vmatprep.subr.mxu0 0.0
        %1449 = vmatpush2.msra.mxu0 0.0
        %1450 = vmatprep.subr.mxu0 0.0
        %1451 = vmatpush2.msra.mxu0 0.0
        %1452 = vmatprep.subr.mxu0 0.0
        %1453 = vmatpush2.msra.mxu0 0.0
        %1454 = vmatprep.subr.mxu0 0.0
        %1455 = vmatpush2.msra.mxu0 0.0
        %1456 = vmatprep.subr.mxu0 0.0
        %1457 = vmatpush2.msra.mxu0 0.0
        %1458 = vmatprep.subr.mxu0 0.0
        %1459 = vmatpush2.msra.mxu0 0.0
        %1460 = vmatprep.subr.mxu0 0.0
        %1461 = vmatpush2.msra.mxu0 0.0
        %1462 = vmatprep.subr.mxu0 0.0
        %1463 = vmatpush2.msra.mxu0 0.0
        %1464 = vmatprep.subr.mxu0 0.0
        %1465 = vmatpush2.msra.mxu0 0.0
        %1466 = vmatprep.subr.mxu0 0.0
        %1467 = vmatpush2.msra.mxu0 0.0
        %1468 = vmatprep.subr.mxu0 0.0
        %1469 = vmatpush2.msra.mxu0 0.0
        %1470 = vmatprep.subr.mxu0 0.0
        %1471 = vmatpush2.msra.mxu0 0.0
        %1472 = vmatprep.subr.mxu0 0.0
        %1473 = vmatpush2.msra.mxu0 0.0
        %1474 = vmatprep.subr.mxu0 0.0
        %1475 = vmatpush2.msra.mxu0 0.0
        %1476 = vmatprep.mubr.f32.mxu0 0.0
        %1477 = vmatmul.mubr.f32.gmra.mxu0 %v582
        %v1478 = vpop.f32.mrf.mxu0
        %v1479 = vadd.f32 0.0, %v1478
        %v1480 = vpop.f32.mrf.mxu0
        %1481 = vmatprep.mubr.f32.mxu0 0.0
        %1482 = vmatmul.mubr.f32.gmra.mxu0 %v585
        %v1483 = vpop.f32.mrf.mxu0
        %v1484 = vadd.f32 0.0, %v1483
        %v1485 = vpop.f32.mrf.mxu0
        %1486 = vdwg.mxu0
        %1487 = vmatprep.subr.mxu0 0.0
        %1488 = vmatpush1.msra.mxu0 0.0
        %1489 = vmatprep.subr.mxu0 0.0
        %1490 = vmatpush1.msra.mxu0 0.0
        %1491 = vmatprep.subr.mxu0 0.0
        %1492 = vmatpush1.msra.mxu0 0.0
        %1493 = vmatprep.subr.mxu0 0.0
        %1494 = vmatpush1.msra.mxu0 0.0
        %1495 = vmatprep.subr.mxu0 0.0
        %1496 = vmatpush1.msra.mxu0 0.0
        %1497 = vmatprep.subr.mxu0 0.0
        %1498 = vmatpush1.msra.mxu0 0.0
        %1499 = vmatprep.subr.mxu0 0.0
        %1500 = vmatpush1.msra.mxu0 0.0
        %1501 = vmatprep.subr.mxu0 0.0
        %1502 = vmatpush1.msra.mxu0 0.0
        %1503 = vmatprep.subr.mxu0 0.0
        %1504 = vmatpush1.msra.mxu0 0.0
        %1505 = vmatprep.subr.mxu0 0.0
        %1506 = vmatpush1.msra.mxu0 0.0
        %1507 = vmatprep.subr.mxu0 0.0
        %1508 = vmatpush1.msra.mxu0 0.0
        %1509 = vmatprep.subr.mxu0 0.0
        %1510 = vmatpush1.msra.mxu0 0.0
        %1511 = vmatprep.subr.mxu0 0.0
        %1512 = vmatpush1.msra.mxu0 0.0
        %1513 = vmatprep.subr.mxu0 0.0
        %1514 = vmatpush1.msra.mxu0 0.0
        %1515 = vmatprep.subr.mxu0 0.0
        %1516 = vmatpush1.msra.mxu0 0.0
        %1517 = vmatprep.subr.mxu0 0.0
        %1518 = vmatpush1.msra.mxu0 %v481
        %1519 = vmatprep.subr.mxu0 0.0
        %1520 = vmatpush2.msra.mxu0 0.0
        %1521 = vmatprep.subr.mxu0 0.0
        %1522 = vmatpush2.msra.mxu0 0.0
        %1523 = vmatprep.subr.mxu0 0.0
        %1524 = vmatpush2.msra.mxu0 0.0
        %1525 = vmatprep.subr.mxu0 0.0
        %1526 = vmatpush2.msra.mxu0 0.0
        %1527 = vmatprep.subr.mxu0 0.0
        %1528 = vmatpush2.msra.mxu0 0.0
        %1529 = vmatprep.subr.mxu0 0.0
        %1530 = vmatpush2.msra.mxu0 0.0
        %1531 = vmatprep.subr.mxu0 0.0
        %1532 = vmatpush2.msra.mxu0 0.0
        %1533 = vmatprep.subr.mxu0 0.0
        %1534 = vmatpush2.msra.mxu0 0.0
        %1535 = vmatprep.subr.mxu0 0.0
        %1536 = vmatpush2.msra.mxu0 0.0
        %1537 = vmatprep.subr.mxu0 0.0
        %1538 = vmatpush2.msra.mxu0 0.0
        %1539 = vmatprep.subr.mxu0 0.0
        %1540 = vmatpush2.msra.mxu0 0.0
        %1541 = vmatprep.subr.mxu0 0.0
        %1542 = vmatpush2.msra.mxu0 0.0
        %1543 = vmatprep.subr.mxu0 0.0
        %1544 = vmatpush2.msra.mxu0 0.0
        %1545 = vmatprep.subr.mxu0 0.0
        %1546 = vmatpush2.msra.mxu0 0.0
        %1547 = vmatprep.subr.mxu0 0.0
        %1548 = vmatpush2.msra.mxu0 0.0
        %1549 = vmatprep.subr.mxu0 0.0
        %1550 = vmatpush2.msra.mxu0 0.0
        %1551 = vmatprep.mubr.f32.mxu0 0.0
        %1552 = vmatmul.mubr.f32.gmra.mxu0 %v582
        %v1553 = vpop.f32.mrf.mxu0
        %v1554 = vadd.f32 0.0, %v1553
        %v1555 = vpop.f32.mrf.mxu0
        %1556 = vmatprep.mubr.f32.mxu0 0.0
        %1557 = vmatmul.mubr.f32.gmra.mxu0 %v585
        %v1558 = vpop.f32.mrf.mxu0
        %v1559 = vadd.f32 0.0, %v1558
        %v1560 = vpop.f32.mrf.mxu0
        %1561 = vdwg.mxu0
        %1562 = vmatprep.subr.mxu0 0.0
        %1563 = vmatpush1.msra.mxu0 0.0
        %1564 = vmatprep.subr.mxu0 0.0
        %1565 = vmatpush1.msra.mxu0 0.0
        %1566 = vmatprep.subr.mxu0 0.0
        %1567 = vmatpush1.msra.mxu0 0.0
        %1568 = vmatprep.subr.mxu0 0.0
        %1569 = vmatpush1.msra.mxu0 0.0
        %1570 = vmatprep.subr.mxu0 0.0
        %1571 = vmatpush1.msra.mxu0 0.0
        %1572 = vmatprep.subr.mxu0 0.0
        %1573 = vmatpush1.msra.mxu0 0.0
        %1574 = vmatprep.subr.mxu0 0.0
        %1575 = vmatpush1.msra.mxu0 0.0
        %1576 = vmatprep.subr.mxu0 0.0
        %1577 = vmatpush1.msra.mxu0 0.0
        %1578 = vmatprep.subr.mxu0 0.0
        %1579 = vmatpush1.msra.mxu0 0.0
        %1580 = vmatprep.subr.mxu0 0.0
        %1581 = vmatpush1.msra.mxu0 0.0
        %1582 = vmatprep.subr.mxu0 0.0
        %1583 = vmatpush1.msra.mxu0 0.0
        %1584 = vmatprep.subr.mxu0 0.0
        %1585 = vmatpush1.msra.mxu0 0.0
        %1586 = vmatprep.subr.mxu0 0.0
        %1587 = vmatpush1.msra.mxu0 0.0
        %1588 = vmatprep.subr.mxu0 0.0
        %1589 = vmatpush1.msra.mxu0 0.0
        %1590 = vmatprep.subr.mxu0 0.0
        %1591 = vmatpush1.msra.mxu0 0.0
        %1592 = vmatprep.subr.mxu0 0.0
        %1593 = vmatpush1.msra.mxu0 %v486
        %1594 = vmatprep.subr.mxu0 0.0
        %1595 = vmatpush2.msra.mxu0 0.0
        %1596 = vmatprep.subr.mxu0 0.0
        %1597 = vmatpush2.msra.mxu0 0.0
        %1598 = vmatprep.subr.mxu0 0.0
        %1599 = vmatpush2.msra.mxu0 0.0
        %1600 = vmatprep.subr.mxu0 0.0
        %1601 = vmatpush2.msra.mxu0 0.0
        %1602 = vmatprep.subr.mxu0 0.0
        %1603 = vmatpush2.msra.mxu0 0.0
        %1604 = vmatprep.subr.mxu0 0.0
        %1605 = vmatpush2.msra.mxu0 0.0
        %1606 = vmatprep.subr.mxu0 0.0
        %1607 = vmatpush2.msra.mxu0 0.0
        %1608 = vmatprep.subr.mxu0 0.0
        %1609 = vmatpush2.msra.mxu0 0.0
        %1610 = vmatprep.subr.mxu0 0.0
        %1611 = vmatpush2.msra.mxu0 0.0
        %1612 = vmatprep.subr.mxu0 0.0
        %1613 = vmatpush2.msra.mxu0 0.0
        %1614 = vmatprep.subr.mxu0 0.0
        %1615 = vmatpush2.msra.mxu0 0.0
        %1616 = vmatprep.subr.mxu0 0.0
        %1617 = vmatpush2.msra.mxu0 0.0
        %1618 = vmatprep.subr.mxu0 0.0
        %1619 = vmatpush2.msra.mxu0 0.0
        %1620 = vmatprep.subr.mxu0 0.0
        %1621 = vmatpush2.msra.mxu0 0.0
        %1622 = vmatprep.subr.mxu0 0.0
        %1623 = vmatpush2.msra.mxu0 0.0
        %1624 = vmatprep.subr.mxu0 0.0
        %1625 = vmatpush2.msra.mxu0 0.0
        %1626 = vmatprep.mubr.f32.mxu0 0.0
        %1627 = vmatmul.mubr.f32.gmra.mxu0 %v582
        %v1628 = vpop.f32.mrf.mxu0
        %v1629 = vadd.f32 0.0, %v1628
        %v1630 = vpop.f32.mrf.mxu0
        %1631 = vmatprep.mubr.f32.mxu0 0.0
        %1632 = vmatmul.mubr.f32.gmra.mxu0 %v585
        %v1633 = vpop.f32.mrf.mxu0
        %v1634 = vadd.f32 0.0, %v1633
        %v1635 = vpop.f32.mrf.mxu0
        %1636 = vdwg.mxu0
        %1637 = vmatprep.subr.mxu0 0.0
        %1638 = vmatpush1.msra.mxu0 0.0
        %1639 = vmatprep.subr.mxu0 0.0
        %1640 = vmatpush1.msra.mxu0 0.0
        %1641 = vmatprep.subr.mxu0 0.0
        %1642 = vmatpush1.msra.mxu0 0.0
        %1643 = vmatprep.subr.mxu0 0.0
        %1644 = vmatpush1.msra.mxu0 0.0
        %1645 = vmatprep.subr.mxu0 0.0
        %1646 = vmatpush1.msra.mxu0 0.0
        %1647 = vmatprep.subr.mxu0 0.0
        %1648 = vmatpush1.msra.mxu0 0.0
        %1649 = vmatprep.subr.mxu0 0.0
        %1650 = vmatpush1.msra.mxu0 0.0
        %1651 = vmatprep.subr.mxu0 0.0
        %1652 = vmatpush1.msra.mxu0 0.0
        %1653 = vmatprep.subr.mxu0 0.0
        %1654 = vmatpush1.msra.mxu0 0.0
        %1655 = vmatprep.subr.mxu0 0.0
        %1656 = vmatpush1.msra.mxu0 0.0
        %1657 = vmatprep.subr.mxu0 0.0
        %1658 = vmatpush1.msra.mxu0 0.0
        %1659 = vmatprep.subr.mxu0 0.0
        %1660 = vmatpush1.msra.mxu0 0.0
        %1661 = vmatprep.subr.mxu0 0.0
        %1662 = vmatpush1.msra.mxu0 0.0
        %1663 = vmatprep.subr.mxu0 0.0
        %1664 = vmatpush1.msra.mxu0 0.0
        %1665 = vmatprep.subr.mxu0 0.0
        %1666 = vmatpush1.msra.mxu0 0.0
        %1667 = vmatprep.subr.mxu0 0.0
        %1668 = vmatpush1.msra.mxu0 %v491
        %1669 = vmatprep.subr.mxu0 0.0
        %1670 = vmatpush2.msra.mxu0 0.0
        %1671 = vmatprep.subr.mxu0 0.0
        %1672 = vmatpush2.msra.mxu0 0.0
        %1673 = vmatprep.subr.mxu0 0.0
        %1674 = vmatpush2.msra.mxu0 0.0
        %1675 = vmatprep.subr.mxu0 0.0
        %1676 = vmatpush2.msra.mxu0 0.0
        %1677 = vmatprep.subr.mxu0 0.0
        %1678 = vmatpush2.msra.mxu0 0.0
        %1679 = vmatprep.subr.mxu0 0.0
        %1680 = vmatpush2.msra.mxu0 0.0
        %1681 = vmatprep.subr.mxu0 0.0
        %1682 = vmatpush2.msra.mxu0 0.0
        %1683 = vmatprep.subr.mxu0 0.0
        %1684 = vmatpush2.msra.mxu0 0.0
        %1685 = vmatprep.subr.mxu0 0.0
        %1686 = vmatpush2.msra.mxu0 0.0
        %1687 = vmatprep.subr.mxu0 0.0
        %1688 = vmatpush2.msra.mxu0 0.0
        %1689 = vmatprep.subr.mxu0 0.0
        %1690 = vmatpush2.msra.mxu0 0.0
        %1691 = vmatprep.subr.mxu0 0.0
        %1692 = vmatpush2.msra.mxu0 0.0
        %1693 = vmatprep.subr.mxu0 0.0
        %1694 = vmatpush2.msra.mxu0 0.0
        %1695 = vmatprep.subr.mxu0 0.0
        %1696 = vmatpush2.msra.mxu0 0.0
        %1697 = vmatprep.subr.mxu0 0.0
        %1698 = vmatpush2.msra.mxu0 0.0
        %1699 = vmatprep.subr.mxu0 0.0
        %1700 = vmatpush2.msra.mxu0 0.0
        %1701 = vmatprep.mubr.f32.mxu0 0.0
        %1702 = vmatmul.mubr.f32.gmra.mxu0 %v582
        %v1703 = vpop.f32.mrf.mxu0
        %v1704 = vadd.f32 0.0, %v1703
        %v1705 = vpop.f32.mrf.mxu0
        %1706 = vmatprep.mubr.f32.mxu0 0.0
        %1707 = vmatmul.mubr.f32.gmra.mxu0 %v585
        %v1708 = vpop.f32.mrf.mxu0
        %v1709 = vadd.f32 0.0, %v1708
        %v1710 = vpop.f32.mrf.mxu0
        %1711 = vdwg.mxu0
        %1712 = vmatprep.subr.mxu0 0.0
        %1713 = vmatpush1.msra.mxu0 0.0
        %1714 = vmatprep.subr.mxu0 0.0
        %1715 = vmatpush1.msra.mxu0 0.0
        %1716 = vmatprep.subr.mxu0 0.0
        %1717 = vmatpush1.msra.mxu0 0.0
        %1718 = vmatprep.subr.mxu0 0.0
        %1719 = vmatpush1.msra.mxu0 0.0
        %1720 = vmatprep.subr.mxu0 0.0
        %1721 = vmatpush1.msra.mxu0 0.0
        %1722 = vmatprep.subr.mxu0 0.0
        %1723 = vmatpush1.msra.mxu0 0.0
        %1724 = vmatprep.subr.mxu0 0.0
        %1725 = vmatpush1.msra.mxu0 0.0
        %1726 = vmatprep.subr.mxu0 0.0
        %1727 = vmatpush1.msra.mxu0 0.0
        %1728 = vmatprep.subr.mxu0 0.0
        %1729 = vmatpush1.msra.mxu0 0.0
        %1730 = vmatprep.subr.mxu0 0.0
        %1731 = vmatpush1.msra.mxu0 0.0
        %1732 = vmatprep.subr.mxu0 0.0
        %1733 = vmatpush1.msra.mxu0 0.0
        %1734 = vmatprep.subr.mxu0 0.0
        %1735 = vmatpush1.msra.mxu0 0.0
        %1736 = vmatprep.subr.mxu0 0.0
        %1737 = vmatpush1.msra.mxu0 0.0
        %1738 = vmatprep.subr.mxu0 0.0
        %1739 = vmatpush1.msra.mxu0 0.0
        %1740 = vmatprep.subr.mxu0 0.0
        %1741 = vmatpush1.msra.mxu0 0.0
        %1742 = vmatprep.subr.mxu0 0.0
        %1743 = vmatpush1.msra.mxu0 %v496
        %1744 = vmatprep.subr.mxu0 0.0
        %1745 = vmatpush2.msra.mxu0 0.0
        %1746 = vmatprep.subr.mxu0 0.0
        %1747 = vmatpush2.msra.mxu0 0.0
        %1748 = vmatprep.subr.mxu0 0.0
        %1749 = vmatpush2.msra.mxu0 0.0
        %1750 = vmatprep.subr.mxu0 0.0
        %1751 = vmatpush2.msra.mxu0 0.0
        %1752 = vmatprep.subr.mxu0 0.0
        %1753 = vmatpush2.msra.mxu0 0.0
        %1754 = vmatprep.subr.mxu0 0.0
        %1755 = vmatpush2.msra.mxu0 0.0
        %1756 = vmatprep.subr.mxu0 0.0
        %1757 = vmatpush2.msra.mxu0 0.0
        %1758 = vmatprep.subr.mxu0 0.0
        %1759 = vmatpush2.msra.mxu0 0.0
        %1760 = vmatprep.subr.mxu0 0.0
        %1761 = vmatpush2.msra.mxu0 0.0
        %1762 = vmatprep.subr.mxu0 0.0
        %1763 = vmatpush2.msra.mxu0 0.0
        %1764 = vmatprep.subr.mxu0 0.0
        %1765 = vmatpush2.msra.mxu0 0.0
        %1766 = vmatprep.subr.mxu0 0.0
        %1767 = vmatpush2.msra.mxu0 0.0
        %1768 = vmatprep.subr.mxu0 0.0
        %1769 = vmatpush2.msra.mxu0 0.0
        %1770 = vmatprep.subr.mxu0 0.0
        %1771 = vmatpush2.msra.mxu0 0.0
        %1772 = vmatprep.subr.mxu0 0.0
        %1773 = vmatpush2.msra.mxu0 0.0
        %1774 = vmatprep.subr.mxu0 0.0
        %1775 = vmatpush2.msra.mxu0 0.0
        %1776 = vmatprep.mubr.f32.mxu0 0.0
        %1777 = vmatmul.mubr.f32.gmra.mxu0 %v582
        %v1778 = vpop.f32.mrf.mxu0
        %v1779 = vadd.f32 0.0, %v1778
        %v1780 = vpop.f32.mrf.mxu0
        %1781 = vmatprep.mubr.f32.mxu0 0.0
        %1782 = vmatmul.mubr.f32.gmra.mxu0 %v585
        %v1783 = vpop.f32.mrf.mxu0
        %v1784 = vadd.f32 0.0, %v1783
        %v1785 = vpop.f32.mrf.mxu0
        %1786 = vdwg.mxu0
        %1787 = vmatprep.subr.mxu0 0.0
        %1788 = vmatpush1.msra.mxu0 0.0
        %1789 = vmatprep.subr.mxu0 0.0
        %1790 = vmatpush1.msra.mxu0 0.0
        %1791 = vmatprep.subr.mxu0 0.0
        %1792 = vmatpush1.msra.mxu0 0.0
        %1793 = vmatprep.subr.mxu0 0.0
        %1794 = vmatpush1.msra.mxu0 0.0
        %1795 = vmatprep.subr.mxu0 0.0
        %1796 = vmatpush1.msra.mxu0 0.0
        %1797 = vmatprep.subr.mxu0 0.0
        %1798 = vmatpush1.msra.mxu0 0.0
        %1799 = vmatprep.subr.mxu0 0.0
        %1800 = vmatpush1.msra.mxu0 0.0
        %1801 = vmatprep.subr.mxu0 0.0
        %1802 = vmatpush1.msra.mxu0 0.0
        %1803 = vmatprep.subr.mxu0 0.0
        %1804 = vmatpush1.msra.mxu0 0.0
        %1805 = vmatprep.subr.mxu0 0.0
        %1806 = vmatpush1.msra.mxu0 0.0
        %1807 = vmatprep.subr.mxu0 0.0
        %1808 = vmatpush1.msra.mxu0 0.0
        %1809 = vmatprep.subr.mxu0 0.0
        %1810 = vmatpush1.msra.mxu0 0.0
        %1811 = vmatprep.subr.mxu0 0.0
        %1812 = vmatpush1.msra.mxu0 0.0
        %1813 = vmatprep.subr.mxu0 0.0
        %1814 = vmatpush1.msra.mxu0 0.0
        %1815 = vmatprep.subr.mxu0 0.0
        %1816 = vmatpush1.msra.mxu0 0.0
        %1817 = vmatprep.subr.mxu0 0.0
        %1818 = vmatpush1.msra.mxu0 %v501
        %1819 = vmatprep.subr.mxu0 0.0
        %1820 = vmatpush2.msra.mxu0 0.0
        %1821 = vmatprep.subr.mxu0 0.0
        %1822 = vmatpush2.msra.mxu0 0.0
        %1823 = vmatprep.subr.mxu0 0.0
        %1824 = vmatpush2.msra.mxu0 0.0
        %1825 = vmatprep.subr.mxu0 0.0
        %1826 = vmatpush2.msra.mxu0 0.0
        %1827 = vmatprep.subr.mxu0 0.0
        %1828 = vmatpush2.msra.mxu0 0.0
        %1829 = vmatprep.subr.mxu0 0.0
        %1830 = vmatpush2.msra.mxu0 0.0
        %1831 = vmatprep.subr.mxu0 0.0
        %1832 = vmatpush2.msra.mxu0 0.0
        %1833 = vmatprep.subr.mxu0 0.0
        %1834 = vmatpush2.msra.mxu0 0.0
        %1835 = vmatprep.subr.mxu0 0.0
        %1836 = vmatpush2.msra.mxu0 0.0
        %1837 = vmatprep.subr.mxu0 0.0
        %1838 = vmatpush2.msra.mxu0 0.0
        %1839 = vmatprep.subr.mxu0 0.0
        %1840 = vmatpush2.msra.mxu0 0.0
        %1841 = vmatprep.subr.mxu0 0.0
        %1842 = vmatpush2.msra.mxu0 0.0
        %1843 = vmatprep.subr.mxu0 0.0
        %1844 = vmatpush2.msra.mxu0 0.0
        %1845 = vmatprep.subr.mxu0 0.0
        %1846 = vmatpush2.msra.mxu0 0.0
        %1847 = vmatprep.subr.mxu0 0.0
        %1848 = vmatpush2.msra.mxu0 0.0
        %1849 = vmatprep.subr.mxu0 0.0
        %1850 = vmatpush2.msra.mxu0 0.0
        %1851 = vmatprep.mubr.f32.mxu0 0.0
        %1852 = vmatmul.mubr.f32.gmra.mxu0 %v582
        %v1853 = vpop.f32.mrf.mxu0
        %v1854 = vadd.f32 0.0, %v1853
        %v1855 = vpop.f32.mrf.mxu0
        %1856 = vmatprep.mubr.f32.mxu0 0.0
        %1857 = vmatmul.mubr.f32.gmra.mxu0 %v585
        %v1858 = vpop.f32.mrf.mxu0
        %v1859 = vadd.f32 0.0, %v1858
        %v1860 = vpop.f32.mrf.mxu0
        %1861 = vdwg.mxu0
        %1862 = vmatprep.subr.mxu0 0.0
        %1863 = vmatpush1.msra.mxu0 0.0
        %1864 = vmatprep.subr.mxu0 0.0
        %1865 = vmatpush1.msra.mxu0 0.0
        %1866 = vmatprep.subr.mxu0 0.0
        %1867 = vmatpush1.msra.mxu0 0.0
        %1868 = vmatprep.subr.mxu0 0.0
        %1869 = vmatpush1.msra.mxu0 0.0
        %1870 = vmatprep.subr.mxu0 0.0
        %1871 = vmatpush1.msra.mxu0 0.0
        %1872 = vmatprep.subr.mxu0 0.0
        %1873 = vmatpush1.msra.mxu0 0.0
        %1874 = vmatprep.subr.mxu0 0.0
        %1875 = vmatpush1.msra.mxu0 0.0
        %1876 = vmatprep.subr.mxu0 0.0
        %1877 = vmatpush1.msra.mxu0 0.0
        %1878 = vmatprep.subr.mxu0 0.0
        %1879 = vmatpush1.msra.mxu0 0.0
        %1880 = vmatprep.subr.mxu0 0.0
        %1881 = vmatpush1.msra.mxu0 0.0
        %1882 = vmatprep.subr.mxu0 0.0
        %1883 = vmatpush1.msra.mxu0 0.0
        %1884 = vmatprep.subr.mxu0 0.0
        %1885 = vmatpush1.msra.mxu0 0.0
        %1886 = vmatprep.subr.mxu0 0.0
        %1887 = vmatpush1.msra.mxu0 0.0
        %1888 = vmatprep.subr.mxu0 0.0
        %1889 = vmatpush1.msra.mxu0 0.0
        %1890 = vmatprep.subr.mxu0 0.0
        %1891 = vmatpush1.msra.mxu0 0.0
        %1892 = vmatprep.subr.mxu0 0.0
        %1893 = vmatpush1.msra.mxu0 %v506
        %1894 = vmatprep.subr.mxu0 0.0
        %1895 = vmatpush2.msra.mxu0 0.0
        %1896 = vmatprep.subr.mxu0 0.0
        %1897 = vmatpush2.msra.mxu0 0.0
        %1898 = vmatprep.subr.mxu0 0.0
        %1899 = vmatpush2.msra.mxu0 0.0
        %1900 = vmatprep.subr.mxu0 0.0
        %1901 = vmatpush2.msra.mxu0 0.0
        %1902 = vmatprep.subr.mxu0 0.0
        %1903 = vmatpush2.msra.mxu0 0.0
        %1904 = vmatprep.subr.mxu0 0.0
        %1905 = vmatpush2.msra.mxu0 0.0
        %1906 = vmatprep.subr.mxu0 0.0
        %1907 = vmatpush2.msra.mxu0 0.0
        %1908 = vmatprep.subr.mxu0 0.0
        %1909 = vmatpush2.msra.mxu0 0.0
        %1910 = vmatprep.subr.mxu0 0.0
        %1911 = vmatpush2.msra.mxu0 0.0
        %1912 = vmatprep.subr.mxu0 0.0
        %1913 = vmatpush2.msra.mxu0 0.0
        %1914 = vmatprep.subr.mxu0 0.0
        %1915 = vmatpush2.msra.mxu0 0.0
        %1916 = vmatprep.subr.mxu0 0.0
        %1917 = vmatpush2.msra.mxu0 0.0
        %1918 = vmatprep.subr.mxu0 0.0
        %1919 = vmatpush2.msra.mxu0 0.0
        %1920 = vmatprep.subr.mxu0 0.0
        %1921 = vmatpush2.msra.mxu0 0.0
        %1922 = vmatprep.subr.mxu0 0.0
        %1923 = vmatpush2.msra.mxu0 0.0
        %1924 = vmatprep.subr.mxu0 0.0
        %1925 = vmatpush2.msra.mxu0 0.0
        %1926 = vmatprep.mubr.f32.mxu0 0.0
        %1927 = vmatmul.mubr.f32.gmra.mxu0 %v582
        %v1928 = vpop.f32.mrf.mxu0
        %v1929 = vadd.f32 0.0, %v1928
        %v1930 = vpop.f32.mrf.mxu0
        %1931 = vmatprep.mubr.f32.mxu0 0.0
        %1932 = vmatmul.mubr.f32.gmra.mxu0 %v585
        %v1933 = vpop.f32.mrf.mxu0
        %v1934 = vadd.f32 0.0, %v1933
        %v1935 = vpop.f32.mrf.mxu0
        %1936 = vdwg.mxu0
        %1937 = vmatprep.subr.mxu0 0.0
        %1938 = vmatpush1.msra.mxu0 0.0
        %1939 = vmatprep.subr.mxu0 0.0
        %1940 = vmatpush1.msra.mxu0 0.0
        %1941 = vmatprep.subr.mxu0 0.0
        %1942 = vmatpush1.msra.mxu0 0.0
        %1943 = vmatprep.subr.mxu0 0.0
        %1944 = vmatpush1.msra.mxu0 0.0
        %1945 = vmatprep.subr.mxu0 0.0
        %1946 = vmatpush1.msra.mxu0 0.0
        %1947 = vmatprep.subr.mxu0 0.0
        %1948 = vmatpush1.msra.mxu0 0.0
        %1949 = vmatprep.subr.mxu0 0.0
        %1950 = vmatpush1.msra.mxu0 0.0
        %1951 = vmatprep.subr.mxu0 0.0
        %1952 = vmatpush1.msra.mxu0 0.0
        %1953 = vmatprep.subr.mxu0 0.0
        %1954 = vmatpush1.msra.mxu0 0.0
        %1955 = vmatprep.subr.mxu0 0.0
        %1956 = vmatpush1.msra.mxu0 0.0
        %1957 = vmatprep.subr.mxu0 0.0
        %1958 = vmatpush1.msra.mxu0 0.0
        %1959 = vmatprep.subr.mxu0 0.0
        %1960 = vmatpush1.msra.mxu0 0.0
        %1961 = vmatprep.subr.mxu0 0.0
        %1962 = vmatpush1.msra.mxu0 0.0
        %1963 = vmatprep.subr.mxu0 0.0
        %1964 = vmatpush1.msra.mxu0 0.0
        %1965 = vmatprep.subr.mxu0 0.0
        %1966 = vmatpush1.msra.mxu0 0.0
        %1967 = vmatprep.subr.mxu0 0.0
        %1968 = vmatpush1.msra.mxu0 %v511
        %1969 = vmatprep.subr.mxu0 0.0
        %1970 = vmatpush2.msra.mxu0 0.0
        %1971 = vmatprep.subr.mxu0 0.0
        %1972 = vmatpush2.msra.mxu0 0.0
        %1973 = vmatprep.subr.mxu0 0.0
        %1974 = vmatpush2.msra.mxu0 0.0
        %1975 = vmatprep.subr.mxu0 0.0
        %1976 = vmatpush2.msra.mxu0 0.0
        %1977 = vmatprep.subr.mxu0 0.0
        %1978 = vmatpush2.msra.mxu0 0.0
        %1979 = vmatprep.subr.mxu0 0.0
        %1980 = vmatpush2.msra.mxu0 0.0
        %1981 = vmatprep.subr.mxu0 0.0
        %1982 = vmatpush2.msra.mxu0 0.0
        %1983 = vmatprep.subr.mxu0 0.0
        %1984 = vmatpush2.msra.mxu0 0.0
        %1985 = vmatprep.subr.mxu0 0.0
        %1986 = vmatpush2.msra.mxu0 0.0
        %1987 = vmatprep.subr.mxu0 0.0
        %1988 = vmatpush2.msra.mxu0 0.0
        %1989 = vmatprep.subr.mxu0 0.0
        %1990 = vmatpush2.msra.mxu0 0.0
        %1991 = vmatprep.subr.mxu0 0.0
        %1992 = vmatpush2.msra.mxu0 0.0
        %1993 = vmatprep.subr.mxu0 0.0
        %1994 = vmatpush2.msra.mxu0 0.0
        %1995 = vmatprep.subr.mxu0 0.0
        %1996 = vmatpush2.msra.mxu0 0.0
        %1997 = vmatprep.subr.mxu0 0.0
        %1998 = vmatpush2.msra.mxu0 0.0
        %1999 = vmatprep.subr.mxu0 0.0
        %2000 = vmatpush2.msra.mxu0 0.0
        %2001 = vmatprep.mubr.f32.mxu0 0.0
        %2002 = vmatmul.mubr.f32.gmra.mxu0 %v582
        %v2003 = vpop.f32.mrf.mxu0
        %v2004 = vadd.f32 0.0, %v2003
        %v2005 = vpop.f32.mrf.mxu0
        %2006 = vmatprep.mubr.f32.mxu0 0.0
        %2007 = vmatmul.mubr.f32.gmra.mxu0 %v585
        %v2008 = vpop.f32.mrf.mxu0
        %v2009 = vadd.f32 0.0, %v2008
        %v2010 = vpop.f32.mrf.mxu0
        %2011 = vdwg.mxu0
        %2012 = vmatprep.subr.mxu0 0.0
        %2013 = vmatpush1.msra.mxu0 0.0
        %2014 = vmatprep.subr.mxu0 0.0
        %2015 = vmatpush1.msra.mxu0 0.0
        %2016 = vmatprep.subr.mxu0 0.0
        %2017 = vmatpush1.msra.mxu0 0.0
        %2018 = vmatprep.subr.mxu0 0.0
        %2019 = vmatpush1.msra.mxu0 0.0
        %2020 = vmatprep.subr.mxu0 0.0
        %2021 = vmatpush1.msra.mxu0 0.0
        %2022 = vmatprep.subr.mxu0 0.0
        %2023 = vmatpush1.msra.mxu0 0.0
        %2024 = vmatprep.subr.mxu0 0.0
        %2025 = vmatpush1.msra.mxu0 0.0
        %2026 = vmatprep.subr.mxu0 0.0
        %2027 = vmatpush1.msra.mxu0 0.0
        %2028 = vmatprep.subr.mxu0 0.0
        %2029 = vmatpush1.msra.mxu0 0.0
        %2030 = vmatprep.subr.mxu0 0.0
        %2031 = vmatpush1.msra.mxu0 0.0
        %2032 = vmatprep.subr.mxu0 0.0
        %2033 = vmatpush1.msra.mxu0 0.0
        %2034 = vmatprep.subr.mxu0 0.0
        %2035 = vmatpush1.msra.mxu0 0.0
        %2036 = vmatprep.subr.mxu0 0.0
        %2037 = vmatpush1.msra.mxu0 0.0
        %2038 = vmatprep.subr.mxu0 0.0
        %2039 = vmatpush1.msra.mxu0 0.0
        %2040 = vmatprep.subr.mxu0 0.0
        %2041 = vmatpush1.msra.mxu0 0.0
        %2042 = vmatprep.subr.mxu0 0.0
        %2043 = vmatpush1.msra.mxu0 %v516
        %2044 = vmatprep.subr.mxu0 0.0
        %2045 = vmatpush2.msra.mxu0 0.0
        %2046 = vmatprep.subr.mxu0 0.0
        %2047 = vmatpush2.msra.mxu0 0.0
        %2048 = vmatprep.subr.mxu0 0.0
        %2049 = vmatpush2.msra.mxu0 0.0
        %2050 = vmatprep.subr.mxu0 0.0
        %2051 = vmatpush2.msra.mxu0 0.0
        %2052 = vmatprep.subr.mxu0 0.0
        %2053 = vmatpush2.msra.mxu0 0.0
        %2054 = vmatprep.subr.mxu0 0.0
        %2055 = vmatpush2.msra.mxu0 0.0
        %2056 = vmatprep.subr.mxu0 0.0
        %2057 = vmatpush2.msra.mxu0 0.0
        %2058 = vmatprep.subr.mxu0 0.0
        %2059 = vmatpush2.msra.mxu0 0.0
        %2060 = vmatprep.subr.mxu0 0.0
        %2061 = vmatpush2.msra.mxu0 0.0
        %2062 = vmatprep.subr.mxu0 0.0
        %2063 = vmatpush2.msra.mxu0 0.0
        %2064 = vmatprep.subr.mxu0 0.0
        %2065 = vmatpush2.msra.mxu0 0.0
        %2066 = vmatprep.subr.mxu0 0.0
        %2067 = vmatpush2.msra.mxu0 0.0
        %2068 = vmatprep.subr.mxu0 0.0
        %2069 = vmatpush2.msra.mxu0 0.0
        %2070 = vmatprep.subr.mxu0 0.0
        %2071 = vmatpush2.msra.mxu0 0.0
        %2072 = vmatprep.subr.mxu0 0.0
        %2073 = vmatpush2.msra.mxu0 0.0
        %2074 = vmatprep.subr.mxu0 0.0
        %2075 = vmatpush2.msra.mxu0 0.0
        %2076 = vmatprep.mubr.f32.mxu0 0.0
        %2077 = vmatmul.mubr.f32.gmra.mxu0 %v582
        %v2078 = vpop.f32.mrf.mxu0
        %v2079 = vadd.f32 0.0, %v2078
        %v2080 = vpop.f32.mrf.mxu0
        %2081 = vmatprep.mubr.f32.mxu0 0.0
        %2082 = vmatmul.mubr.f32.gmra.mxu0 %v585
        %v2083 = vpop.f32.mrf.mxu0
        %v2084 = vadd.f32 0.0, %v2083
        %v2085 = vpop.f32.mrf.mxu0
        %2086 = vdwg.mxu0
        %2087 = vmatprep.subr.mxu0 0.0
        %2088 = vmatpush1.msra.mxu0 0.0
        %2089 = vmatprep.subr.mxu0 0.0
        %2090 = vmatpush1.msra.mxu0 0.0
        %2091 = vmatprep.subr.mxu0 0.0
        %2092 = vmatpush1.msra.mxu0 0.0
        %2093 = vmatprep.subr.mxu0 0.0
        %2094 = vmatpush1.msra.mxu0 0.0
        %2095 = vmatprep.subr.mxu0 0.0
        %2096 = vmatpush1.msra.mxu0 0.0
        %2097 = vmatprep.subr.mxu0 0.0
        %2098 = vmatpush1.msra.mxu0 0.0
        %2099 = vmatprep.subr.mxu0 0.0
        %2100 = vmatpush1.msra.mxu0 0.0
        %2101 = vmatprep.subr.mxu0 0.0
        %2102 = vmatpush1.msra.mxu0 0.0
        %2103 = vmatprep.subr.mxu0 0.0
        %2104 = vmatpush1.msra.mxu0 0.0
        %2105 = vmatprep.subr.mxu0 0.0
        %2106 = vmatpush1.msra.mxu0 0.0
        %2107 = vmatprep.subr.mxu0 0.0
        %2108 = vmatpush1.msra.mxu0 0.0
        %2109 = vmatprep.subr.mxu0 0.0
        %2110 = vmatpush1.msra.mxu0 0.0
        %2111 = vmatprep.subr.mxu0 0.0
        %2112 = vmatpush1.msra.mxu0 0.0
        %2113 = vmatprep.subr.mxu0 0.0
        %2114 = vmatpush1.msra.mxu0 0.0
        %2115 = vmatprep.subr.mxu0 0.0
        %2116 = vmatpush1.msra.mxu0 0.0
        %2117 = vmatprep.subr.mxu0 0.0
        %2118 = vmatpush1.msra.mxu0 %v521
        %2119 = vmatprep.subr.mxu0 0.0
        %2120 = vmatpush2.msra.mxu0 0.0
        %2121 = vmatprep.subr.mxu0 0.0
        %2122 = vmatpush2.msra.mxu0 0.0
        %2123 = vmatprep.subr.mxu0 0.0
        %2124 = vmatpush2.msra.mxu0 0.0
        %2125 = vmatprep.subr.mxu0 0.0
        %2126 = vmatpush2.msra.mxu0 0.0
        %2127 = vmatprep.subr.mxu0 0.0
        %2128 = vmatpush2.msra.mxu0 0.0
        %2129 = vmatprep.subr.mxu0 0.0
        %2130 = vmatpush2.msra.mxu0 0.0
        %2131 = vmatprep.subr.mxu0 0.0
        %2132 = vmatpush2.msra.mxu0 0.0
        %2133 = vmatprep.subr.mxu0 0.0
        %2134 = vmatpush2.msra.mxu0 0.0
        %2135 = vmatprep.subr.mxu0 0.0
        %2136 = vmatpush2.msra.mxu0 0.0
        %2137 = vmatprep.subr.mxu0 0.0
        %2138 = vmatpush2.msra.mxu0 0.0
        %2139 = vmatprep.subr.mxu0 0.0
        %2140 = vmatpush2.msra.mxu0 0.0
        %2141 = vmatprep.subr.mxu0 0.0
        %2142 = vmatpush2.msra.mxu0 0.0
        %2143 = vmatprep.subr.mxu0 0.0
        %2144 = vmatpush2.msra.mxu0 0.0
        %2145 = vmatprep.subr.mxu0 0.0
        %2146 = vmatpush2.msra.mxu0 0.0
        %2147 = vmatprep.subr.mxu0 0.0
        %2148 = vmatpush2.msra.mxu0 0.0
        %2149 = vmatprep.subr.mxu0 0.0
        %2150 = vmatpush2.msra.mxu0 0.0
        %2151 = vmatprep.mubr.f32.mxu0 0.0
        %2152 = vmatmul.mubr.f32.gmra.mxu0 %v582
        %v2153 = vpop.f32.mrf.mxu0
        %v2154 = vadd.f32 0.0, %v2153
        %v2155 = vpop.f32.mrf.mxu0
        %2156 = vmatprep.mubr.f32.mxu0 0.0
        %2157 = vmatmul.mubr.f32.gmra.mxu0 %v585
        %v2158 = vpop.f32.mrf.mxu0
        %v2159 = vadd.f32 0.0, %v2158
        %v2160 = vpop.f32.mrf.mxu0
        %2161 = vdwg.mxu0
        %2162 = vmatprep.subr.mxu0 0.0
        %2163 = vmatpush1.msra.mxu0 0.0
        %2164 = vmatprep.subr.mxu0 0.0
        %2165 = vmatpush1.msra.mxu0 0.0
        %2166 = vmatprep.subr.mxu0 0.0
        %2167 = vmatpush1.msra.mxu0 0.0
        %2168 = vmatprep.subr.mxu0 0.0
        %2169 = vmatpush1.msra.mxu0 0.0
        %2170 = vmatprep.subr.mxu0 0.0
        %2171 = vmatpush1.msra.mxu0 0.0
        %2172 = vmatprep.subr.mxu0 0.0
        %2173 = vmatpush1.msra.mxu0 0.0
        %2174 = vmatprep.subr.mxu0 0.0
        %2175 = vmatpush1.msra.mxu0 0.0
        %2176 = vmatprep.subr.mxu0 0.0
        %2177 = vmatpush1.msra.mxu0 0.0
        %2178 = vmatprep.subr.mxu0 0.0
        %2179 = vmatpush1.msra.mxu0 0.0
        %2180 = vmatprep.subr.mxu0 0.0
        %2181 = vmatpush1.msra.mxu0 0.0
        %2182 = vmatprep.subr.mxu0 0.0
        %2183 = vmatpush1.msra.mxu0 0.0
        %2184 = vmatprep.subr.mxu0 0.0
        %2185 = vmatpush1.msra.mxu0 0.0
        %2186 = vmatprep.subr.mxu0 0.0
        %2187 = vmatpush1.msra.mxu0 0.0
        %2188 = vmatprep.subr.mxu0 0.0
        %2189 = vmatpush1.msra.mxu0 0.0
        %2190 = vmatprep.subr.mxu0 0.0
        %2191 = vmatpush1.msra.mxu0 0.0
        %2192 = vmatprep.subr.mxu0 0.0
        %2193 = vmatpush1.msra.mxu0 %v526
        %2194 = vmatprep.subr.mxu0 0.0
        %2195 = vmatpush2.msra.mxu0 0.0
        %2196 = vmatprep.subr.mxu0 0.0
        %2197 = vmatpush2.msra.mxu0 0.0
        %2198 = vmatprep.subr.mxu0 0.0
        %2199 = vmatpush2.msra.mxu0 0.0
        %2200 = vmatprep.subr.mxu0 0.0
        %2201 = vmatpush2.msra.mxu0 0.0
        %2202 = vmatprep.subr.mxu0 0.0
        %2203 = vmatpush2.msra.mxu0 0.0
        %2204 = vmatprep.subr.mxu0 0.0
        %2205 = vmatpush2.msra.mxu0 0.0
        %2206 = vmatprep.subr.mxu0 0.0
        %2207 = vmatpush2.msra.mxu0 0.0
        %2208 = vmatprep.subr.mxu0 0.0
        %2209 = vmatpush2.msra.mxu0 0.0
        %2210 = vmatprep.subr.mxu0 0.0
        %2211 = vmatpush2.msra.mxu0 0.0
        %2212 = vmatprep.subr.mxu0 0.0
        %2213 = vmatpush2.msra.mxu0 0.0
        %2214 = vmatprep.subr.mxu0 0.0
        %2215 = vmatpush2.msra.mxu0 0.0
        %2216 = vmatprep.subr.mxu0 0.0
        %2217 = vmatpush2.msra.mxu0 0.0
        %2218 = vmatprep.subr.mxu0 0.0
        %2219 = vmatpush2.msra.mxu0 0.0
        %2220 = vmatprep.subr.mxu0 0.0
        %2221 = vmatpush2.msra.mxu0 0.0
        %2222 = vmatprep.subr.mxu0 0.0
        %2223 = vmatpush2.msra.mxu0 0.0
        %2224 = vmatprep.subr.mxu0 0.0
        %2225 = vmatpush2.msra.mxu0 0.0
        %2226 = vmatprep.mubr.f32.mxu0 0.0
        %2227 = vmatmul.mubr.f32.gmra.mxu0 %v582
        %v2228 = vpop.f32.mrf.mxu0
        %v2229 = vadd.f32 0.0, %v2228
        %v2230 = vpop.f32.mrf.mxu0
        %2231 = vmatprep.mubr.f32.mxu0 0.0
        %2232 = vmatmul.mubr.f32.gmra.mxu0 %v585
        %v2233 = vpop.f32.mrf.mxu0
        %v2234 = vadd.f32 0.0, %v2233
        %v2235 = vpop.f32.mrf.mxu0
        %2236 = vdwg.mxu0
        %2237 = vmatprep.subr.mxu0 0.0
        %2238 = vmatpush1.msra.mxu0 0.0
        %2239 = vmatprep.subr.mxu0 0.0
        %2240 = vmatpush1.msra.mxu0 0.0
        %2241 = vmatprep.subr.mxu0 0.0
        %2242 = vmatpush1.msra.mxu0 0.0
        %2243 = vmatprep.subr.mxu0 0.0
        %2244 = vmatpush1.msra.mxu0 0.0
        %2245 = vmatprep.subr.mxu0 0.0
        %2246 = vmatpush1.msra.mxu0 0.0
        %2247 = vmatprep.subr.mxu0 0.0
        %2248 = vmatpush1.msra.mxu0 0.0
        %2249 = vmatprep.subr.mxu0 0.0
        %2250 = vmatpush1.msra.mxu0 0.0
        %2251 = vmatprep.subr.mxu0 0.0
        %2252 = vmatpush1.msra.mxu0 0.0
        %2253 = vmatprep.subr.mxu0 0.0
        %2254 = vmatpush1.msra.mxu0 0.0
        %2255 = vmatprep.subr.mxu0 0.0
        %2256 = vmatpush1.msra.mxu0 0.0
        %2257 = vmatprep.subr.mxu0 0.0
        %2258 = vmatpush1.msra.mxu0 0.0
        %2259 = vmatprep.subr.mxu0 0.0
        %2260 = vmatpush1.msra.mxu0 0.0
        %2261 = vmatprep.subr.mxu0 0.0
        %2262 = vmatpush1.msra.mxu0 0.0
        %2263 = vmatprep.subr.mxu0 0.0
        %2264 = vmatpush1.msra.mxu0 0.0
        %2265 = vmatprep.subr.mxu0 0.0
        %2266 = vmatpush1.msra.mxu0 0.0
        %2267 = vmatprep.subr.mxu0 0.0
        %2268 = vmatpush1.msra.mxu0 %v531
        %2269 = vmatprep.subr.mxu0 0.0
        %2270 = vmatpush2.msra.mxu0 0.0
        %2271 = vmatprep.subr.mxu0 0.0
        %2272 = vmatpush2.msra.mxu0 0.0
        %2273 = vmatprep.subr.mxu0 0.0
        %2274 = vmatpush2.msra.mxu0 0.0
        %2275 = vmatprep.subr.mxu0 0.0
        %2276 = vmatpush2.msra.mxu0 0.0
        %2277 = vmatprep.subr.mxu0 0.0
        %2278 = vmatpush2.msra.mxu0 0.0
        %2279 = vmatprep.subr.mxu0 0.0
        %2280 = vmatpush2.msra.mxu0 0.0
        %2281 = vmatprep.subr.mxu0 0.0
        %2282 = vmatpush2.msra.mxu0 0.0
        %2283 = vmatprep.subr.mxu0 0.0
        %2284 = vmatpush2.msra.mxu0 0.0
        %2285 = vmatprep.subr.mxu0 0.0
        %2286 = vmatpush2.msra.mxu0 0.0
        %2287 = vmatprep.subr.mxu0 0.0
        %2288 = vmatpush2.msra.mxu0 0.0
        %2289 = vmatprep.subr.mxu0 0.0
        %2290 = vmatpush2.msra.mxu0 0.0
        %2291 = vmatprep.subr.mxu0 0.0
        %2292 = vmatpush2.msra.mxu0 0.0
        %2293 = vmatprep.subr.mxu0 0.0
        %2294 = vmatpush2.msra.mxu0 0.0
        %2295 = vmatprep.subr.mxu0 0.0
        %2296 = vmatpush2.msra.mxu0 0.0
        %2297 = vmatprep.subr.mxu0 0.0
        %2298 = vmatpush2.msra.mxu0 0.0
        %2299 = vmatprep.subr.mxu0 0.0
        %2300 = vmatpush2.msra.mxu0 0.0
        %2301 = vmatprep.mubr.f32.mxu0 0.0
        %2302 = vmatmul.mubr.f32.gmra.mxu0 %v582
        %v2303 = vpop.f32.mrf.mxu0
        %v2304 = vadd.f32 0.0, %v2303
        %v2305 = vpop.f32.mrf.mxu0
        %2306 = vmatprep.mubr.f32.mxu0 0.0
        %2307 = vmatmul.mubr.f32.gmra.mxu0 %v585
        %v2308 = vpop.f32.mrf.mxu0
        %v2309 = vadd.f32 0.0, %v2308
        %v2310 = vpop.f32.mrf.mxu0
        %2311 = vdwg.mxu0
        %2312 = vmatprep.subr.mxu0 0.0
        %2313 = vmatpush1.msra.mxu0 0.0
        %2314 = vmatprep.subr.mxu0 0.0
        %2315 = vmatpush1.msra.mxu0 0.0
        %2316 = vmatprep.subr.mxu0 0.0
        %2317 = vmatpush1.msra.mxu0 0.0
        %2318 = vmatprep.subr.mxu0 0.0
        %2319 = vmatpush1.msra.mxu0 0.0
        %2320 = vmatprep.subr.mxu0 0.0
        %2321 = vmatpush1.msra.mxu0 0.0
        %2322 = vmatprep.subr.mxu0 0.0
        %2323 = vmatpush1.msra.mxu0 0.0
        %2324 = vmatprep.subr.mxu0 0.0
        %2325 = vmatpush1.msra.mxu0 0.0
        %2326 = vmatprep.subr.mxu0 0.0
        %2327 = vmatpush1.msra.mxu0 0.0
        %2328 = vmatprep.subr.mxu0 0.0
        %2329 = vmatpush1.msra.mxu0 0.0
        %2330 = vmatprep.subr.mxu0 0.0
        %2331 = vmatpush1.msra.mxu0 0.0
        %2332 = vmatprep.subr.mxu0 0.0
        %2333 = vmatpush1.msra.mxu0 0.0
        %2334 = vmatprep.subr.mxu0 0.0
        %2335 = vmatpush1.msra.mxu0 0.0
        %2336 = vmatprep.subr.mxu0 0.0
        %2337 = vmatpush1.msra.mxu0 0.0
        %2338 = vmatprep.subr.mxu0 0.0
        %2339 = vmatpush1.msra.mxu0 0.0
        %2340 = vmatprep.subr.mxu0 0.0
        %2341 = vmatpush1.msra.mxu0 0.0
        %2342 = vmatprep.subr.mxu0 0.0
        %2343 = vmatpush1.msra.mxu0 %v536
        %2344 = vmatprep.subr.mxu0 0.0
        %2345 = vmatpush2.msra.mxu0 0.0
        %2346 = vmatprep.subr.mxu0 0.0
        %2347 = vmatpush2.msra.mxu0 0.0
        %2348 = vmatprep.subr.mxu0 0.0
        %2349 = vmatpush2.msra.mxu0 0.0
        %2350 = vmatprep.subr.mxu0 0.0
        %2351 = vmatpush2.msra.mxu0 0.0
        %2352 = vmatprep.subr.mxu0 0.0
        %2353 = vmatpush2.msra.mxu0 0.0
        %2354 = vmatprep.subr.mxu0 0.0
        %2355 = vmatpush2.msra.mxu0 0.0
        %2356 = vmatprep.subr.mxu0 0.0
        %2357 = vmatpush2.msra.mxu0 0.0
        %2358 = vmatprep.subr.mxu0 0.0
        %2359 = vmatpush2.msra.mxu0 0.0
        %2360 = vmatprep.subr.mxu0 0.0
        %2361 = vmatpush2.msra.mxu0 0.0
        %2362 = vmatprep.subr.mxu0 0.0
        %2363 = vmatpush2.msra.mxu0 0.0
        %2364 = vmatprep.subr.mxu0 0.0
        %2365 = vmatpush2.msra.mxu0 0.0
        %2366 = vmatprep.subr.mxu0 0.0
        %2367 = vmatpush2.msra.mxu0 0.0
        %2368 = vmatprep.subr.mxu0 0.0
        %2369 = vmatpush2.msra.mxu0 0.0
        %2370 = vmatprep.subr.mxu0 0.0
        %2371 = vmatpush2.msra.mxu0 0.0
        %2372 = vmatprep.subr.mxu0 0.0
        %2373 = vmatpush2.msra.mxu0 0.0
        %2374 = vmatprep.subr.mxu0 0.0
        %2375 = vmatpush2.msra.mxu0 0.0
        %2376 = vmatprep.mubr.f32.mxu0 0.0
        %2377 = vmatmul.mubr.f32.gmra.mxu0 %v582
        %v2378 = vpop.f32.mrf.mxu0
        %v2379 = vadd.f32 0.0, %v2378
        %v2380 = vpop.f32.mrf.mxu0
        %2381 = vmatprep.mubr.f32.mxu0 0.0
        %2382 = vmatmul.mubr.f32.gmra.mxu0 %v585
        %v2383 = vpop.f32.mrf.mxu0
        %v2384 = vadd.f32 0.0, %v2383
        %v2385 = vpop.f32.mrf.mxu0
        %2386 = vdwg.mxu0
        %2387 = vmatprep.subr.mxu0 0.0
        %2388 = vmatpush1.msra.mxu0 0.0
        %2389 = vmatprep.subr.mxu0 0.0
        %2390 = vmatpush1.msra.mxu0 0.0
        %2391 = vmatprep.subr.mxu0 0.0
        %2392 = vmatpush1.msra.mxu0 0.0
        %2393 = vmatprep.subr.mxu0 0.0
        %2394 = vmatpush1.msra.mxu0 0.0
        %2395 = vmatprep.subr.mxu0 0.0
        %2396 = vmatpush1.msra.mxu0 0.0
        %2397 = vmatprep.subr.mxu0 0.0
        %2398 = vmatpush1.msra.mxu0 0.0
        %2399 = vmatprep.subr.mxu0 0.0
        %2400 = vmatpush1.msra.mxu0 0.0
        %2401 = vmatprep.subr.mxu0 0.0
        %2402 = vmatpush1.msra.mxu0 0.0
        %2403 = vmatprep.subr.mxu0 0.0
        %2404 = vmatpush1.msra.mxu0 0.0
        %2405 = vmatprep.subr.mxu0 0.0
        %2406 = vmatpush1.msra.mxu0 0.0
        %2407 = vmatprep.subr.mxu0 0.0
        %2408 = vmatpush1.msra.mxu0 0.0
        %2409 = vmatprep.subr.mxu0 0.0
        %2410 = vmatpush1.msra.mxu0 0.0
        %2411 = vmatprep.subr.mxu0 0.0
        %2412 = vmatpush1.msra.mxu0 0.0
        %2413 = vmatprep.subr.mxu0 0.0
        %2414 = vmatpush1.msra.mxu0 0.0
        %2415 = vmatprep.subr.mxu0 0.0
        %2416 = vmatpush1.msra.mxu0 0.0
        %2417 = vmatprep.subr.mxu0 0.0
        %2418 = vmatpush1.msra.mxu0 %v541
        %2419 = vmatprep.subr.mxu0 0.0
        %2420 = vmatpush2.msra.mxu0 0.0
        %2421 = vmatprep.subr.mxu0 0.0
        %2422 = vmatpush2.msra.mxu0 0.0
        %2423 = vmatprep.subr.mxu0 0.0
        %2424 = vmatpush2.msra.mxu0 0.0
        %2425 = vmatprep.subr.mxu0 0.0
        %2426 = vmatpush2.msra.mxu0 0.0
        %2427 = vmatprep.subr.mxu0 0.0
        %2428 = vmatpush2.msra.mxu0 0.0
        %2429 = vmatprep.subr.mxu0 0.0
        %2430 = vmatpush2.msra.mxu0 0.0
        %2431 = vmatprep.subr.mxu0 0.0
        %2432 = vmatpush2.msra.mxu0 0.0
        %2433 = vmatprep.subr.mxu0 0.0
        %2434 = vmatpush2.msra.mxu0 0.0
        %2435 = vmatprep.subr.mxu0 0.0
        %2436 = vmatpush2.msra.mxu0 0.0
        %2437 = vmatprep.subr.mxu0 0.0
        %2438 = vmatpush2.msra.mxu0 0.0
        %2439 = vmatprep.subr.mxu0 0.0
        %2440 = vmatpush2.msra.mxu0 0.0
        %2441 = vmatprep.subr.mxu0 0.0
        %2442 = vmatpush2.msra.mxu0 0.0
        %2443 = vmatprep.subr.mxu0 0.0
        %2444 = vmatpush2.msra.mxu0 0.0
        %2445 = vmatprep.subr.mxu0 0.0
        %2446 = vmatpush2.msra.mxu0 0.0
        %2447 = vmatprep.subr.mxu0 0.0
        %2448 = vmatpush2.msra.mxu0 0.0
        %2449 = vmatprep.subr.mxu0 0.0
        %2450 = vmatpush2.msra.mxu0 0.0
        %2451 = vmatprep.mubr.f32.mxu0 0.0
        %2452 = vmatmul.mubr.f32.gmra.mxu0 %v582
        %v2453 = vpop.f32.mrf.mxu0
        %v2454 = vadd.f32 0.0, %v2453
        %v2455 = vpop.f32.mrf.mxu0
        %2456 = vmatprep.mubr.f32.mxu0 0.0
        %2457 = vmatmul.mubr.f32.gmra.mxu0 %v585
        %v2458 = vpop.f32.mrf.mxu0
        %v2459 = vadd.f32 0.0, %v2458
        %v2460 = vpop.f32.mrf.mxu0
        %2461 = vdwg.mxu0
        %2462 = vmatprep.subr.mxu0 0.0
        %2463 = vmatpush1.msra.mxu0 0.0
        %2464 = vmatprep.subr.mxu0 0.0
        %2465 = vmatpush1.msra.mxu0 0.0
        %2466 = vmatprep.subr.mxu0 0.0
        %2467 = vmatpush1.msra.mxu0 0.0
        %2468 = vmatprep.subr.mxu0 0.0
        %2469 = vmatpush1.msra.mxu0 0.0
        %2470 = vmatprep.subr.mxu0 0.0
        %2471 = vmatpush1.msra.mxu0 0.0
        %2472 = vmatprep.subr.mxu0 0.0
        %2473 = vmatpush1.msra.mxu0 0.0
        %2474 = vmatprep.subr.mxu0 0.0
        %2475 = vmatpush1.msra.mxu0 0.0
        %2476 = vmatprep.subr.mxu0 0.0
        %2477 = vmatpush1.msra.mxu0 0.0
        %2478 = vmatprep.subr.mxu0 0.0
        %2479 = vmatpush1.msra.mxu0 0.0
        %2480 = vmatprep.subr.mxu0 0.0
        %2481 = vmatpush1.msra.mxu0 0.0
        %2482 = vmatprep.subr.mxu0 0.0
        %2483 = vmatpush1.msra.mxu0 0.0
        %2484 = vmatprep.subr.mxu0 0.0
        %2485 = vmatpush1.msra.mxu0 0.0
        %2486 = vmatprep.subr.mxu0 0.0
        %2487 = vmatpush1.msra.mxu0 0.0
        %2488 = vmatprep.subr.mxu0 0.0
        %2489 = vmatpush1.msra.mxu0 0.0
        %2490 = vmatprep.subr.mxu0 0.0
        %2491 = vmatpush1.msra.mxu0 0.0
        %2492 = vmatprep.subr.mxu0 0.0
        %2493 = vmatpush1.msra.mxu0 %v546
        %2494 = vmatprep.subr.mxu0 0.0
        %2495 = vmatpush2.msra.mxu0 0.0
        %2496 = vmatprep.subr.mxu0 0.0
        %2497 = vmatpush2.msra.mxu0 0.0
        %2498 = vmatprep.subr.mxu0 0.0
        %2499 = vmatpush2.msra.mxu0 0.0
        %2500 = vmatprep.subr.mxu0 0.0
        %2501 = vmatpush2.msra.mxu0 0.0
        %2502 = vmatprep.subr.mxu0 0.0
        %2503 = vmatpush2.msra.mxu0 0.0
        %2504 = vmatprep.subr.mxu0 0.0
        %2505 = vmatpush2.msra.mxu0 0.0
        %2506 = vmatprep.subr.mxu0 0.0
        %2507 = vmatpush2.msra.mxu0 0.0
        %2508 = vmatprep.subr.mxu0 0.0
        %2509 = vmatpush2.msra.mxu0 0.0
        %2510 = vmatprep.subr.mxu0 0.0
        %2511 = vmatpush2.msra.mxu0 0.0
        %2512 = vmatprep.subr.mxu0 0.0
        %2513 = vmatpush2.msra.mxu0 0.0
        %2514 = vmatprep.subr.mxu0 0.0
        %2515 = vmatpush2.msra.mxu0 0.0
        %2516 = vmatprep.subr.mxu0 0.0
        %2517 = vmatpush2.msra.mxu0 0.0
        %2518 = vmatprep.subr.mxu0 0.0
        %2519 = vmatpush2.msra.mxu0 0.0
        %2520 = vmatprep.subr.mxu0 0.0
        %2521 = vmatpush2.msra.mxu0 0.0
        %2522 = vmatprep.subr.mxu0 0.0
        %2523 = vmatpush2.msra.mxu0 0.0
        %2524 = vmatprep.subr.mxu0 0.0
        %2525 = vmatpush2.msra.mxu0 0.0
        %2526 = vmatprep.mubr.f32.mxu0 0.0
        %2527 = vmatmul.mubr.f32.gmra.mxu0 %v582
        %v2528 = vpop.f32.mrf.mxu0
        %v2529 = vadd.f32 0.0, %v2528
        %v2530 = vpop.f32.mrf.mxu0
        %2531 = vmatprep.mubr.f32.mxu0 0.0
        %2532 = vmatmul.mubr.f32.gmra.mxu0 %v585
        %v2533 = vpop.f32.mrf.mxu0
        %v2534 = vadd.f32 0.0, %v2533
        %v2535 = vpop.f32.mrf.mxu0
        %2536 = vdwg.mxu0
        %2537 = vmatprep.subr.mxu0 0.0
        %2538 = vmatpush1.msra.mxu0 0.0
        %2539 = vmatprep.subr.mxu0 0.0
        %2540 = vmatpush1.msra.mxu0 0.0
        %2541 = vmatprep.subr.mxu0 0.0
        %2542 = vmatpush1.msra.mxu0 0.0
        %2543 = vmatprep.subr.mxu0 0.0
        %2544 = vmatpush1.msra.mxu0 0.0
        %2545 = vmatprep.subr.mxu0 0.0
        %2546 = vmatpush1.msra.mxu0 0.0
        %2547 = vmatprep.subr.mxu0 0.0
        %2548 = vmatpush1.msra.mxu0 0.0
        %2549 = vmatprep.subr.mxu0 0.0
        %2550 = vmatpush1.msra.mxu0 0.0
        %2551 = vmatprep.subr.mxu0 0.0
        %2552 = vmatpush1.msra.mxu0 0.0
        %2553 = vmatprep.subr.mxu0 0.0
        %2554 = vmatpush1.msra.mxu0 0.0
        %2555 = vmatprep.subr.mxu0 0.0
        %2556 = vmatpush1.msra.mxu0 0.0
        %2557 = vmatprep.subr.mxu0 0.0
        %2558 = vmatpush1.msra.mxu0 0.0
        %2559 = vmatprep.subr.mxu0 0.0
        %2560 = vmatpush1.msra.mxu0 0.0
        %2561 = vmatprep.subr.mxu0 0.0
        %2562 = vmatpush1.msra.mxu0 0.0
        %2563 = vmatprep.subr.mxu0 0.0
        %2564 = vmatpush1.msra.mxu0 0.0
        %2565 = vmatprep.subr.mxu0 0.0
        %2566 = vmatpush1.msra.mxu0 0.0
        %2567 = vmatprep.subr.mxu0 0.0
        %2568 = vmatpush1.msra.mxu0 %v551
        %2569 = vmatprep.subr.mxu0 0.0
        %2570 = vmatpush2.msra.mxu0 0.0
        %2571 = vmatprep.subr.mxu0 0.0
        %2572 = vmatpush2.msra.mxu0 0.0
        %2573 = vmatprep.subr.mxu0 0.0
        %2574 = vmatpush2.msra.mxu0 0.0
        %2575 = vmatprep.subr.mxu0 0.0
        %2576 = vmatpush2.msra.mxu0 0.0
        %2577 = vmatprep.subr.mxu0 0.0
        %2578 = vmatpush2.msra.mxu0 0.0
        %2579 = vmatprep.subr.mxu0 0.0
        %2580 = vmatpush2.msra.mxu0 0.0
        %2581 = vmatprep.subr.mxu0 0.0
        %2582 = vmatpush2.msra.mxu0 0.0
        %2583 = vmatprep.subr.mxu0 0.0
        %2584 = vmatpush2.msra.mxu0 0.0
        %2585 = vmatprep.subr.mxu0 0.0
        %2586 = vmatpush2.msra.mxu0 0.0
        %2587 = vmatprep.subr.mxu0 0.0
        %2588 = vmatpush2.msra.mxu0 0.0
        %2589 = vmatprep.subr.mxu0 0.0
        %2590 = vmatpush2.msra.mxu0 0.0
        %2591 = vmatprep.subr.mxu0 0.0
        %2592 = vmatpush2.msra.mxu0 0.0
        %2593 = vmatprep.subr.mxu0 0.0
        %2594 = vmatpush2.msra.mxu0 0.0
        %2595 = vmatprep.subr.mxu0 0.0
        %2596 = vmatpush2.msra.mxu0 0.0
        %2597 = vmatprep.subr.mxu0 0.0
        %2598 = vmatpush2.msra.mxu0 0.0
        %2599 = vmatprep.subr.mxu0 0.0
        %2600 = vmatpush2.msra.mxu0 0.0
        %2601 = vmatprep.mubr.f32.mxu0 0.0
        %2602 = vmatmul.mubr.f32.gmra.mxu0 %v582
        %v2603 = vpop.f32.mrf.mxu0
        %v2604 = vadd.f32 0.0, %v2603
        %v2605 = vpop.f32.mrf.mxu0
        %2606 = vmatprep.mubr.f32.mxu0 0.0
        %2607 = vmatmul.mubr.f32.gmra.mxu0 %v585
        %v2608 = vpop.f32.mrf.mxu0
        %v2609 = vadd.f32 0.0, %v2608
        %v2610 = vpop.f32.mrf.mxu0
        %2611 = vdwg.mxu0
        %2612 = vmatprep.subr.mxu0 0.0
        %2613 = vmatpush1.msra.mxu0 0.0
        %2614 = vmatprep.subr.mxu0 0.0
        %2615 = vmatpush1.msra.mxu0 0.0
        %2616 = vmatprep.subr.mxu0 0.0
        %2617 = vmatpush1.msra.mxu0 0.0
        %2618 = vmatprep.subr.mxu0 0.0
        %2619 = vmatpush1.msra.mxu0 0.0
        %2620 = vmatprep.subr.mxu0 0.0
        %2621 = vmatpush1.msra.mxu0 0.0
        %2622 = vmatprep.subr.mxu0 0.0
        %2623 = vmatpush1.msra.mxu0 0.0
        %2624 = vmatprep.subr.mxu0 0.0
        %2625 = vmatpush1.msra.mxu0 0.0
        %2626 = vmatprep.subr.mxu0 0.0
        %2627 = vmatpush1.msra.mxu0 0.0
        %2628 = vmatprep.subr.mxu0 0.0
        %2629 = vmatpush1.msra.mxu0 0.0
        %2630 = vmatprep.subr.mxu0 0.0
        %2631 = vmatpush1.msra.mxu0 0.0
        %2632 = vmatprep.subr.mxu0 0.0
        %2633 = vmatpush1.msra.mxu0 0.0
        %2634 = vmatprep.subr.mxu0 0.0
        %2635 = vmatpush1.msra.mxu0 0.0
        %2636 = vmatprep.subr.mxu0 0.0
        %2637 = vmatpush1.msra.mxu0 0.0
        %2638 = vmatprep.subr.mxu0 0.0
        %2639 = vmatpush1.msra.mxu0 0.0
        %2640 = vmatprep.subr.mxu0 0.0
        %2641 = vmatpush1.msra.mxu0 0.0
        %2642 = vmatprep.subr.mxu0 0.0
        %2643 = vmatpush1.msra.mxu0 %v556
        %2644 = vmatprep.subr.mxu0 0.0
        %2645 = vmatpush2.msra.mxu0 0.0
        %2646 = vmatprep.subr.mxu0 0.0
        %2647 = vmatpush2.msra.mxu0 0.0
        %2648 = vmatprep.subr.mxu0 0.0
        %2649 = vmatpush2.msra.mxu0 0.0
        %2650 = vmatprep.subr.mxu0 0.0
        %2651 = vmatpush2.msra.mxu0 0.0
        %2652 = vmatprep.subr.mxu0 0.0
        %2653 = vmatpush2.msra.mxu0 0.0
        %2654 = vmatprep.subr.mxu0 0.0
        %2655 = vmatpush2.msra.mxu0 0.0
        %2656 = vmatprep.subr.mxu0 0.0
        %2657 = vmatpush2.msra.mxu0 0.0
        %2658 = vmatprep.subr.mxu0 0.0
        %2659 = vmatpush2.msra.mxu0 0.0
        %2660 = vmatprep.subr.mxu0 0.0
        %2661 = vmatpush2.msra.mxu0 0.0
        %2662 = vmatprep.subr.mxu0 0.0
        %2663 = vmatpush2.msra.mxu0 0.0
        %2664 = vmatprep.subr.mxu0 0.0
        %2665 = vmatpush2.msra.mxu0 0.0
        %2666 = vmatprep.subr.mxu0 0.0
        %2667 = vmatpush2.msra.mxu0 0.0
        %2668 = vmatprep.subr.mxu0 0.0
        %2669 = vmatpush2.msra.mxu0 0.0
        %2670 = vmatprep.subr.mxu0 0.0
        %2671 = vmatpush2.msra.mxu0 0.0
        %2672 = vmatprep.subr.mxu0 0.0
        %2673 = vmatpush2.msra.mxu0 0.0
        %2674 = vmatprep.subr.mxu0 0.0
        %2675 = vmatpush2.msra.mxu0 0.0
        %2676 = vmatprep.mubr.f32.mxu0 0.0
        %2677 = vmatmul.mubr.f32.gmra.mxu0 %v582
        %v2678 = vpop.f32.mrf.mxu0
        %v2679 = vadd.f32 0.0, %v2678
        %v2680 = vpop.f32.mrf.mxu0
        %2681 = vmatprep.mubr.f32.mxu0 0.0
        %2682 = vmatmul.mubr.f32.gmra.mxu0 %v585
        %v2683 = vpop.f32.mrf.mxu0
        %v2684 = vadd.f32 0.0, %v2683
        %v2685 = vpop.f32.mrf.mxu0
        %2686 = vdwg.mxu0
        %2687 = vmatprep.subr.mxu0 0.0
        %2688 = vmatpush1.msra.mxu0 0.0
        %2689 = vmatprep.subr.mxu0 0.0
        %2690 = vmatpush1.msra.mxu0 0.0
        %2691 = vmatprep.subr.mxu0 0.0
        %2692 = vmatpush1.msra.mxu0 0.0
        %2693 = vmatprep.subr.mxu0 0.0
        %2694 = vmatpush1.msra.mxu0 0.0
        %2695 = vmatprep.subr.mxu0 0.0
        %2696 = vmatpush1.msra.mxu0 0.0
        %2697 = vmatprep.subr.mxu0 0.0
        %2698 = vmatpush1.msra.mxu0 0.0
        %2699 = vmatprep.subr.mxu0 0.0
        %2700 = vmatpush1.msra.mxu0 0.0
        %2701 = vmatprep.subr.mxu0 0.0
        %2702 = vmatpush1.msra.mxu0 0.0
        %2703 = vmatprep.subr.mxu0 0.0
        %2704 = vmatpush1.msra.mxu0 0.0
        %2705 = vmatprep.subr.mxu0 0.0
        %2706 = vmatpush1.msra.mxu0 0.0
        %2707 = vmatprep.subr.mxu0 0.0
        %2708 = vmatpush1.msra.mxu0 0.0
        %2709 = vmatprep.subr.mxu0 0.0
        %2710 = vmatpush1.msra.mxu0 0.0
        %2711 = vmatprep.subr.mxu0 0.0
        %2712 = vmatpush1.msra.mxu0 0.0
        %2713 = vmatprep.subr.mxu0 0.0
        %2714 = vmatpush1.msra.mxu0 0.0
        %2715 = vmatprep.subr.mxu0 0.0
        %2716 = vmatpush1.msra.mxu0 0.0
        %2717 = vmatprep.subr.mxu0 0.0
        %2718 = vmatpush1.msra.mxu0 %v561
        %2719 = vmatprep.subr.mxu0 0.0
        %2720 = vmatpush2.msra.mxu0 0.0
        %2721 = vmatprep.subr.mxu0 0.0
        %2722 = vmatpush2.msra.mxu0 0.0
        %2723 = vmatprep.subr.mxu0 0.0
        %2724 = vmatpush2.msra.mxu0 0.0
        %2725 = vmatprep.subr.mxu0 0.0
        %2726 = vmatpush2.msra.mxu0 0.0
        %2727 = vmatprep.subr.mxu0 0.0
        %2728 = vmatpush2.msra.mxu0 0.0
        %2729 = vmatprep.subr.mxu0 0.0
        %2730 = vmatpush2.msra.mxu0 0.0
        %2731 = vmatprep.subr.mxu0 0.0
        %2732 = vmatpush2.msra.mxu0 0.0
        %2733 = vmatprep.subr.mxu0 0.0
        %2734 = vmatpush2.msra.mxu0 0.0
        %2735 = vmatprep.subr.mxu0 0.0
        %2736 = vmatpush2.msra.mxu0 0.0
        %2737 = vmatprep.subr.mxu0 0.0
        %2738 = vmatpush2.msra.mxu0 0.0
        %2739 = vmatprep.subr.mxu0 0.0
        %2740 = vmatpush2.msra.mxu0 0.0
        %2741 = vmatprep.subr.mxu0 0.0
        %2742 = vmatpush2.msra.mxu0 0.0
        %2743 = vmatprep.subr.mxu0 0.0
        %2744 = vmatpush2.msra.mxu0 0.0
        %2745 = vmatprep.subr.mxu0 0.0
        %2746 = vmatpush2.msra.mxu0 0.0
        %2747 = vmatprep.subr.mxu0 0.0
        %2748 = vmatpush2.msra.mxu0 0.0
        %2749 = vmatprep.subr.mxu0 0.0
        %2750 = vmatpush2.msra.mxu0 0.0
        %2751 = vmatprep.mubr.f32.mxu0 0.0
        %2752 = vmatmul.mubr.f32.gmra.mxu0 %v582
        %v2753 = vpop.f32.mrf.mxu0
        %v2754 = vadd.f32 0.0, %v2753
        %v2755 = vpop.f32.mrf.mxu0
        %2756 = vmatprep.mubr.f32.mxu0 0.0
        %2757 = vmatmul.mubr.f32.gmra.mxu0 %v585
        %v2758 = vpop.f32.mrf.mxu0
        %v2759 = vadd.f32 0.0, %v2758
        %v2760 = vpop.f32.mrf.mxu0
        %2761 = vdwg.mxu0
        %2762 = vmatprep.subr.mxu0 0.0
        %2763 = vmatpush1.msra.mxu0 0.0
        %2764 = vmatprep.subr.mxu0 0.0
        %2765 = vmatpush1.msra.mxu0 0.0
        %2766 = vmatprep.subr.mxu0 0.0
        %2767 = vmatpush1.msra.mxu0 0.0
        %2768 = vmatprep.subr.mxu0 0.0
        %2769 = vmatpush1.msra.mxu0 0.0
        %2770 = vmatprep.subr.mxu0 0.0
        %2771 = vmatpush1.msra.mxu0 0.0
        %2772 = vmatprep.subr.mxu0 0.0
        %2773 = vmatpush1.msra.mxu0 0.0
        %2774 = vmatprep.subr.mxu0 0.0
        %2775 = vmatpush1.msra.mxu0 0.0
        %2776 = vmatprep.subr.mxu0 0.0
        %2777 = vmatpush1.msra.mxu0 0.0
        %2778 = vmatprep.subr.mxu0 0.0
        %2779 = vmatpush1.msra.mxu0 0.0
        %2780 = vmatprep.subr.mxu0 0.0
        %2781 = vmatpush1.msra.mxu0 0.0
        %2782 = vmatprep.subr.mxu0 0.0
        %2783 = vmatpush1.msra.mxu0 0.0
        %2784 = vmatprep.subr.mxu0 0.0
        %2785 = vmatpush1.msra.mxu0 0.0
        %2786 = vmatprep.subr.mxu0 0.0
        %2787 = vmatpush1.msra.mxu0 0.0
        %2788 = vmatprep.subr.mxu0 0.0
        %2789 = vmatpush1.msra.mxu0 0.0
        %2790 = vmatprep.subr.mxu0 0.0
        %2791 = vmatpush1.msra.mxu0 0.0
        %2792 = vmatprep.subr.mxu0 0.0
        %2793 = vmatpush1.msra.mxu0 %v566
        %2794 = vmatprep.subr.mxu0 0.0
        %2795 = vmatpush2.msra.mxu0 0.0
        %2796 = vmatprep.subr.mxu0 0.0
        %2797 = vmatpush2.msra.mxu0 0.0
        %2798 = vmatprep.subr.mxu0 0.0
        %2799 = vmatpush2.msra.mxu0 0.0
        %2800 = vmatprep.subr.mxu0 0.0
        %2801 = vmatpush2.msra.mxu0 0.0
        %2802 = vmatprep.subr.mxu0 0.0
        %2803 = vmatpush2.msra.mxu0 0.0
        %2804 = vmatprep.subr.mxu0 0.0
        %2805 = vmatpush2.msra.mxu0 0.0
        %2806 = vmatprep.subr.mxu0 0.0
        %2807 = vmatpush2.msra.mxu0 0.0
        %2808 = vmatprep.subr.mxu0 0.0
        %2809 = vmatpush2.msra.mxu0 0.0
        %2810 = vmatprep.subr.mxu0 0.0
        %2811 = vmatpush2.msra.mxu0 0.0
        %2812 = vmatprep.subr.mxu0 0.0
        %2813 = vmatpush2.msra.mxu0 0.0
        %2814 = vmatprep.subr.mxu0 0.0
        %2815 = vmatpush2.msra.mxu0 0.0
        %2816 = vmatprep.subr.mxu0 0.0
        %2817 = vmatpush2.msra.mxu0 0.0
        %2818 = vmatprep.subr.mxu0 0.0
        %2819 = vmatpush2.msra.mxu0 0.0
        %2820 = vmatprep.subr.mxu0 0.0
        %2821 = vmatpush2.msra.mxu0 0.0
        %2822 = vmatprep.subr.mxu0 0.0
        %2823 = vmatpush2.msra.mxu0 0.0
        %2824 = vmatprep.subr.mxu0 0.0
        %2825 = vmatpush2.msra.mxu0 0.0
        %2826 = vmatprep.mubr.f32.mxu0 0.0
        %2827 = vmatmul.mubr.f32.gmra.mxu0 %v582
        %v2828 = vpop.f32.mrf.mxu0
        %v2829 = vadd.f32 0.0, %v2828
        %v2830 = vpop.f32.mrf.mxu0
        %2831 = vmatprep.mubr.f32.mxu0 0.0
        %2832 = vmatmul.mubr.f32.gmra.mxu0 %v585
        %v2833 = vpop.f32.mrf.mxu0
        %v2834 = vadd.f32 0.0, %v2833
        %v2835 = vpop.f32.mrf.mxu0
        %2836 = vdwg.mxu0
        %2837 = vmatprep.subr.mxu0 0.0
        %2838 = vmatpush1.msra.mxu0 0.0
        %2839 = vmatprep.subr.mxu0 0.0
        %2840 = vmatpush1.msra.mxu0 0.0
        %2841 = vmatprep.subr.mxu0 0.0
        %2842 = vmatpush1.msra.mxu0 0.0
        %2843 = vmatprep.subr.mxu0 0.0
        %2844 = vmatpush1.msra.mxu0 0.0
        %2845 = vmatprep.subr.mxu0 0.0
        %2846 = vmatpush1.msra.mxu0 0.0
        %2847 = vmatprep.subr.mxu0 0.0
        %2848 = vmatpush1.msra.mxu0 0.0
        %2849 = vmatprep.subr.mxu0 0.0
        %2850 = vmatpush1.msra.mxu0 0.0
        %2851 = vmatprep.subr.mxu0 0.0
        %2852 = vmatpush1.msra.mxu0 0.0
        %2853 = vmatprep.subr.mxu0 0.0
        %2854 = vmatpush1.msra.mxu0 0.0
        %2855 = vmatprep.subr.mxu0 0.0
        %2856 = vmatpush1.msra.mxu0 0.0
        %2857 = vmatprep.subr.mxu0 0.0
        %2858 = vmatpush1.msra.mxu0 0.0
        %2859 = vmatprep.subr.mxu0 0.0
        %2860 = vmatpush1.msra.mxu0 0.0
        %2861 = vmatprep.subr.mxu0 0.0
        %2862 = vmatpush1.msra.mxu0 0.0
        %2863 = vmatprep.subr.mxu0 0.0
        %2864 = vmatpush1.msra.mxu0 0.0
        %2865 = vmatprep.subr.mxu0 0.0
        %2866 = vmatpush1.msra.mxu0 0.0
        %2867 = vmatprep.subr.mxu0 0.0
        %2868 = vmatpush1.msra.mxu0 %v571
        %2869 = vmatprep.subr.mxu0 0.0
        %2870 = vmatpush2.msra.mxu0 0.0
        %2871 = vmatprep.subr.mxu0 0.0
        %2872 = vmatpush2.msra.mxu0 0.0
        %2873 = vmatprep.subr.mxu0 0.0
        %2874 = vmatpush2.msra.mxu0 0.0
        %2875 = vmatprep.subr.mxu0 0.0
        %2876 = vmatpush2.msra.mxu0 0.0
        %2877 = vmatprep.subr.mxu0 0.0
        %2878 = vmatpush2.msra.mxu0 0.0
        %2879 = vmatprep.subr.mxu0 0.0
        %2880 = vmatpush2.msra.mxu0 0.0
        %2881 = vmatprep.subr.mxu0 0.0
        %2882 = vmatpush2.msra.mxu0 0.0
        %2883 = vmatprep.subr.mxu0 0.0
        %2884 = vmatpush2.msra.mxu0 0.0
        %2885 = vmatprep.subr.mxu0 0.0
        %2886 = vmatpush2.msra.mxu0 0.0
        %2887 = vmatprep.subr.mxu0 0.0
        %2888 = vmatpush2.msra.mxu0 0.0
        %2889 = vmatprep.subr.mxu0 0.0
        %2890 = vmatpush2.msra.mxu0 0.0
        %2891 = vmatprep.subr.mxu0 0.0
        %2892 = vmatpush2.msra.mxu0 0.0
        %2893 = vmatprep.subr.mxu0 0.0
        %2894 = vmatpush2.msra.mxu0 0.0
        %2895 = vmatprep.subr.mxu0 0.0
        %2896 = vmatpush2.msra.mxu0 0.0
        %2897 = vmatprep.subr.mxu0 0.0
        %2898 = vmatpush2.msra.mxu0 0.0
        %2899 = vmatprep.subr.mxu0 0.0
        %2900 = vmatpush2.msra.mxu0 0.0
        %2901 = vmatprep.mubr.f32.mxu0 0.0
        %2902 = vmatmul.mubr.f32.gmra.mxu0 %v582
        %v2903 = vpop.f32.mrf.mxu0
        %v2904 = vadd.f32 0.0, %v2903
        %v2905 = vpop.f32.mrf.mxu0
        %2906 = vmatprep.mubr.f32.mxu0 0.0
        %2907 = vmatmul.mubr.f32.gmra.mxu0 %v585
        %v2908 = vpop.f32.mrf.mxu0
        %v2909 = vadd.f32 0.0, %v2908
        %v2910 = vpop.f32.mrf.mxu0
        %2911 = vdwg.mxu0
        %2912 = vmatprep.subr.mxu0 0.0
        %2913 = vmatpush1.msra.mxu0 0.0
        %2914 = vmatprep.subr.mxu0 0.0
        %2915 = vmatpush1.msra.mxu0 0.0
        %2916 = vmatprep.subr.mxu0 0.0
        %2917 = vmatpush1.msra.mxu0 0.0
        %2918 = vmatprep.subr.mxu0 0.0
        %2919 = vmatpush1.msra.mxu0 0.0
        %2920 = vmatprep.subr.mxu0 0.0
        %2921 = vmatpush1.msra.mxu0 0.0
        %2922 = vmatprep.subr.mxu0 0.0
        %2923 = vmatpush1.msra.mxu0 0.0
        %2924 = vmatprep.subr.mxu0 0.0
        %2925 = vmatpush1.msra.mxu0 0.0
        %2926 = vmatprep.subr.mxu0 0.0
        %2927 = vmatpush1.msra.mxu0 0.0
        %2928 = vmatprep.subr.mxu0 0.0
        %2929 = vmatpush1.msra.mxu0 0.0
        %2930 = vmatprep.subr.mxu0 0.0
        %2931 = vmatpush1.msra.mxu0 0.0
        %2932 = vmatprep.subr.mxu0 0.0
        %2933 = vmatpush1.msra.mxu0 0.0
        %2934 = vmatprep.subr.mxu0 0.0
        %2935 = vmatpush1.msra.mxu0 0.0
        %2936 = vmatprep.subr.mxu0 0.0
        %2937 = vmatpush1.msra.mxu0 0.0
        %2938 = vmatprep.subr.mxu0 0.0
        %2939 = vmatpush1.msra.mxu0 0.0
        %2940 = vmatprep.subr.mxu0 0.0
        %2941 = vmatpush1.msra.mxu0 0.0
        %2942 = vmatprep.subr.mxu0 0.0
        %2943 = vmatpush1.msra.mxu0 %v576
        %2944 = vmatprep.subr.mxu0 0.0
        %2945 = vmatpush2.msra.mxu0 0.0
        %2946 = vmatprep.subr.mxu0 0.0
        %2947 = vmatpush2.msra.mxu0 0.0
        %2948 = vmatprep.subr.mxu0 0.0
        %2949 = vmatpush2.msra.mxu0 0.0
        %2950 = vmatprep.subr.mxu0 0.0
        %2951 = vmatpush2.msra.mxu0 0.0
        %2952 = vmatprep.subr.mxu0 0.0
        %2953 = vmatpush2.msra.mxu0 0.0
        %2954 = vmatprep.subr.mxu0 0.0
        %2955 = vmatpush2.msra.mxu0 0.0
        %2956 = vmatprep.subr.mxu0 0.0
        %2957 = vmatpush2.msra.mxu0 0.0
        %2958 = vmatprep.subr.mxu0 0.0
        %2959 = vmatpush2.msra.mxu0 0.0
        %2960 = vmatprep.subr.mxu0 0.0
        %2961 = vmatpush2.msra.mxu0 0.0
        %2962 = vmatprep.subr.mxu0 0.0
        %2963 = vmatpush2.msra.mxu0 0.0
        %2964 = vmatprep.subr.mxu0 0.0
        %2965 = vmatpush2.msra.mxu0 0.0
        %2966 = vmatprep.subr.mxu0 0.0
        %2967 = vmatpush2.msra.mxu0 0.0
        %2968 = vmatprep.subr.mxu0 0.0
        %2969 = vmatpush2.msra.mxu0 0.0
        %2970 = vmatprep.subr.mxu0 0.0
        %2971 = vmatpush2.msra.mxu0 0.0
        %2972 = vmatprep.subr.mxu0 0.0
        %2973 = vmatpush2.msra.mxu0 0.0
        %2974 = vmatprep.subr.mxu0 0.0
        %2975 = vmatpush2.msra.mxu0 0.0
        %2976 = vmatprep.mubr.f32.mxu0 0.0
        %2977 = vmatmul.mubr.f32.gmra.mxu0 %v582
        %v2978 = vpop.f32.mrf.mxu0
        %v2979 = vadd.f32 0.0, %v2978
        %v2980 = vpop.f32.mrf.mxu0
        %2981 = vmatprep.mubr.f32.mxu0 0.0
        %2982 = vmatmul.mubr.f32.gmra.mxu0 %v585
        %v2983 = vpop.f32.mrf.mxu0
        %v2984 = vadd.f32 0.0, %v2983
        %v2985 = vpop.f32.mrf.mxu0
        %2986 = vdwg.mxu0
        %v2987 = vcombine.low %v654, %v804
        %v2988 = vcombine.high %v654, %v804
        %v2990 = vunpack.c.l.s4 1983009808
        %v2991 = vunpack.c.0.s8 %v2990
        %v2992 = vlaneseq
        %v2993 = vshrl.u32 %v2992, 7
        %v2994 = vsub.s32 %v2991, %v2993
        %v2995 = vrot.slane %v2987, %v2994
        %v2997 = vunpack.c.l.s4 1983009808
        %v2998 = vunpack.c.0.s8 %v2997
        %v2999 = vlaneseq
        %v3000 = vshrl.u32 %v2999, 7
        %v3001 = vsub.s32 %v2998, %v3000
        %v3002 = vrot.slane %v2988, %v3001
        %v3003 = vcombine.low %v729, %v879
        %v3004 = vcombine.high %v729, %v879
        %v3006 = vunpack.c.l.s4 1983009808
        %v3007 = vunpack.c.0.s8 %v3006
        %v3008 = vlaneseq
        %v3009 = vshrl.u32 %v3008, 7
        %v3010 = vsub.s32 %v3007, %v3009
        %v3011 = vrot.slane %v3003, %v3010
        %v3013 = vunpack.c.l.s4 1983009808
        %v3014 = vunpack.c.0.s8 %v3013
        %v3015 = vlaneseq
        %v3016 = vshrl.u32 %v3015, 7
        %v3017 = vsub.s32 %v3014, %v3016
        %v3018 = vrot.slane %v3004, %v3017
        %v3019 = vcombine.low %v954, %v1104
        %v3020 = vcombine.high %v954, %v1104
        %v3022 = vunpack.c.l.s4 1983009808
        %v3023 = vunpack.c.0.s8 %v3022
        %v3024 = vlaneseq
        %v3025 = vshrl.u32 %v3024, 7
        %v3026 = vsub.s32 %v3023, %v3025
        %v3027 = vrot.slane %v3019, %v3026
        %v3029 = vunpack.c.l.s4 1983009808
        %v3030 = vunpack.c.0.s8 %v3029
        %v3031 = vlaneseq
        %v3032 = vshrl.u32 %v3031, 7
        %v3033 = vsub.s32 %v3030, %v3032
        %v3034 = vrot.slane %v3020, %v3033
        %v3035 = vcombine.low %v1029, %v1179
        %v3036 = vcombine.high %v1029, %v1179
        %v3038 = vunpack.c.l.s4 1983009808
        %v3039 = vunpack.c.0.s8 %v3038
        %v3040 = vlaneseq
        %v3041 = vshrl.u32 %v3040, 7
        %v3042 = vsub.s32 %v3039, %v3041
        %v3043 = vrot.slane %v3035, %v3042
        %v3045 = vunpack.c.l.s4 1983009808
        %v3046 = vunpack.c.0.s8 %v3045
        %v3047 = vlaneseq
        %v3048 = vshrl.u32 %v3047, 7
        %v3049 = vsub.s32 %v3046, %v3048
        %v3050 = vrot.slane %v3036, %v3049
        %v3051 = vcombine.low %v2995, %v3011
        %v3052 = vcombine.high %v2995, %v3011
        %v3054 = vunpack.c.l.s4 1934713408
        %v3055 = vunpack.c.0.s8 %v3054
        %v3056 = vlaneseq
        %v3057 = vshrl.u32 %v3056, 7
        %v3058 = vsub.s32 %v3055, %v3057
        %v3059 = vrot.slane %v3051, %v3058
        %v3061 = vunpack.c.l.s4 1934713408
        %v3062 = vunpack.c.0.s8 %v3061
        %v3063 = vlaneseq
        %v3064 = vshrl.u32 %v3063, 7
        %v3065 = vsub.s32 %v3062, %v3064
        %v3066 = vrot.slane %v3052, %v3065
        %v3067 = vcombine.low %v3002, %v3018
        %v3068 = vcombine.high %v3002, %v3018
        %v3070 = vunpack.c.l.s4 1934713408
        %v3071 = vunpack.c.0.s8 %v3070
        %v3072 = vlaneseq
        %v3073 = vshrl.u32 %v3072, 7
        %v3074 = vsub.s32 %v3071, %v3073
        %v3075 = vrot.slane %v3067, %v3074
        %v3077 = vunpack.c.l.s4 1934713408
        %v3078 = vunpack.c.0.s8 %v3077
        %v3079 = vlaneseq
        %v3080 = vshrl.u32 %v3079, 7
        %v3081 = vsub.s32 %v3078, %v3080
        %v3082 = vrot.slane %v3068, %v3081
        %v3083 = vcombine.low %v3027, %v3043
        %v3084 = vcombine.high %v3027, %v3043
        %v3086 = vunpack.c.l.s4 1934713408
        %v3087 = vunpack.c.0.s8 %v3086
        %v3088 = vlaneseq
        %v3089 = vshrl.u32 %v3088, 7
        %v3090 = vsub.s32 %v3087, %v3089
        %v3091 = vrot.slane %v3083, %v3090
        %v3093 = vunpack.c.l.s4 1934713408
        %v3094 = vunpack.c.0.s8 %v3093
        %v3095 = vlaneseq
        %v3096 = vshrl.u32 %v3095, 7
        %v3097 = vsub.s32 %v3094, %v3096
        %v3098 = vrot.slane %v3084, %v3097
        %v3099 = vcombine.low %v3034, %v3050
        %v3100 = vcombine.high %v3034, %v3050
        %v3102 = vunpack.c.l.s4 1934713408
        %v3103 = vunpack.c.0.s8 %v3102
        %v3104 = vlaneseq
        %v3105 = vshrl.u32 %v3104, 7
        %v3106 = vsub.s32 %v3103, %v3105
        %v3107 = vrot.slane %v3099, %v3106
        %v3109 = vunpack.c.l.s4 1934713408
        %v3110 = vunpack.c.0.s8 %v3109
        %v3111 = vlaneseq
        %v3112 = vshrl.u32 %v3111, 7
        %v3113 = vsub.s32 %v3110, %v3112
        %v3114 = vrot.slane %v3100, %v3113
        %v3115 = vcombine.low %v3059, %v3091
        %v3116 = vcombine.high %v3059, %v3091
        %v3117 = vcombine.low %v3066, %v3098
        %v3118 = vcombine.high %v3066, %v3098
        %v3119 = vcombine.low %v3075, %v3107
        %v3120 = vcombine.high %v3075, %v3107
        %v3121 = vcombine.low %v3082, %v3114
        %v3122 = vcombine.high %v3082, %v3114
        %v3123 = vcombine.low %v659, %v809
        %v3124 = vcombine.high %v659, %v809
        %v3126 = vunpack.c.l.s4 1983009808
        %v3127 = vunpack.c.0.s8 %v3126
        %v3128 = vlaneseq
        %v3129 = vshrl.u32 %v3128, 7
        %v3130 = vsub.s32 %v3127, %v3129
        %v3131 = vrot.slane %v3123, %v3130
        %v3133 = vunpack.c.l.s4 1983009808
        %v3134 = vunpack.c.0.s8 %v3133
        %v3135 = vlaneseq
        %v3136 = vshrl.u32 %v3135, 7
        %v3137 = vsub.s32 %v3134, %v3136
        %v3138 = vrot.slane %v3124, %v3137
        %v3139 = vcombine.low %v734, %v884
        %v3140 = vcombine.high %v734, %v884
        %v3142 = vunpack.c.l.s4 1983009808
        %v3143 = vunpack.c.0.s8 %v3142
        %v3144 = vlaneseq
        %v3145 = vshrl.u32 %v3144, 7
        %v3146 = vsub.s32 %v3143, %v3145
        %v3147 = vrot.slane %v3139, %v3146
        %v3149 = vunpack.c.l.s4 1983009808
        %v3150 = vunpack.c.0.s8 %v3149
        %v3151 = vlaneseq
        %v3152 = vshrl.u32 %v3151, 7
        %v3153 = vsub.s32 %v3150, %v3152
        %v3154 = vrot.slane %v3140, %v3153
        %v3155 = vcombine.low %v959, %v1109
        %v3156 = vcombine.high %v959, %v1109
        %v3158 = vunpack.c.l.s4 1983009808
        %v3159 = vunpack.c.0.s8 %v3158
        %v3160 = vlaneseq
        %v3161 = vshrl.u32 %v3160, 7
        %v3162 = vsub.s32 %v3159, %v3161
        %v3163 = vrot.slane %v3155, %v3162
        %v3165 = vunpack.c.l.s4 1983009808
        %v3166 = vunpack.c.0.s8 %v3165
        %v3167 = vlaneseq
        %v3168 = vshrl.u32 %v3167, 7
        %v3169 = vsub.s32 %v3166, %v3168
        %v3170 = vrot.slane %v3156, %v3169
        %v3171 = vcombine.low %v1034, %v1184
        %v3172 = vcombine.high %v1034, %v1184
        %v3174 = vunpack.c.l.s4 1983009808
        %v3175 = vunpack.c.0.s8 %v3174
        %v3176 = vlaneseq
        %v3177 = vshrl.u32 %v3176, 7
        %v3178 = vsub.s32 %v3175, %v3177
        %v3179 = vrot.slane %v3171, %v3178
        %v3181 = vunpack.c.l.s4 1983009808
        %v3182 = vunpack.c.0.s8 %v3181
        %v3183 = vlaneseq
        %v3184 = vshrl.u32 %v3183, 7
        %v3185 = vsub.s32 %v3182, %v3184
        %v3186 = vrot.slane %v3172, %v3185
        %v3187 = vcombine.low %v3131, %v3147
        %v3188 = vcombine.high %v3131, %v3147
        %v3190 = vunpack.c.l.s4 1934713408
        %v3191 = vunpack.c.0.s8 %v3190
        %v3192 = vlaneseq
        %v3193 = vshrl.u32 %v3192, 7
        %v3194 = vsub.s32 %v3191, %v3193
        %v3195 = vrot.slane %v3187, %v3194
        %v3197 = vunpack.c.l.s4 1934713408
        %v3198 = vunpack.c.0.s8 %v3197
        %v3199 = vlaneseq
        %v3200 = vshrl.u32 %v3199, 7
        %v3201 = vsub.s32 %v3198, %v3200
        %v3202 = vrot.slane %v3188, %v3201
        %v3203 = vcombine.low %v3138, %v3154
        %v3204 = vcombine.high %v3138, %v3154
        %v3206 = vunpack.c.l.s4 1934713408
        %v3207 = vunpack.c.0.s8 %v3206
        %v3208 = vlaneseq
        %v3209 = vshrl.u32 %v3208, 7
        %v3210 = vsub.s32 %v3207, %v3209
        %v3211 = vrot.slane %v3203, %v3210
        %v3213 = vunpack.c.l.s4 1934713408
        %v3214 = vunpack.c.0.s8 %v3213
        %v3215 = vlaneseq
        %v3216 = vshrl.u32 %v3215, 7
        %v3217 = vsub.s32 %v3214, %v3216
        %v3218 = vrot.slane %v3204, %v3217
        %v3219 = vcombine.low %v3163, %v3179
        %v3220 = vcombine.high %v3163, %v3179
        %v3222 = vunpack.c.l.s4 1934713408
        %v3223 = vunpack.c.0.s8 %v3222
        %v3224 = vlaneseq
        %v3225 = vshrl.u32 %v3224, 7
        %v3226 = vsub.s32 %v3223, %v3225
        %v3227 = vrot.slane %v3219, %v3226
        %v3229 = vunpack.c.l.s4 1934713408
        %v3230 = vunpack.c.0.s8 %v3229
        %v3231 = vlaneseq
        %v3232 = vshrl.u32 %v3231, 7
        %v3233 = vsub.s32 %v3230, %v3232
        %v3234 = vrot.slane %v3220, %v3233
        %v3235 = vcombine.low %v3170, %v3186
        %v3236 = vcombine.high %v3170, %v3186
        %v3238 = vunpack.c.l.s4 1934713408
        %v3239 = vunpack.c.0.s8 %v3238
        %v3240 = vlaneseq
        %v3241 = vshrl.u32 %v3240, 7
        %v3242 = vsub.s32 %v3239, %v3241
        %v3243 = vrot.slane %v3235, %v3242
        %v3245 = vunpack.c.l.s4 1934713408
        %v3246 = vunpack.c.0.s8 %v3245
        %v3247 = vlaneseq
        %v3248 = vshrl.u32 %v3247, 7
        %v3249 = vsub.s32 %v3246, %v3248
        %v3250 = vrot.slane %v3236, %v3249
        %v3251 = vcombine.low %v3195, %v3227
        %v3252 = vcombine.high %v3195, %v3227
        %v3253 = vcombine.low %v3202, %v3234
        %v3254 = vcombine.high %v3202, %v3234
        %v3255 = vcombine.low %v3211, %v3243
        %v3256 = vcombine.high %v3211, %v3243
        %v3257 = vcombine.low %v3218, %v3250
        %v3258 = vcombine.high %v3218, %v3250
        %v3259 = vcombine.low %v1254, %v1404
        %v3260 = vcombine.high %v1254, %v1404
        %v3262 = vunpack.c.l.s4 1983009808
        %v3263 = vunpack.c.0.s8 %v3262
        %v3264 = vlaneseq
        %v3265 = vshrl.u32 %v3264, 7
        %v3266 = vsub.s32 %v3263, %v3265
        %v3267 = vrot.slane %v3259, %v3266
        %v3269 = vunpack.c.l.s4 1983009808
        %v3270 = vunpack.c.0.s8 %v3269
        %v3271 = vlaneseq
        %v3272 = vshrl.u32 %v3271, 7
        %v3273 = vsub.s32 %v3270, %v3272
        %v3274 = vrot.slane %v3260, %v3273
        %v3275 = vcombine.low %v1329, %v1479
        %v3276 = vcombine.high %v1329, %v1479
        %v3278 = vunpack.c.l.s4 1983009808
        %v3279 = vunpack.c.0.s8 %v3278
        %v3280 = vlaneseq
        %v3281 = vshrl.u32 %v3280, 7
        %v3282 = vsub.s32 %v3279, %v3281
        %v3283 = vrot.slane %v3275, %v3282
        %v3285 = vunpack.c.l.s4 1983009808
        %v3286 = vunpack.c.0.s8 %v3285
        %v3287 = vlaneseq
        %v3288 = vshrl.u32 %v3287, 7
        %v3289 = vsub.s32 %v3286, %v3288
        %v3290 = vrot.slane %v3276, %v3289
        %v3291 = vcombine.low %v1554, %v1704
        %v3292 = vcombine.high %v1554, %v1704
        %v3294 = vunpack.c.l.s4 1983009808
        %v3295 = vunpack.c.0.s8 %v3294
        %v3296 = vlaneseq
        %v3297 = vshrl.u32 %v3296, 7
        %v3298 = vsub.s32 %v3295, %v3297
        %v3299 = vrot.slane %v3291, %v3298
        %v3301 = vunpack.c.l.s4 1983009808
        %v3302 = vunpack.c.0.s8 %v3301
        %v3303 = vlaneseq
        %v3304 = vshrl.u32 %v3303, 7
        %v3305 = vsub.s32 %v3302, %v3304
        %v3306 = vrot.slane %v3292, %v3305
        %v3307 = vcombine.low %v1629, %v1779
        %v3308 = vcombine.high %v1629, %v1779
        %v3310 = vunpack.c.l.s4 1983009808
        %v3311 = vunpack.c.0.s8 %v3310
        %v3312 = vlaneseq
        %v3313 = vshrl.u32 %v3312, 7
        %v3314 = vsub.s32 %v3311, %v3313
        %v3315 = vrot.slane %v3307, %v3314
        %v3317 = vunpack.c.l.s4 1983009808
        %v3318 = vunpack.c.0.s8 %v3317
        %v3319 = vlaneseq
        %v3320 = vshrl.u32 %v3319, 7
        %v3321 = vsub.s32 %v3318, %v3320
        %v3322 = vrot.slane %v3308, %v3321
        %v3323 = vcombine.low %v3267, %v3283
        %v3324 = vcombine.high %v3267, %v3283
        %v3326 = vunpack.c.l.s4 1934713408
        %v3327 = vunpack.c.0.s8 %v3326
        %v3328 = vlaneseq
        %v3329 = vshrl.u32 %v3328, 7
        %v3330 = vsub.s32 %v3327, %v3329
        %v3331 = vrot.slane %v3323, %v3330
        %v3333 = vunpack.c.l.s4 1934713408
        %v3334 = vunpack.c.0.s8 %v3333
        %v3335 = vlaneseq
        %v3336 = vshrl.u32 %v3335, 7
        %v3337 = vsub.s32 %v3334, %v3336
        %v3338 = vrot.slane %v3324, %v3337
        %v3339 = vcombine.low %v3274, %v3290
        %v3340 = vcombine.high %v3274, %v3290
        %v3342 = vunpack.c.l.s4 1934713408
        %v3343 = vunpack.c.0.s8 %v3342
        %v3344 = vlaneseq
        %v3345 = vshrl.u32 %v3344, 7
        %v3346 = vsub.s32 %v3343, %v3345
        %v3347 = vrot.slane %v3339, %v3346
        %v3349 = vunpack.c.l.s4 1934713408
        %v3350 = vunpack.c.0.s8 %v3349
        %v3351 = vlaneseq
        %v3352 = vshrl.u32 %v3351, 7
        %v3353 = vsub.s32 %v3350, %v3352
        %v3354 = vrot.slane %v3340, %v3353
        %v3355 = vcombine.low %v3299, %v3315
        %v3356 = vcombine.high %v3299, %v3315
        %v3358 = vunpack.c.l.s4 1934713408
        %v3359 = vunpack.c.0.s8 %v3358
        %v3360 = vlaneseq
        %v3361 = vshrl.u32 %v3360, 7
        %v3362 = vsub.s32 %v3359, %v3361
        %v3363 = vrot.slane %v3355, %v3362
        %v3365 = vunpack.c.l.s4 1934713408
        %v3366 = vunpack.c.0.s8 %v3365
        %v3367 = vlaneseq
        %v3368 = vshrl.u32 %v3367, 7
        %v3369 = vsub.s32 %v3366, %v3368
        %v3370 = vrot.slane %v3356, %v3369
        %v3371 = vcombine.low %v3306, %v3322
        %v3372 = vcombine.high %v3306, %v3322
        %v3374 = vunpack.c.l.s4 1934713408
        %v3375 = vunpack.c.0.s8 %v3374
        %v3376 = vlaneseq
        %v3377 = vshrl.u32 %v3376, 7
        %v3378 = vsub.s32 %v3375, %v3377
        %v3379 = vrot.slane %v3371, %v3378
        %v3381 = vunpack.c.l.s4 1934713408
        %v3382 = vunpack.c.0.s8 %v3381
        %v3383 = vlaneseq
        %v3384 = vshrl.u32 %v3383, 7
        %v3385 = vsub.s32 %v3382, %v3384
        %v3386 = vrot.slane %v3372, %v3385
        %v3387 = vcombine.low %v3331, %v3363
        %v3388 = vcombine.high %v3331, %v3363
        %v3389 = vcombine.low %v3338, %v3370
        %v3390 = vcombine.high %v3338, %v3370
        %v3391 = vcombine.low %v3347, %v3379
        %v3392 = vcombine.high %v3347, %v3379
        %v3393 = vcombine.low %v3354, %v3386
        %v3394 = vcombine.high %v3354, %v3386
        %v3395 = vcombine.low %v1259, %v1409
        %v3396 = vcombine.high %v1259, %v1409
        %v3398 = vunpack.c.l.s4 1983009808
        %v3399 = vunpack.c.0.s8 %v3398
        %v3400 = vlaneseq
        %v3401 = vshrl.u32 %v3400, 7
        %v3402 = vsub.s32 %v3399, %v3401
        %v3403 = vrot.slane %v3395, %v3402
        %v3405 = vunpack.c.l.s4 1983009808
        %v3406 = vunpack.c.0.s8 %v3405
        %v3407 = vlaneseq
        %v3408 = vshrl.u32 %v3407, 7
        %v3409 = vsub.s32 %v3406, %v3408
        %v3410 = vrot.slane %v3396, %v3409
        %v3411 = vcombine.low %v1334, %v1484
        %v3412 = vcombine.high %v1334, %v1484
        %v3414 = vunpack.c.l.s4 1983009808
        %v3415 = vunpack.c.0.s8 %v3414
        %v3416 = vlaneseq
        %v3417 = vshrl.u32 %v3416, 7
        %v3418 = vsub.s32 %v3415, %v3417
        %v3419 = vrot.slane %v3411, %v3418
        %v3421 = vunpack.c.l.s4 1983009808
        %v3422 = vunpack.c.0.s8 %v3421
        %v3423 = vlaneseq
        %v3424 = vshrl.u32 %v3423, 7
        %v3425 = vsub.s32 %v3422, %v3424
        %v3426 = vrot.slane %v3412, %v3425
        %v3427 = vcombine.low %v1559, %v1709
        %v3428 = vcombine.high %v1559, %v1709
        %v3430 = vunpack.c.l.s4 1983009808
        %v3431 = vunpack.c.0.s8 %v3430
        %v3432 = vlaneseq
        %v3433 = vshrl.u32 %v3432, 7
        %v3434 = vsub.s32 %v3431, %v3433
        %v3435 = vrot.slane %v3427, %v3434
        %v3437 = vunpack.c.l.s4 1983009808
        %v3438 = vunpack.c.0.s8 %v3437
        %v3439 = vlaneseq
        %v3440 = vshrl.u32 %v3439, 7
        %v3441 = vsub.s32 %v3438, %v3440
        %v3442 = vrot.slane %v3428, %v3441
        %v3443 = vcombine.low %v1634, %v1784
        %v3444 = vcombine.high %v1634, %v1784
        %v3446 = vunpack.c.l.s4 1983009808
        %v3447 = vunpack.c.0.s8 %v3446
        %v3448 = vlaneseq
        %v3449 = vshrl.u32 %v3448, 7
        %v3450 = vsub.s32 %v3447, %v3449
        %v3451 = vrot.slane %v3443, %v3450
        %v3453 = vunpack.c.l.s4 1983009808
        %v3454 = vunpack.c.0.s8 %v3453
        %v3455 = vlaneseq
        %v3456 = vshrl.u32 %v3455, 7
        %v3457 = vsub.s32 %v3454, %v3456
        %v3458 = vrot.slane %v3444, %v3457
        %v3459 = vcombine.low %v3403, %v3419
        %v3460 = vcombine.high %v3403, %v3419
        %v3462 = vunpack.c.l.s4 1934713408
        %v3463 = vunpack.c.0.s8 %v3462
        %v3464 = vlaneseq
        %v3465 = vshrl.u32 %v3464, 7
        %v3466 = vsub.s32 %v3463, %v3465
        %v3467 = vrot.slane %v3459, %v3466
        %v3469 = vunpack.c.l.s4 1934713408
        %v3470 = vunpack.c.0.s8 %v3469
        %v3471 = vlaneseq
        %v3472 = vshrl.u32 %v3471, 7
        %v3473 = vsub.s32 %v3470, %v3472
        %v3474 = vrot.slane %v3460, %v3473
        %v3475 = vcombine.low %v3410, %v3426
        %v3476 = vcombine.high %v3410, %v3426
        %v3478 = vunpack.c.l.s4 1934713408
        %v3479 = vunpack.c.0.s8 %v3478
        %v3480 = vlaneseq
        %v3481 = vshrl.u32 %v3480, 7
        %v3482 = vsub.s32 %v3479, %v3481
        %v3483 = vrot.slane %v3475, %v3482
        %v3485 = vunpack.c.l.s4 1934713408
        %v3486 = vunpack.c.0.s8 %v3485
        %v3487 = vlaneseq
        %v3488 = vshrl.u32 %v3487, 7
        %v3489 = vsub.s32 %v3486, %v3488
        %v3490 = vrot.slane %v3476, %v3489
        %v3491 = vcombine.low %v3435, %v3451
        %v3492 = vcombine.high %v3435, %v3451
        %v3494 = vunpack.c.l.s4 1934713408
        %v3495 = vunpack.c.0.s8 %v3494
        %v3496 = vlaneseq
        %v3497 = vshrl.u32 %v3496, 7
        %v3498 = vsub.s32 %v3495, %v3497
        %v3499 = vrot.slane %v3491, %v3498
        %v3501 = vunpack.c.l.s4 1934713408
        %v3502 = vunpack.c.0.s8 %v3501
        %v3503 = vlaneseq
        %v3504 = vshrl.u32 %v3503, 7
        %v3505 = vsub.s32 %v3502, %v3504
        %v3506 = vrot.slane %v3492, %v3505
        %v3507 = vcombine.low %v3442, %v3458
        %v3508 = vcombine.high %v3442, %v3458
        %v3510 = vunpack.c.l.s4 1934713408
        %v3511 = vunpack.c.0.s8 %v3510
        %v3512 = vlaneseq
        %v3513 = vshrl.u32 %v3512, 7
        %v3514 = vsub.s32 %v3511, %v3513
        %v3515 = vrot.slane %v3507, %v3514
        %v3517 = vunpack.c.l.s4 1934713408
        %v3518 = vunpack.c.0.s8 %v3517
        %v3519 = vlaneseq
        %v3520 = vshrl.u32 %v3519, 7
        %v3521 = vsub.s32 %v3518, %v3520
        %v3522 = vrot.slane %v3508, %v3521
        %v3523 = vcombine.low %v3467, %v3499
        %v3524 = vcombine.high %v3467, %v3499
        %v3525 = vcombine.low %v3474, %v3506
        %v3526 = vcombine.high %v3474, %v3506
        %v3527 = vcombine.low %v3483, %v3515
        %v3528 = vcombine.high %v3483, %v3515
        %v3529 = vcombine.low %v3490, %v3522
        %v3530 = vcombine.high %v3490, %v3522
        %v3531 = vcombine.low %v1854, %v2004
        %v3532 = vcombine.high %v1854, %v2004
        %v3534 = vunpack.c.l.s4 1983009808
        %v3535 = vunpack.c.0.s8 %v3534
        %v3536 = vlaneseq
        %v3537 = vshrl.u32 %v3536, 7
        %v3538 = vsub.s32 %v3535, %v3537
        %v3539 = vrot.slane %v3531, %v3538
        %v3541 = vunpack.c.l.s4 1983009808
        %v3542 = vunpack.c.0.s8 %v3541
        %v3543 = vlaneseq
        %v3544 = vshrl.u32 %v3543, 7
        %v3545 = vsub.s32 %v3542, %v3544
        %v3546 = vrot.slane %v3532, %v3545
        %v3547 = vcombine.low %v1929, %v2079
        %v3548 = vcombine.high %v1929, %v2079
        %v3550 = vunpack.c.l.s4 1983009808
        %v3551 = vunpack.c.0.s8 %v3550
        %v3552 = vlaneseq
        %v3553 = vshrl.u32 %v3552, 7
        %v3554 = vsub.s32 %v3551, %v3553
        %v3555 = vrot.slane %v3547, %v3554
        %v3557 = vunpack.c.l.s4 1983009808
        %v3558 = vunpack.c.0.s8 %v3557
        %v3559 = vlaneseq
        %v3560 = vshrl.u32 %v3559, 7
        %v3561 = vsub.s32 %v3558, %v3560
        %v3562 = vrot.slane %v3548, %v3561
        %v3563 = vcombine.low %v2154, %v2304
        %v3564 = vcombine.high %v2154, %v2304
        %v3566 = vunpack.c.l.s4 1983009808
        %v3567 = vunpack.c.0.s8 %v3566
        %v3568 = vlaneseq
        %v3569 = vshrl.u32 %v3568, 7
        %v3570 = vsub.s32 %v3567, %v3569
        %v3571 = vrot.slane %v3563, %v3570
        %v3573 = vunpack.c.l.s4 1983009808
        %v3574 = vunpack.c.0.s8 %v3573
        %v3575 = vlaneseq
        %v3576 = vshrl.u32 %v3575, 7
        %v3577 = vsub.s32 %v3574, %v3576
        %v3578 = vrot.slane %v3564, %v3577
        %v3579 = vcombine.low %v2229, %v2379
        %v3580 = vcombine.high %v2229, %v2379
        %v3582 = vunpack.c.l.s4 1983009808
        %v3583 = vunpack.c.0.s8 %v3582
        %v3584 = vlaneseq
        %v3585 = vshrl.u32 %v3584, 7
        %v3586 = vsub.s32 %v3583, %v3585
        %v3587 = vrot.slane %v3579, %v3586
        %v3589 = vunpack.c.l.s4 1983009808
        %v3590 = vunpack.c.0.s8 %v3589
        %v3591 = vlaneseq
        %v3592 = vshrl.u32 %v3591, 7
        %v3593 = vsub.s32 %v3590, %v3592
        %v3594 = vrot.slane %v3580, %v3593
        %v3595 = vcombine.low %v3539, %v3555
        %v3596 = vcombine.high %v3539, %v3555
        %v3598 = vunpack.c.l.s4 1934713408
        %v3599 = vunpack.c.0.s8 %v3598
        %v3600 = vlaneseq
        %v3601 = vshrl.u32 %v3600, 7
        %v3602 = vsub.s32 %v3599, %v3601
        %v3603 = vrot.slane %v3595, %v3602
        %v3605 = vunpack.c.l.s4 1934713408
        %v3606 = vunpack.c.0.s8 %v3605
        %v3607 = vlaneseq
        %v3608 = vshrl.u32 %v3607, 7
        %v3609 = vsub.s32 %v3606, %v3608
        %v3610 = vrot.slane %v3596, %v3609
        %v3611 = vcombine.low %v3546, %v3562
        %v3612 = vcombine.high %v3546, %v3562
        %v3614 = vunpack.c.l.s4 1934713408
        %v3615 = vunpack.c.0.s8 %v3614
        %v3616 = vlaneseq
        %v3617 = vshrl.u32 %v3616, 7
        %v3618 = vsub.s32 %v3615, %v3617
        %v3619 = vrot.slane %v3611, %v3618
        %v3621 = vunpack.c.l.s4 1934713408
        %v3622 = vunpack.c.0.s8 %v3621
        %v3623 = vlaneseq
        %v3624 = vshrl.u32 %v3623, 7
        %v3625 = vsub.s32 %v3622, %v3624
        %v3626 = vrot.slane %v3612, %v3625
        %v3627 = vcombine.low %v3571, %v3587
        %v3628 = vcombine.high %v3571, %v3587
        %v3630 = vunpack.c.l.s4 1934713408
        %v3631 = vunpack.c.0.s8 %v3630
        %v3632 = vlaneseq
        %v3633 = vshrl.u32 %v3632, 7
        %v3634 = vsub.s32 %v3631, %v3633
        %v3635 = vrot.slane %v3627, %v3634
        %v3637 = vunpack.c.l.s4 1934713408
        %v3638 = vunpack.c.0.s8 %v3637
        %v3639 = vlaneseq
        %v3640 = vshrl.u32 %v3639, 7
        %v3641 = vsub.s32 %v3638, %v3640
        %v3642 = vrot.slane %v3628, %v3641
        %v3643 = vcombine.low %v3578, %v3594
        %v3644 = vcombine.high %v3578, %v3594
        %v3646 = vunpack.c.l.s4 1934713408
        %v3647 = vunpack.c.0.s8 %v3646
        %v3648 = vlaneseq
        %v3649 = vshrl.u32 %v3648, 7
        %v3650 = vsub.s32 %v3647, %v3649
        %v3651 = vrot.slane %v3643, %v3650
        %v3653 = vunpack.c.l.s4 1934713408
        %v3654 = vunpack.c.0.s8 %v3653
        %v3655 = vlaneseq
        %v3656 = vshrl.u32 %v3655, 7
        %v3657 = vsub.s32 %v3654, %v3656
        %v3658 = vrot.slane %v3644, %v3657
        %v3659 = vcombine.low %v3603, %v3635
        %v3660 = vcombine.high %v3603, %v3635
        %v3661 = vcombine.low %v3610, %v3642
        %v3662 = vcombine.high %v3610, %v3642
        %v3663 = vcombine.low %v3619, %v3651
        %v3664 = vcombine.high %v3619, %v3651
        %v3665 = vcombine.low %v3626, %v3658
        %v3666 = vcombine.high %v3626, %v3658
        %v3667 = vcombine.low %v1859, %v2009
        %v3668 = vcombine.high %v1859, %v2009
        %v3670 = vunpack.c.l.s4 1983009808
        %v3671 = vunpack.c.0.s8 %v3670
        %v3672 = vlaneseq
        %v3673 = vshrl.u32 %v3672, 7
        %v3674 = vsub.s32 %v3671, %v3673
        %v3675 = vrot.slane %v3667, %v3674
        %v3677 = vunpack.c.l.s4 1983009808
        %v3678 = vunpack.c.0.s8 %v3677
        %v3679 = vlaneseq
        %v3680 = vshrl.u32 %v3679, 7
        %v3681 = vsub.s32 %v3678, %v3680
        %v3682 = vrot.slane %v3668, %v3681
        %v3683 = vcombine.low %v1934, %v2084
        %v3684 = vcombine.high %v1934, %v2084
        %v3686 = vunpack.c.l.s4 1983009808
        %v3687 = vunpack.c.0.s8 %v3686
        %v3688 = vlaneseq
        %v3689 = vshrl.u32 %v3688, 7
        %v3690 = vsub.s32 %v3687, %v3689
        %v3691 = vrot.slane %v3683, %v3690
        %v3693 = vunpack.c.l.s4 1983009808
        %v3694 = vunpack.c.0.s8 %v3693
        %v3695 = vlaneseq
        %v3696 = vshrl.u32 %v3695, 7
        %v3697 = vsub.s32 %v3694, %v3696
        %v3698 = vrot.slane %v3684, %v3697
        %v3699 = vcombine.low %v2159, %v2309
        %v3700 = vcombine.high %v2159, %v2309
        %v3702 = vunpack.c.l.s4 1983009808
        %v3703 = vunpack.c.0.s8 %v3702
        %v3704 = vlaneseq
        %v3705 = vshrl.u32 %v3704, 7
        %v3706 = vsub.s32 %v3703, %v3705
        %v3707 = vrot.slane %v3699, %v3706
        %v3709 = vunpack.c.l.s4 1983009808
        %v3710 = vunpack.c.0.s8 %v3709
        %v3711 = vlaneseq
        %v3712 = vshrl.u32 %v3711, 7
        %v3713 = vsub.s32 %v3710, %v3712
        %v3714 = vrot.slane %v3700, %v3713
        %v3715 = vcombine.low %v2234, %v2384
        %v3716 = vcombine.high %v2234, %v2384
        %v3718 = vunpack.c.l.s4 1983009808
        %v3719 = vunpack.c.0.s8 %v3718
        %v3720 = vlaneseq
        %v3721 = vshrl.u32 %v3720, 7
        %v3722 = vsub.s32 %v3719, %v3721
        %v3723 = vrot.slane %v3715, %v3722
        %v3725 = vunpack.c.l.s4 1983009808
        %v3726 = vunpack.c.0.s8 %v3725
        %v3727 = vlaneseq
        %v3728 = vshrl.u32 %v3727, 7
        %v3729 = vsub.s32 %v3726, %v3728
        %v3730 = vrot.slane %v3716, %v3729
        %v3731 = vcombine.low %v3675, %v3691
        %v3732 = vcombine.high %v3675, %v3691
        %v3734 = vunpack.c.l.s4 1934713408
        %v3735 = vunpack.c.0.s8 %v3734
        %v3736 = vlaneseq
        %v3737 = vshrl.u32 %v3736, 7
        %v3738 = vsub.s32 %v3735, %v3737
        %v3739 = vrot.slane %v3731, %v3738
        %v3741 = vunpack.c.l.s4 1934713408
        %v3742 = vunpack.c.0.s8 %v3741
        %v3743 = vlaneseq
        %v3744 = vshrl.u32 %v3743, 7
        %v3745 = vsub.s32 %v3742, %v3744
        %v3746 = vrot.slane %v3732, %v3745
        %v3747 = vcombine.low %v3682, %v3698
        %v3748 = vcombine.high %v3682, %v3698
        %v3750 = vunpack.c.l.s4 1934713408
        %v3751 = vunpack.c.0.s8 %v3750
        %v3752 = vlaneseq
        %v3753 = vshrl.u32 %v3752, 7
        %v3754 = vsub.s32 %v3751, %v3753
        %v3755 = vrot.slane %v3747, %v3754
        %v3757 = vunpack.c.l.s4 1934713408
        %v3758 = vunpack.c.0.s8 %v3757
        %v3759 = vlaneseq
        %v3760 = vshrl.u32 %v3759, 7
        %v3761 = vsub.s32 %v3758, %v3760
        %v3762 = vrot.slane %v3748, %v3761
        %v3763 = vcombine.low %v3707, %v3723
        %v3764 = vcombine.high %v3707, %v3723
        %v3766 = vunpack.c.l.s4 1934713408
        %v3767 = vunpack.c.0.s8 %v3766
        %v3768 = vlaneseq
        %v3769 = vshrl.u32 %v3768, 7
        %v3770 = vsub.s32 %v3767, %v3769
        %v3771 = vrot.slane %v3763, %v3770
        %v3773 = vunpack.c.l.s4 1934713408
        %v3774 = vunpack.c.0.s8 %v3773
        %v3775 = vlaneseq
        %v3776 = vshrl.u32 %v3775, 7
        %v3777 = vsub.s32 %v3774, %v3776
        %v3778 = vrot.slane %v3764, %v3777
        %v3779 = vcombine.low %v3714, %v3730
        %v3780 = vcombine.high %v3714, %v3730
        %v3782 = vunpack.c.l.s4 1934713408
        %v3783 = vunpack.c.0.s8 %v3782
        %v3784 = vlaneseq
        %v3785 = vshrl.u32 %v3784, 7
        %v3786 = vsub.s32 %v3783, %v3785
        %v3787 = vrot.slane %v3779, %v3786
        %v3789 = vunpack.c.l.s4 1934713408
        %v3790 = vunpack.c.0.s8 %v3789
        %v3791 = vlaneseq
        %v3792 = vshrl.u32 %v3791, 7
        %v3793 = vsub.s32 %v3790, %v3792
        %v3794 = vrot.slane %v3780, %v3793
        %v3795 = vcombine.low %v3739, %v3771
        %v3796 = vcombine.high %v3739, %v3771
        %v3797 = vcombine.low %v3746, %v3778
        %v3798 = vcombine.high %v3746, %v3778
        %v3799 = vcombine.low %v3755, %v3787
        %v3800 = vcombine.high %v3755, %v3787
        %v3801 = vcombine.low %v3762, %v3794
        %v3802 = vcombine.high %v3762, %v3794
        %v3803 = vcombine.low %v2454, %v2604
        %v3804 = vcombine.high %v2454, %v2604
        %v3806 = vunpack.c.l.s4 1983009808
        %v3807 = vunpack.c.0.s8 %v3806
        %v3808 = vlaneseq
        %v3809 = vshrl.u32 %v3808, 7
        %v3810 = vsub.s32 %v3807, %v3809
        %v3811 = vrot.slane %v3803, %v3810
        %v3813 = vunpack.c.l.s4 1983009808
        %v3814 = vunpack.c.0.s8 %v3813
        %v3815 = vlaneseq
        %v3816 = vshrl.u32 %v3815, 7
        %v3817 = vsub.s32 %v3814, %v3816
        %v3818 = vrot.slane %v3804, %v3817
        %v3819 = vcombine.low %v2529, %v2679
        %v3820 = vcombine.high %v2529, %v2679
        %v3822 = vunpack.c.l.s4 1983009808
        %v3823 = vunpack.c.0.s8 %v3822
        %v3824 = vlaneseq
        %v3825 = vshrl.u32 %v3824, 7
        %v3826 = vsub.s32 %v3823, %v3825
        %v3827 = vrot.slane %v3819, %v3826
        %v3829 = vunpack.c.l.s4 1983009808
        %v3830 = vunpack.c.0.s8 %v3829
        %v3831 = vlaneseq
        %v3832 = vshrl.u32 %v3831, 7
        %v3833 = vsub.s32 %v3830, %v3832
        %v3834 = vrot.slane %v3820, %v3833
        %v3835 = vcombine.low %v2754, %v2904
        %v3836 = vcombine.high %v2754, %v2904
        %v3838 = vunpack.c.l.s4 1983009808
        %v3839 = vunpack.c.0.s8 %v3838
        %v3840 = vlaneseq
        %v3841 = vshrl.u32 %v3840, 7
        %v3842 = vsub.s32 %v3839, %v3841
        %v3843 = vrot.slane %v3835, %v3842
        %v3845 = vunpack.c.l.s4 1983009808
        %v3846 = vunpack.c.0.s8 %v3845
        %v3847 = vlaneseq
        %v3848 = vshrl.u32 %v3847, 7
        %v3849 = vsub.s32 %v3846, %v3848
        %v3850 = vrot.slane %v3836, %v3849
        %v3851 = vcombine.low %v2829, %v2979
        %v3852 = vcombine.high %v2829, %v2979
        %v3854 = vunpack.c.l.s4 1983009808
        %v3855 = vunpack.c.0.s8 %v3854
        %v3856 = vlaneseq
        %v3857 = vshrl.u32 %v3856, 7
        %v3858 = vsub.s32 %v3855, %v3857
        %v3859 = vrot.slane %v3851, %v3858
        %v3861 = vunpack.c.l.s4 1983009808
        %v3862 = vunpack.c.0.s8 %v3861
        %v3863 = vlaneseq
        %v3864 = vshrl.u32 %v3863, 7
        %v3865 = vsub.s32 %v3862, %v3864
        %v3866 = vrot.slane %v3852, %v3865
        %v3867 = vcombine.low %v3811, %v3827
        %v3868 = vcombine.high %v3811, %v3827
        %v3870 = vunpack.c.l.s4 1934713408
        %v3871 = vunpack.c.0.s8 %v3870
        %v3872 = vlaneseq
        %v3873 = vshrl.u32 %v3872, 7
        %v3874 = vsub.s32 %v3871, %v3873
        %v3875 = vrot.slane %v3867, %v3874
        %v3877 = vunpack.c.l.s4 1934713408
        %v3878 = vunpack.c.0.s8 %v3877
        %v3879 = vlaneseq
        %v3880 = vshrl.u32 %v3879, 7
        %v3881 = vsub.s32 %v3878, %v3880
        %v3882 = vrot.slane %v3868, %v3881
        %v3883 = vcombine.low %v3818, %v3834
        %v3884 = vcombine.high %v3818, %v3834
        %v3886 = vunpack.c.l.s4 1934713408
        %v3887 = vunpack.c.0.s8 %v3886
        %v3888 = vlaneseq
        %v3889 = vshrl.u32 %v3888, 7
        %v3890 = vsub.s32 %v3887, %v3889
        %v3891 = vrot.slane %v3883, %v3890
        %v3893 = vunpack.c.l.s4 1934713408
        %v3894 = vunpack.c.0.s8 %v3893
        %v3895 = vlaneseq
        %v3896 = vshrl.u32 %v3895, 7
        %v3897 = vsub.s32 %v3894, %v3896
        %v3898 = vrot.slane %v3884, %v3897
        %v3899 = vcombine.low %v3843, %v3859
        %v3900 = vcombine.high %v3843, %v3859
        %v3902 = vunpack.c.l.s4 1934713408
        %v3903 = vunpack.c.0.s8 %v3902
        %v3904 = vlaneseq
        %v3905 = vshrl.u32 %v3904, 7
        %v3906 = vsub.s32 %v3903, %v3905
        %v3907 = vrot.slane %v3899, %v3906
        %v3909 = vunpack.c.l.s4 1934713408
        %v3910 = vunpack.c.0.s8 %v3909
        %v3911 = vlaneseq
        %v3912 = vshrl.u32 %v3911, 7
        %v3913 = vsub.s32 %v3910, %v3912
        %v3914 = vrot.slane %v3900, %v3913
        %v3915 = vcombine.low %v3850, %v3866
        %v3916 = vcombine.high %v3850, %v3866
        %v3918 = vunpack.c.l.s4 1934713408
        %v3919 = vunpack.c.0.s8 %v3918
        %v3920 = vlaneseq
        %v3921 = vshrl.u32 %v3920, 7
        %v3922 = vsub.s32 %v3919, %v3921
        %v3923 = vrot.slane %v3915, %v3922
        %v3925 = vunpack.c.l.s4 1934713408
        %v3926 = vunpack.c.0.s8 %v3925
        %v3927 = vlaneseq
        %v3928 = vshrl.u32 %v3927, 7
        %v3929 = vsub.s32 %v3926, %v3928
        %v3930 = vrot.slane %v3916, %v3929
        %v3931 = vcombine.low %v3875, %v3907
        %v3932 = vcombine.high %v3875, %v3907
        %v3933 = vcombine.low %v3882, %v3914
        %v3934 = vcombine.high %v3882, %v3914
        %v3935 = vcombine.low %v3891, %v3923
        %v3936 = vcombine.high %v3891, %v3923
        %v3937 = vcombine.low %v3898, %v3930
        %v3938 = vcombine.high %v3898, %v3930
        %v3939 = vcombine.low %v2459, %v2609
        %v3940 = vcombine.high %v2459, %v2609
        %v3942 = vunpack.c.l.s4 1983009808
        %v3943 = vunpack.c.0.s8 %v3942
        %v3944 = vlaneseq
        %v3945 = vshrl.u32 %v3944, 7
        %v3946 = vsub.s32 %v3943, %v3945
        %v3947 = vrot.slane %v3939, %v3946
        %v3949 = vunpack.c.l.s4 1983009808
        %v3950 = vunpack.c.0.s8 %v3949
        %v3951 = vlaneseq
        %v3952 = vshrl.u32 %v3951, 7
        %v3953 = vsub.s32 %v3950, %v3952
        %v3954 = vrot.slane %v3940, %v3953
        %v3955 = vcombine.low %v2534, %v2684
        %v3956 = vcombine.high %v2534, %v2684
        %v3958 = vunpack.c.l.s4 1983009808
        %v3959 = vunpack.c.0.s8 %v3958
        %v3960 = vlaneseq
        %v3961 = vshrl.u32 %v3960, 7
        %v3962 = vsub.s32 %v3959, %v3961
        %v3963 = vrot.slane %v3955, %v3962
        %v3965 = vunpack.c.l.s4 1983009808
        %v3966 = vunpack.c.0.s8 %v3965
        %v3967 = vlaneseq
        %v3968 = vshrl.u32 %v3967, 7
        %v3969 = vsub.s32 %v3966, %v3968
        %v3970 = vrot.slane %v3956, %v3969
        %v3971 = vcombine.low %v2759, %v2909
        %v3972 = vcombine.high %v2759, %v2909
        %v3974 = vunpack.c.l.s4 1983009808
        %v3975 = vunpack.c.0.s8 %v3974
        %v3976 = vlaneseq
        %v3977 = vshrl.u32 %v3976, 7
        %v3978 = vsub.s32 %v3975, %v3977
        %v3979 = vrot.slane %v3971, %v3978
        %v3981 = vunpack.c.l.s4 1983009808
        %v3982 = vunpack.c.0.s8 %v3981
        %v3983 = vlaneseq
        %v3984 = vshrl.u32 %v3983, 7
        %v3985 = vsub.s32 %v3982, %v3984
        %v3986 = vrot.slane %v3972, %v3985
        %v3987 = vcombine.low %v2834, %v2984
        %v3988 = vcombine.high %v2834, %v2984
        %v3990 = vunpack.c.l.s4 1983009808
        %v3991 = vunpack.c.0.s8 %v3990
        %v3992 = vlaneseq
        %v3993 = vshrl.u32 %v3992, 7
        %v3994 = vsub.s32 %v3991, %v3993
        %v3995 = vrot.slane %v3987, %v3994
        %v3997 = vunpack.c.l.s4 1983009808
        %v3998 = vunpack.c.0.s8 %v3997
        %v3999 = vlaneseq
        %v4000 = vshrl.u32 %v3999, 7
        %v4001 = vsub.s32 %v3998, %v4000
        %v4002 = vrot.slane %v3988, %v4001
        %v4003 = vcombine.low %v3947, %v3963
        %v4004 = vcombine.high %v3947, %v3963
        %v4006 = vunpack.c.l.s4 1934713408
        %v4007 = vunpack.c.0.s8 %v4006
        %v4008 = vlaneseq
        %v4009 = vshrl.u32 %v4008, 7
        %v4010 = vsub.s32 %v4007, %v4009
        %v4011 = vrot.slane %v4003, %v4010
        %v4013 = vunpack.c.l.s4 1934713408
        %v4014 = vunpack.c.0.s8 %v4013
        %v4015 = vlaneseq
        %v4016 = vshrl.u32 %v4015, 7
        %v4017 = vsub.s32 %v4014, %v4016
        %v4018 = vrot.slane %v4004, %v4017
        %v4019 = vcombine.low %v3954, %v3970
        %v4020 = vcombine.high %v3954, %v3970
        %v4022 = vunpack.c.l.s4 1934713408
        %v4023 = vunpack.c.0.s8 %v4022
        %v4024 = vlaneseq
        %v4025 = vshrl.u32 %v4024, 7
        %v4026 = vsub.s32 %v4023, %v4025
        %v4027 = vrot.slane %v4019, %v4026
        %v4029 = vunpack.c.l.s4 1934713408
        %v4030 = vunpack.c.0.s8 %v4029
        %v4031 = vlaneseq
        %v4032 = vshrl.u32 %v4031, 7
        %v4033 = vsub.s32 %v4030, %v4032
        %v4034 = vrot.slane %v4020, %v4033
        %v4035 = vcombine.low %v3979, %v3995
        %v4036 = vcombine.high %v3979, %v3995
        %v4038 = vunpack.c.l.s4 1934713408
        %v4039 = vunpack.c.0.s8 %v4038
        %v4040 = vlaneseq
        %v4041 = vshrl.u32 %v4040, 7
        %v4042 = vsub.s32 %v4039, %v4041
        %v4043 = vrot.slane %v4035, %v4042
        %v4045 = vunpack.c.l.s4 1934713408
        %v4046 = vunpack.c.0.s8 %v4045
        %v4047 = vlaneseq
        %v4048 = vshrl.u32 %v4047, 7
        %v4049 = vsub.s32 %v4046, %v4048
        %v4050 = vrot.slane %v4036, %v4049
        %v4051 = vcombine.low %v3986, %v4002
        %v4052 = vcombine.high %v3986, %v4002
        %v4054 = vunpack.c.l.s4 1934713408
        %v4055 = vunpack.c.0.s8 %v4054
        %v4056 = vlaneseq
        %v4057 = vshrl.u32 %v4056, 7
        %v4058 = vsub.s32 %v4055, %v4057
        %v4059 = vrot.slane %v4051, %v4058
        %v4061 = vunpack.c.l.s4 1934713408
        %v4062 = vunpack.c.0.s8 %v4061
        %v4063 = vlaneseq
        %v4064 = vshrl.u32 %v4063, 7
        %v4065 = vsub.s32 %v4062, %v4064
        %v4066 = vrot.slane %v4052, %v4065
        %v4067 = vcombine.low %v4011, %v4043
        %v4068 = vcombine.high %v4011, %v4043
        %v4069 = vcombine.low %v4018, %v4050
        %v4070 = vcombine.high %v4018, %v4050
        %v4071 = vcombine.low %v4027, %v4059
        %v4072 = vcombine.high %v4027, %v4059
        %v4073 = vcombine.low %v4034, %v4066
        %v4074 = vcombine.high %v4034, %v4066
        %4079 = vrot.lane.b32.xlu0 %v3116, 16
        %v4080 = vpop.permute.xlu0 %4079
        %4081 = vrot.lane.b32.xlu0 %v3388, 16
        %v4082 = vpop.permute.xlu0 %4081
        %4083 = vrot.lane.b32.xlu0 %v3660, 16
        %v4084 = vpop.permute.xlu0 %4083
        %4085 = vrot.lane.b32.xlu0 %v3932, 16
        %v4086 = vpop.permute.xlu0 %4085
        %4095 = vrot.lane.b32.xlu0 %v3117, 32
        %v4096 = vpop.permute.xlu0 %4095
        %4097 = vrot.lane.b32.xlu0 %v3389, 32
        %v4098 = vpop.permute.xlu0 %4097
        %4099 = vrot.lane.b32.xlu0 %v3661, 32
        %v4100 = vpop.permute.xlu0 %4099
        %4101 = vrot.lane.b32.xlu0 %v3933, 32
        %v4102 = vpop.permute.xlu0 %4101
        %4111 = vrot.lane.b32.xlu0 %v3118, 48
        %v4112 = vpop.permute.xlu0 %4111
        %4113 = vrot.lane.b32.xlu0 %v3390, 48
        %v4114 = vpop.permute.xlu0 %4113
        %4115 = vrot.lane.b32.xlu0 %v3662, 48
        %v4116 = vpop.permute.xlu0 %4115
        %4117 = vrot.lane.b32.xlu0 %v3934, 48
        %v4118 = vpop.permute.xlu0 %4117
        %4127 = vrot.lane.b32.xlu0 %v3119, 64
        %v4128 = vpop.permute.xlu0 %4127
        %4129 = vrot.lane.b32.xlu0 %v3391, 64
        %v4130 = vpop.permute.xlu0 %4129
        %4131 = vrot.lane.b32.xlu0 %v3663, 64
        %v4132 = vpop.permute.xlu0 %4131
        %4133 = vrot.lane.b32.xlu0 %v3935, 64
        %v4134 = vpop.permute.xlu0 %4133
        %4143 = vrot.lane.b32.xlu0 %v3120, 80
        %v4144 = vpop.permute.xlu0 %4143
        %4145 = vrot.lane.b32.xlu0 %v3392, 80
        %v4146 = vpop.permute.xlu0 %4145
        %4147 = vrot.lane.b32.xlu0 %v3664, 80
        %v4148 = vpop.permute.xlu0 %4147
        %4149 = vrot.lane.b32.xlu0 %v3936, 80
        %v4150 = vpop.permute.xlu0 %4149
        %4159 = vrot.lane.b32.xlu0 %v3121, 96
        %v4160 = vpop.permute.xlu0 %4159
        %4161 = vrot.lane.b32.xlu0 %v3393, 96
        %v4162 = vpop.permute.xlu0 %4161
        %4163 = vrot.lane.b32.xlu0 %v3665, 96
        %v4164 = vpop.permute.xlu0 %4163
        %4165 = vrot.lane.b32.xlu0 %v3937, 96
        %v4166 = vpop.permute.xlu0 %4165
        %4175 = vrot.lane.b32.xlu0 %v3122, 112
        %v4176 = vpop.permute.xlu0 %4175
        %4177 = vrot.lane.b32.xlu0 %v3394, 112
        %v4178 = vpop.permute.xlu0 %4177
        %4179 = vrot.lane.b32.xlu0 %v3666, 112
        %v4180 = vpop.permute.xlu0 %4179
        %4181 = vrot.lane.b32.xlu0 %v3938, 112
        %v4182 = vpop.permute.xlu0 %4181
        %4191 = vrot.lane.b32.xlu0 %v3252, 16
        %v4192 = vpop.permute.xlu0 %4191
        %4193 = vrot.lane.b32.xlu0 %v3524, 16
        %v4194 = vpop.permute.xlu0 %4193
        %4195 = vrot.lane.b32.xlu0 %v3796, 16
        %v4196 = vpop.permute.xlu0 %4195
        %4197 = vrot.lane.b32.xlu0 %v4068, 16
        %v4198 = vpop.permute.xlu0 %4197
        %4207 = vrot.lane.b32.xlu0 %v3253, 32
        %v4208 = vpop.permute.xlu0 %4207
        %4209 = vrot.lane.b32.xlu0 %v3525, 32
        %v4210 = vpop.permute.xlu0 %4209
        %4211 = vrot.lane.b32.xlu0 %v3797, 32
        %v4212 = vpop.permute.xlu0 %4211
        %4213 = vrot.lane.b32.xlu0 %v4069, 32
        %v4214 = vpop.permute.xlu0 %4213
        %4223 = vrot.lane.b32.xlu0 %v3254, 48
        %v4224 = vpop.permute.xlu0 %4223
        %4225 = vrot.lane.b32.xlu0 %v3526, 48
        %v4226 = vpop.permute.xlu0 %4225
        %4227 = vrot.lane.b32.xlu0 %v3798, 48
        %v4228 = vpop.permute.xlu0 %4227
        %4229 = vrot.lane.b32.xlu0 %v4070, 48
        %v4230 = vpop.permute.xlu0 %4229
        %4239 = vrot.lane.b32.xlu0 %v3255, 64
        %v4240 = vpop.permute.xlu0 %4239
        %4241 = vrot.lane.b32.xlu0 %v3527, 64
        %v4242 = vpop.permute.xlu0 %4241
        %4243 = vrot.lane.b32.xlu0 %v3799, 64
        %v4244 = vpop.permute.xlu0 %4243
        %4245 = vrot.lane.b32.xlu0 %v4071, 64
        %v4246 = vpop.permute.xlu0 %4245
        %4255 = vrot.lane.b32.xlu0 %v3256, 80
        %v4256 = vpop.permute.xlu0 %4255
        %4257 = vrot.lane.b32.xlu0 %v3528, 80
        %v4258 = vpop.permute.xlu0 %4257
        %4259 = vrot.lane.b32.xlu0 %v3800, 80
        %v4260 = vpop.permute.xlu0 %4259
        %4261 = vrot.lane.b32.xlu0 %v4072, 80
        %v4262 = vpop.permute.xlu0 %4261
        %4271 = vrot.lane.b32.xlu0 %v3257, 96
        %v4272 = vpop.permute.xlu0 %4271
        %4273 = vrot.lane.b32.xlu0 %v3529, 96
        %v4274 = vpop.permute.xlu0 %4273
        %4275 = vrot.lane.b32.xlu0 %v3801, 96
        %v4276 = vpop.permute.xlu0 %4275
        %4277 = vrot.lane.b32.xlu0 %v4073, 96
        %v4278 = vpop.permute.xlu0 %4277
        %4287 = vrot.lane.b32.xlu0 %v3258, 112
        %v4288 = vpop.permute.xlu0 %4287
        %4289 = vrot.lane.b32.xlu0 %v3530, 112
        %v4290 = vpop.permute.xlu0 %4289
        %4291 = vrot.lane.b32.xlu0 %v3802, 112
        %v4292 = vpop.permute.xlu0 %4291
        %4293 = vrot.lane.b32.xlu0 %v4074, 112
        %v4294 = vpop.permute.xlu0 %4293
        %vm4299 = vcmask 130048
        %v4300 = vsel %vm4299, %v3115, %v4080
        %v4301 = vsel %vm4299, %v3387, %v4082
        %v4302 = vsel %vm4299, %v3659, %v4084
        %v4303 = vsel %vm4299, %v3931, %v4086
        %vm4304 = vcmask 261120
        %v4305 = vsel %vm4304, %v4300, %v4096
        %v4306 = vsel %vm4304, %v4301, %v4098
        %v4307 = vsel %vm4304, %v4302, %v4100
        %v4308 = vsel %vm4304, %v4303, %v4102
        %vm4309 = vcmask 392192
        %v4310 = vsel %vm4309, %v4305, %v4112
        %v4311 = vsel %vm4309, %v4306, %v4114
        %v4312 = vsel %vm4309, %v4307, %v4116
        %v4313 = vsel %vm4309, %v4308, %v4118
        %vm4314 = vcmask 523264
        %v4315 = vsel %vm4314, %v4310, %v4128
        %v4316 = vsel %vm4314, %v4311, %v4130
        %v4317 = vsel %vm4314, %v4312, %v4132
        %v4318 = vsel %vm4314, %v4313, %v4134
        %vm4319 = vcmask 654336
        %v4320 = vsel %vm4319, %v4315, %v4144
        %v4321 = vsel %vm4319, %v4316, %v4146
        %v4322 = vsel %vm4319, %v4317, %v4148
        %v4323 = vsel %vm4319, %v4318, %v4150
        %vm4324 = vcmask 785408
        %v4325 = vsel %vm4324, %v4320, %v4160
        %v4326 = vsel %vm4324, %v4321, %v4162
        %v4327 = vsel %vm4324, %v4322, %v4164
        %v4328 = vsel %vm4324, %v4323, %v4166
        %vm4329 = vcmask 916480
        %v4330 = vsel %vm4329, %v4325, %v4176
        %v4331 = vsel %vm4329, %v4326, %v4178
        %v4332 = vsel %vm4329, %v4327, %v4180
        %v4333 = vsel %vm4329, %v4328, %v4182
        %v4334 = vsel %vm4299, %v3251, %v4192
        %v4335 = vsel %vm4299, %v3523, %v4194
        %v4336 = vsel %vm4299, %v3795, %v4196
        %v4337 = vsel %vm4299, %v4067, %v4198
        %v4338 = vsel %vm4304, %v4334, %v4208
        %v4339 = vsel %vm4304, %v4335, %v4210
        %v4340 = vsel %vm4304, %v4336, %v4212
        %v4341 = vsel %vm4304, %v4337, %v4214
        %v4342 = vsel %vm4309, %v4338, %v4224
        %v4343 = vsel %vm4309, %v4339, %v4226
        %v4344 = vsel %vm4309, %v4340, %v4228
        %v4345 = vsel %vm4309, %v4341, %v4230
        %v4346 = vsel %vm4314, %v4342, %v4240
        %v4347 = vsel %vm4314, %v4343, %v4242
        %v4348 = vsel %vm4314, %v4344, %v4244
        %v4349 = vsel %vm4314, %v4345, %v4246
        %v4350 = vsel %vm4319, %v4346, %v4256
        %v4351 = vsel %vm4319, %v4347, %v4258
        %v4352 = vsel %vm4319, %v4348, %v4260
        %v4353 = vsel %vm4319, %v4349, %v4262
        %v4354 = vsel %vm4324, %v4350, %v4272
        %v4355 = vsel %vm4324, %v4351, %v4274
        %v4356 = vsel %vm4324, %v4352, %v4276
        %v4357 = vsel %vm4324, %v4353, %v4278
        %v4358 = vsel %vm4329, %v4354, %v4288
        %v4359 = vsel %vm4329, %v4355, %v4290
        %v4360 = vsel %vm4329, %v4356, %v4292
        %v4361 = vsel %vm4329, %v4357, %v4294
        %v4362 = vld [vmem:[%s3] sm:$0xff]
        %v4363 = vld [vmem:[%s3 + $0x8] sm:$0xff]
        %v4365 = vsel %vm257, %v4362, 0
        %v4368 = vsel %vm257, %v4363, 0
        %4370 = vmatprep.subr.mxu0 0.0
        %4371 = vmatpush1.msra.mxu0 0.0
        %4372 = vmatprep.subr.mxu0 0.0
        %4373 = vmatpush1.msra.mxu0 0.0
        %4374 = vmatprep.subr.mxu0 0.0
        %4375 = vmatpush1.msra.mxu0 0.0
        %4376 = vmatprep.subr.mxu0 0.0
        %4377 = vmatpush1.msra.mxu0 0.0
        %4378 = vmatprep.subr.mxu0 0.0
        %4379 = vmatpush1.msra.mxu0 0.0
        %4380 = vmatprep.subr.mxu0 0.0
        %4381 = vmatpush1.msra.mxu0 0.0
        %4382 = vmatprep.subr.mxu0 0.0
        %4383 = vmatpush1.msra.mxu0 0.0
        %4384 = vmatprep.subr.mxu0 0.0
        %4385 = vmatpush1.msra.mxu0 0.0
        %4386 = vmatprep.subr.mxu0 0.0
        %4387 = vmatpush1.msra.mxu0 0.0
        %4388 = vmatprep.subr.mxu0 0.0
        %4389 = vmatpush1.msra.mxu0 0.0
        %4390 = vmatprep.subr.mxu0 0.0
        %4391 = vmatpush1.msra.mxu0 0.0
        %4392 = vmatprep.subr.mxu0 0.0
        %4393 = vmatpush1.msra.mxu0 0.0
        %4394 = vmatprep.subr.mxu0 0.0
        %4395 = vmatpush1.msra.mxu0 0.0
        %4396 = vmatprep.subr.mxu0 0.0
        %4397 = vmatpush1.msra.mxu0 0.0
        %4398 = vmatprep.subr.mxu0 0.0
        %4399 = vmatpush1.msra.mxu0 0.0
        %4400 = vmatprep.subr.mxu0 %v4358
        %4401 = vmatpush1.msra.mxu0 %v4330
        %4402 = vmatprep.subr.mxu0 0.0
        %4403 = vmatpush2.msra.mxu0 0.0
        %4404 = vmatprep.subr.mxu0 0.0
        %4405 = vmatpush2.msra.mxu0 0.0
        %4406 = vmatprep.subr.mxu0 0.0
        %4407 = vmatpush2.msra.mxu0 0.0
        %4408 = vmatprep.subr.mxu0 0.0
        %4409 = vmatpush2.msra.mxu0 0.0
        %4410 = vmatprep.subr.mxu0 0.0
        %4411 = vmatpush2.msra.mxu0 0.0
        %4412 = vmatprep.subr.mxu0 0.0
        %4413 = vmatpush2.msra.mxu0 0.0
        %4414 = vmatprep.subr.mxu0 0.0
        %4415 = vmatpush2.msra.mxu0 0.0
        %4416 = vmatprep.subr.mxu0 0.0
        %4417 = vmatpush2.msra.mxu0 0.0
        %4418 = vmatprep.subr.mxu0 0.0
        %4419 = vmatpush2.msra.mxu0 0.0
        %4420 = vmatprep.subr.mxu0 0.0
        %4421 = vmatpush2.msra.mxu0 0.0
        %4422 = vmatprep.subr.mxu0 0.0
        %4423 = vmatpush2.msra.mxu0 0.0
        %4424 = vmatprep.subr.mxu0 0.0
        %4425 = vmatpush2.msra.mxu0 0.0
        %4426 = vmatprep.subr.mxu0 0.0
        %4427 = vmatpush2.msra.mxu0 0.0
        %4428 = vmatprep.subr.mxu0 0.0
        %4429 = vmatpush2.msra.mxu0 0.0
        %4430 = vmatprep.subr.mxu0 0.0
        %4431 = vmatpush2.msra.mxu0 0.0
        %4432 = vmatprep.subr.mxu0 0.0
        %4433 = vmatpush2.msra.mxu0 0.0
        %4434 = vmatprep.mubr.f32.mxu0 0.0
        %4435 = vmatmul.mubr.f32.gmra.mxu0 %v4365
        %v4436 = vpop.f32.mrf.mxu0
        %v4437 = vadd.f32 0.0, %v4436
        %v4438 = vpop.f32.mrf.mxu0
        %v4439 = vadd.f32 0.0, %v4438
        %4440 = vmatprep.mubr.f32.mxu0 0.0
        %4441 = vmatmul.mubr.f32.gmra.mxu0 %v4368
        %v4442 = vpop.f32.mrf.mxu0
        %v4443 = vadd.f32 0.0, %v4442
        %v4444 = vpop.f32.mrf.mxu0
        %v4445 = vadd.f32 0.0, %v4444
        %4446 = vdwg.mxu0
        %4447 = vmatprep.subr.mxu0 0.0
        %4448 = vmatpush1.msra.mxu0 0.0
        %4449 = vmatprep.subr.mxu0 0.0
        %4450 = vmatpush1.msra.mxu0 0.0
        %4451 = vmatprep.subr.mxu0 0.0
        %4452 = vmatpush1.msra.mxu0 0.0
        %4453 = vmatprep.subr.mxu0 0.0
        %4454 = vmatpush1.msra.mxu0 0.0
        %4455 = vmatprep.subr.mxu0 0.0
        %4456 = vmatpush1.msra.mxu0 0.0
        %4457 = vmatprep.subr.mxu0 0.0
        %4458 = vmatpush1.msra.mxu0 0.0
        %4459 = vmatprep.subr.mxu0 0.0
        %4460 = vmatpush1.msra.mxu0 0.0
        %4461 = vmatprep.subr.mxu0 0.0
        %4462 = vmatpush1.msra.mxu0 0.0
        %4463 = vmatprep.subr.mxu0 0.0
        %4464 = vmatpush1.msra.mxu0 0.0
        %4465 = vmatprep.subr.mxu0 0.0
        %4466 = vmatpush1.msra.mxu0 0.0
        %4467 = vmatprep.subr.mxu0 0.0
        %4468 = vmatpush1.msra.mxu0 0.0
        %4469 = vmatprep.subr.mxu0 0.0
        %4470 = vmatpush1.msra.mxu0 0.0
        %4471 = vmatprep.subr.mxu0 0.0
        %4472 = vmatpush1.msra.mxu0 0.0
        %4473 = vmatprep.subr.mxu0 0.0
        %4474 = vmatpush1.msra.mxu0 0.0
        %4475 = vmatprep.subr.mxu0 0.0
        %4476 = vmatpush1.msra.mxu0 0.0
        %4477 = vmatprep.subr.mxu0 %v4359
        %4478 = vmatpush1.msra.mxu0 %v4331
        %4479 = vmatprep.subr.mxu0 0.0
        %4480 = vmatpush2.msra.mxu0 0.0
        %4481 = vmatprep.subr.mxu0 0.0
        %4482 = vmatpush2.msra.mxu0 0.0
        %4483 = vmatprep.subr.mxu0 0.0
        %4484 = vmatpush2.msra.mxu0 0.0
        %4485 = vmatprep.subr.mxu0 0.0
        %4486 = vmatpush2.msra.mxu0 0.0
        %4487 = vmatprep.subr.mxu0 0.0
        %4488 = vmatpush2.msra.mxu0 0.0
        %4489 = vmatprep.subr.mxu0 0.0
        %4490 = vmatpush2.msra.mxu0 0.0
        %4491 = vmatprep.subr.mxu0 0.0
        %4492 = vmatpush2.msra.mxu0 0.0
        %4493 = vmatprep.subr.mxu0 0.0
        %4494 = vmatpush2.msra.mxu0 0.0
        %4495 = vmatprep.subr.mxu0 0.0
        %4496 = vmatpush2.msra.mxu0 0.0
        %4497 = vmatprep.subr.mxu0 0.0
        %4498 = vmatpush2.msra.mxu0 0.0
        %4499 = vmatprep.subr.mxu0 0.0
        %4500 = vmatpush2.msra.mxu0 0.0
        %4501 = vmatprep.subr.mxu0 0.0
        %4502 = vmatpush2.msra.mxu0 0.0
        %4503 = vmatprep.subr.mxu0 0.0
        %4504 = vmatpush2.msra.mxu0 0.0
        %4505 = vmatprep.subr.mxu0 0.0
        %4506 = vmatpush2.msra.mxu0 0.0
        %4507 = vmatprep.subr.mxu0 0.0
        %4508 = vmatpush2.msra.mxu0 0.0
        %4509 = vmatprep.subr.mxu0 0.0
        %4510 = vmatpush2.msra.mxu0 0.0
        %4511 = vmatprep.mubr.f32.mxu0 0.0
        %4512 = vmatmul.mubr.f32.gmra.mxu0 %v4365
        %v4513 = vpop.f32.mrf.mxu0
        %v4514 = vadd.f32 0.0, %v4513
        %v4515 = vpop.f32.mrf.mxu0
        %v4516 = vadd.f32 0.0, %v4515
        %4517 = vmatprep.mubr.f32.mxu0 0.0
        %4518 = vmatmul.mubr.f32.gmra.mxu0 %v4368
        %v4519 = vpop.f32.mrf.mxu0
        %v4520 = vadd.f32 0.0, %v4519
        %v4521 = vpop.f32.mrf.mxu0
        %v4522 = vadd.f32 0.0, %v4521
        %4523 = vdwg.mxu0
        %4524 = vmatprep.subr.mxu0 0.0
        %4525 = vmatpush1.msra.mxu0 0.0
        %4526 = vmatprep.subr.mxu0 0.0
        %4527 = vmatpush1.msra.mxu0 0.0
        %4528 = vmatprep.subr.mxu0 0.0
        %4529 = vmatpush1.msra.mxu0 0.0
        %4530 = vmatprep.subr.mxu0 0.0
        %4531 = vmatpush1.msra.mxu0 0.0
        %4532 = vmatprep.subr.mxu0 0.0
        %4533 = vmatpush1.msra.mxu0 0.0
        %4534 = vmatprep.subr.mxu0 0.0
        %4535 = vmatpush1.msra.mxu0 0.0
        %4536 = vmatprep.subr.mxu0 0.0
        %4537 = vmatpush1.msra.mxu0 0.0
        %4538 = vmatprep.subr.mxu0 0.0
        %4539 = vmatpush1.msra.mxu0 0.0
        %4540 = vmatprep.subr.mxu0 0.0
        %4541 = vmatpush1.msra.mxu0 0.0
        %4542 = vmatprep.subr.mxu0 0.0
        %4543 = vmatpush1.msra.mxu0 0.0
        %4544 = vmatprep.subr.mxu0 0.0
        %4545 = vmatpush1.msra.mxu0 0.0
        %4546 = vmatprep.subr.mxu0 0.0
        %4547 = vmatpush1.msra.mxu0 0.0
        %4548 = vmatprep.subr.mxu0 0.0
        %4549 = vmatpush1.msra.mxu0 0.0
        %4550 = vmatprep.subr.mxu0 0.0
        %4551 = vmatpush1.msra.mxu0 0.0
        %4552 = vmatprep.subr.mxu0 0.0
        %4553 = vmatpush1.msra.mxu0 0.0
        %4554 = vmatprep.subr.mxu0 %v4360
        %4555 = vmatpush1.msra.mxu0 %v4332
        %4556 = vmatprep.subr.mxu0 0.0
        %4557 = vmatpush2.msra.mxu0 0.0
        %4558 = vmatprep.subr.mxu0 0.0
        %4559 = vmatpush2.msra.mxu0 0.0
        %4560 = vmatprep.subr.mxu0 0.0
        %4561 = vmatpush2.msra.mxu0 0.0
        %4562 = vmatprep.subr.mxu0 0.0
        %4563 = vmatpush2.msra.mxu0 0.0
        %4564 = vmatprep.subr.mxu0 0.0
        %4565 = vmatpush2.msra.mxu0 0.0
        %4566 = vmatprep.subr.mxu0 0.0
        %4567 = vmatpush2.msra.mxu0 0.0
        %4568 = vmatprep.subr.mxu0 0.0
        %4569 = vmatpush2.msra.mxu0 0.0
        %4570 = vmatprep.subr.mxu0 0.0
        %4571 = vmatpush2.msra.mxu0 0.0
        %4572 = vmatprep.subr.mxu0 0.0
        %4573 = vmatpush2.msra.mxu0 0.0
        %4574 = vmatprep.subr.mxu0 0.0
        %4575 = vmatpush2.msra.mxu0 0.0
        %4576 = vmatprep.subr.mxu0 0.0
        %4577 = vmatpush2.msra.mxu0 0.0
        %4578 = vmatprep.subr.mxu0 0.0
        %4579 = vmatpush2.msra.mxu0 0.0
        %4580 = vmatprep.subr.mxu0 0.0
        %4581 = vmatpush2.msra.mxu0 0.0
        %4582 = vmatprep.subr.mxu0 0.0
        %4583 = vmatpush2.msra.mxu0 0.0
        %4584 = vmatprep.subr.mxu0 0.0
        %4585 = vmatpush2.msra.mxu0 0.0
        %4586 = vmatprep.subr.mxu0 0.0
        %4587 = vmatpush2.msra.mxu0 0.0
        %4588 = vmatprep.mubr.f32.mxu0 0.0
        %4589 = vmatmul.mubr.f32.gmra.mxu0 %v4365
        %v4590 = vpop.f32.mrf.mxu0
        %v4591 = vadd.f32 0.0, %v4590
        %v4592 = vpop.f32.mrf.mxu0
        %v4593 = vadd.f32 0.0, %v4592
        %4594 = vmatprep.mubr.f32.mxu0 0.0
        %4595 = vmatmul.mubr.f32.gmra.mxu0 %v4368
        %v4596 = vpop.f32.mrf.mxu0
        %v4597 = vadd.f32 0.0, %v4596
        %v4598 = vpop.f32.mrf.mxu0
        %v4599 = vadd.f32 0.0, %v4598
        %4600 = vdwg.mxu0
        %4601 = vmatprep.subr.mxu0 0.0
        %4602 = vmatpush1.msra.mxu0 0.0
        %4603 = vmatprep.subr.mxu0 0.0
        %4604 = vmatpush1.msra.mxu0 0.0
        %4605 = vmatprep.subr.mxu0 0.0
        %4606 = vmatpush1.msra.mxu0 0.0
        %4607 = vmatprep.subr.mxu0 0.0
        %4608 = vmatpush1.msra.mxu0 0.0
        %4609 = vmatprep.subr.mxu0 0.0
        %4610 = vmatpush1.msra.mxu0 0.0
        %4611 = vmatprep.subr.mxu0 0.0
        %4612 = vmatpush1.msra.mxu0 0.0
        %4613 = vmatprep.subr.mxu0 0.0
        %4614 = vmatpush1.msra.mxu0 0.0
        %4615 = vmatprep.subr.mxu0 0.0
        %4616 = vmatpush1.msra.mxu0 0.0
        %4617 = vmatprep.subr.mxu0 0.0
        %4618 = vmatpush1.msra.mxu0 0.0
        %4619 = vmatprep.subr.mxu0 0.0
        %4620 = vmatpush1.msra.mxu0 0.0
        %4621 = vmatprep.subr.mxu0 0.0
        %4622 = vmatpush1.msra.mxu0 0.0
        %4623 = vmatprep.subr.mxu0 0.0
        %4624 = vmatpush1.msra.mxu0 0.0
        %4625 = vmatprep.subr.mxu0 0.0
        %4626 = vmatpush1.msra.mxu0 0.0
        %4627 = vmatprep.subr.mxu0 0.0
        %4628 = vmatpush1.msra.mxu0 0.0
        %4629 = vmatprep.subr.mxu0 0.0
        %4630 = vmatpush1.msra.mxu0 0.0
        %4631 = vmatprep.subr.mxu0 %v4361
        %4632 = vmatpush1.msra.mxu0 %v4333
        %4633 = vmatprep.subr.mxu0 0.0
        %4634 = vmatpush2.msra.mxu0 0.0
        %4635 = vmatprep.subr.mxu0 0.0
        %4636 = vmatpush2.msra.mxu0 0.0
        %4637 = vmatprep.subr.mxu0 0.0
        %4638 = vmatpush2.msra.mxu0 0.0
        %4639 = vmatprep.subr.mxu0 0.0
        %4640 = vmatpush2.msra.mxu0 0.0
        %4641 = vmatprep.subr.mxu0 0.0
        %4642 = vmatpush2.msra.mxu0 0.0
        %4643 = vmatprep.subr.mxu0 0.0
        %4644 = vmatpush2.msra.mxu0 0.0
        %4645 = vmatprep.subr.mxu0 0.0
        %4646 = vmatpush2.msra.mxu0 0.0
        %4647 = vmatprep.subr.mxu0 0.0
        %4648 = vmatpush2.msra.mxu0 0.0
        %4649 = vmatprep.subr.mxu0 0.0
        %4650 = vmatpush2.msra.mxu0 0.0
        %4651 = vmatprep.subr.mxu0 0.0
        %4652 = vmatpush2.msra.mxu0 0.0
        %4653 = vmatprep.subr.mxu0 0.0
        %4654 = vmatpush2.msra.mxu0 0.0
        %4655 = vmatprep.subr.mxu0 0.0
        %4656 = vmatpush2.msra.mxu0 0.0
        %4657 = vmatprep.subr.mxu0 0.0
        %4658 = vmatpush2.msra.mxu0 0.0
        %4659 = vmatprep.subr.mxu0 0.0
        %4660 = vmatpush2.msra.mxu0 0.0
        %4661 = vmatprep.subr.mxu0 0.0
        %4662 = vmatpush2.msra.mxu0 0.0
        %4663 = vmatprep.subr.mxu0 0.0
        %4664 = vmatpush2.msra.mxu0 0.0
        %4665 = vmatprep.mubr.f32.mxu0 0.0
        %4666 = vmatmul.mubr.f32.gmra.mxu0 %v4365
        %v4667 = vpop.f32.mrf.mxu0
        %v4668 = vadd.f32 0.0, %v4667
        %v4669 = vpop.f32.mrf.mxu0
        %v4670 = vadd.f32 0.0, %v4669
        %4671 = vmatprep.mubr.f32.mxu0 0.0
        %4672 = vmatmul.mubr.f32.gmra.mxu0 %v4368
        %v4673 = vpop.f32.mrf.mxu0
        %v4674 = vadd.f32 0.0, %v4673
        %v4675 = vpop.f32.mrf.mxu0
        %v4676 = vadd.f32 0.0, %v4675
        %4677 = vdwg.mxu0
        %v4678 = vpack.c.bf16 %v4443, %v4437
        %v4679 = vpack.c.bf16 %v4445, %v4439
        %v4680 = vpack.c.bf16 %v4520, %v4514
        %v4681 = vpack.c.bf16 %v4522, %v4516
        %v4682 = vpack.c.bf16 %v4597, %v4591
        %v4683 = vpack.c.bf16 %v4599, %v4593
        %v4684 = vpack.c.bf16 %v4674, %v4668
        %v4685 = vpack.c.bf16 %v4676, %v4670
        %v4694 = vunpack.c.l.b16 %v4678
        %v4695 = vunpack.c.l.b16 %v4679
        %v4696 = vunpack.c.h.b16 %v4678
        %v4697 = vunpack.c.h.b16 %v4679
        %v4698 = vunpack.c.l.b16 %v4680
        %v4699 = vunpack.c.l.b16 %v4681
        %v4700 = vunpack.c.h.b16 %v4680
        %v4701 = vunpack.c.h.b16 %v4681
        %v4702 = vunpack.c.l.b16 %v4682
        %v4703 = vunpack.c.l.b16 %v4683
        %v4704 = vunpack.c.h.b16 %v4682
        %v4705 = vunpack.c.h.b16 %v4683
        %v4706 = vunpack.c.l.b16 %v4684
        %v4707 = vunpack.c.l.b16 %v4685
        %v4708 = vunpack.c.h.b16 %v4684
        %v4709 = vunpack.c.h.b16 %v4685
        %v4710 = vpack.c.b16 %v4695, %v4694
        %v4711 = vpack.c.b16 %v4697, %v4696
        %v4712 = vpack.c.b16 %v4699, %v4698
        %v4713 = vpack.c.b16 %v4701, %v4700
        %v4714 = vpack.c.b16 %v4703, %v4702
        %v4715 = vpack.c.b16 %v4705, %v4704
        %v4716 = vpack.c.b16 %v4707, %v4706
        %v4717 = vpack.c.b16 %v4709, %v4708
        %vm4718 = vsmask.f32 256
        %vm4719 = vsmask.f32 4368
        %vm4720 = vmor %vm4718, %vm4719
        %v4722 = vshrl.u32 %v4710, 16
        %v4724 = vrot.slane %v4722, 7
        %v4725 = vshll.u32 %v4710, 16
        %v4727 = vor.u32 %v4724, %v4725
        %v4728 = vrot.slane %v4724, 4
        %v4730 = vshrl.u32 %v4711, 16
        %v4732 = vrot.slane %v4730, 7
        %v4733 = vshll.u32 %v4711, 16
        %v4735 = vor.u32 %v4732, %v4733
        %v4736 = vsel %vm4720, %v4728, %v4735
        %v4737 = vrot.slane %v4732, 4
        %v4739 = vshrl.u32 %v4712, 16
        %v4741 = vrot.slane %v4739, 7
        %v4742 = vshll.u32 %v4712, 16
        %v4744 = vor.u32 %v4741, %v4742
        %v4745 = vrot.slane %v4741, 4
        %v4747 = vshrl.u32 %v4713, 16
        %v4749 = vrot.slane %v4747, 7
        %v4750 = vshll.u32 %v4713, 16
        %v4752 = vor.u32 %v4749, %v4750
        %v4753 = vsel %vm4720, %v4745, %v4752
        %v4754 = vrot.slane %v4749, 4
        %v4756 = vshrl.u32 %v4714, 16
        %v4758 = vrot.slane %v4756, 7
        %v4759 = vshll.u32 %v4714, 16
        %v4761 = vor.u32 %v4758, %v4759
        %v4762 = vrot.slane %v4758, 4
        %v4764 = vshrl.u32 %v4715, 16
        %v4766 = vrot.slane %v4764, 7
        %v4767 = vshll.u32 %v4715, 16
        %v4769 = vor.u32 %v4766, %v4767
        %v4770 = vsel %vm4720, %v4762, %v4769
        %v4771 = vrot.slane %v4766, 4
        %v4773 = vshrl.u32 %v4716, 16
        %v4775 = vrot.slane %v4773, 7
        %v4776 = vshll.u32 %v4716, 16
        %v4778 = vor.u32 %v4775, %v4776
        %v4779 = vrot.slane %v4775, 4
        %v4781 = vshrl.u32 %v4717, 16
        %v4783 = vrot.slane %v4781, 7
        %v4784 = vshll.u32 %v4717, 16
        %v4786 = vor.u32 %v4783, %v4784
        %v4787 = vsel %vm4720, %v4779, %v4786
        %v4788 = vrot.slane %v4783, 4
        %vm4801 = vcmask 1043456
        %vm4802 = vsmask.f32 7938
        %vm4803 = vmand %vm4801, %vm4802
        %vm4804 = vcmask 1047556
        %vm4805 = vsmask.f32 7954
        %vm4806 = vmand %vm4804, %vm4805
        %vm4807 = vmor %vm4806, %vm4803
        %v4808 = vld [vmem:[%s221] sm:$0xff]
        %v4809 = vsel %vm4807, %v4727, %v4808
        %4810 = vst [vmem:[%s221] sm:$0xff] %v4809
        %4811 = vst [vmem:[%s221 + $0x8] sm:$0xff] %v4736
        %vm4812 = vcmask 1040384
        %vm4813 = vmand %vm4812, %vm4718
        %vm4814 = vcmask 1044484
        %vm4815 = vsmask.f32 4352
        %vm4816 = vmand %vm4814, %vm4815
        %vm4817 = vmor %vm4816, %vm4813
        %v4818 = vld [vmem:[%s221 + $0x10] sm:$0x11]
        %v4819 = vsel %vm4817, %v4737, %v4818
        %4820 = vst [vmem:[%s221 + $0x10] sm:$0x11] %v4819
        %v4821 = vld [vmem:[%s221 + $0x18] sm:$0xff]
        %v4822 = vsel %vm4807, %v4744, %v4821
        %4823 = vst [vmem:[%s221 + $0x18] sm:$0xff] %v4822
        %4824 = vst [vmem:[%s221 + $0x20] sm:$0xff] %v4753
        %v4825 = vld [vmem:[%s221 + $0x28] sm:$0x11]
        %v4826 = vsel %vm4817, %v4754, %v4825
        %4827 = vst [vmem:[%s221 + $0x28] sm:$0x11] %v4826
        %v4828 = vld [vmem:[%s221 + $0x30] sm:$0xff]
        %v4829 = vsel %vm4807, %v4761, %v4828
        %4830 = vst [vmem:[%s221 + $0x30] sm:$0xff] %v4829
        %4831 = vst [vmem:[%s221 + $0x38] sm:$0xff] %v4770
        %v4832 = vld [vmem:[%s221 + $0x40] sm:$0x11]
        %v4833 = vsel %vm4817, %v4771, %v4832
        %4834 = vst [vmem:[%s221 + $0x40] sm:$0x11] %v4833
        %v4835 = vld [vmem:[%s221 + $0x48] sm:$0xff]
        %v4836 = vsel %vm4807, %v4778, %v4835
        %4837 = vst [vmem:[%s221 + $0x48] sm:$0xff] %v4836
        %4838 = vst [vmem:[%s221 + $0x50] sm:$0xff] %v4787
        %v4839 = vld [vmem:[%s221 + $0x58] sm:$0x11]
        %v4840 = vsel %vm4817, %v4788, %v4839
        %4841 = vst [vmem:[%s221 + $0x58] sm:$0x11] %v4840
        %v4842 = vld [vmem:[%s221] sm:$0x11]
        %v4843 = vsel %vm4817, 0, %v4842
        %4844 = vst [vmem:[%s221] sm:$0x11] %v4843
        %v4845 = vld [vmem:[%s221 + $0x18] sm:$0x11]
        %v4846 = vsel %vm4817, 0, %v4845
        %4847 = vst [vmem:[%s221 + $0x18] sm:$0x11] %v4846
        %v4848 = vld [vmem:[%s221 + $0x30] sm:$0x11]
        %v4849 = vsel %vm4817, 0, %v4848
        %4850 = vst [vmem:[%s221 + $0x30] sm:$0x11] %v4849
        %v4851 = vld [vmem:[%s221 + $0x48] sm:$0x11]
        %v4852 = vsel %vm4817, 0, %v4851
        %4853 = vst [vmem:[%s221 + $0x48] sm:$0x11] %v4852
        %vm4854 = vmand %vm4812, %vm4802
        %vm4855 = vmand %vm4814, %vm4805
        %vm4856 = vmor %vm4855, %vm4854
        %v4857 = vld [vmem:[%s221 + $0x10] sm:$0x11]
        %v4858 = vsel %vm4856, 0, %v4857
        %4859 = vst [vmem:[%s221 + $0x10] sm:$0x11] %v4858
        %v4860 = vld [vmem:[%s221 + $0x28] sm:$0x11]
        %v4861 = vsel %vm4856, 0, %v4860
        %4862 = vst [vmem:[%s221 + $0x28] sm:$0x11] %v4861
        %v4863 = vld [vmem:[%s221 + $0x40] sm:$0x11]
        %v4864 = vsel %vm4856, 0, %v4863
        %4865 = vst [vmem:[%s221 + $0x40] sm:$0x11] %v4864
        %v4866 = vld [vmem:[%s221 + $0x58] sm:$0x11]
        %v4867 = vsel %vm4856, 0, %v4866
        %4868 = vst [vmem:[%s221 + $0x58] sm:$0x11] %v4867
        %s4869 = smul.u32 4, %s18
        %p4870 = scmp.lt.s32.totalorder %s4869, 7
        %s4871 = scalar_select %p4870, %s4869, 7
        %s4872 = smul.addr %s4871, 6
        %s4873 = smul.addr %s4872, 4
        %s4874 = scalar_lea.vmem %s4, %s4873
        // Predicated region
        $region41: #{tpu_custom_call.1} parent=35 // pred_check
          %p4875 = pneg %p125
        $region42: #{tpu_custom_call.1} parent=35 // pred_check_branch
          %4877 = sbr.rel (%p4875) target = $region44
        $region43: #{tpu_custom_call.1} parent=35 // pred_region
          %s4878 = smul.u32 4, %s18
        $region44: #{tpu_custom_call.1} parent=35 // pred_fallthru
          _
      $region36: #{tpu_custom_call.1} parent=5 // pred_fallthru
        _
      %p4879 = scmp.le.s32.totalorder 2, %s13
      // Predicated region
      $region45: #{tpu_custom_call.1} parent=5 // pred_check
        %p4880 = pneg %p4879
      $region46: #{tpu_custom_call.1} parent=5 // pred_check_branch
        %4882 = sbr.rel (%p4880) target = $region48
      $region47: #{tpu_custom_call.1} parent=5 // pred_region
        %s4883 = ssub.s32 %s13, 2
        // Predicated region
        $region49: #{tpu_custom_call.1} parent=47 // pred_check
          %p4884 = pneg %p131
        $region50: #{tpu_custom_call.1} parent=47 // pred_check_branch
          %4886 = sbr.rel (%p4884) target = $region52
        $region51: #{tpu_custom_call.1} parent=47 // pred_region
          %s4887 = smul.u32 4, %s19
          %p4888 = scmp.lt.s32.totalorder %s4887, 7
          %s4889 = scalar_select %p4888, %s4887, 7
          %s4890 = smul.addr %s4889, 6
          %s4891 = smul.addr %s4890, 4
          %s4892 = scalar_lea.vmem %s4, %s4891
        $region52: #{tpu_custom_call.1} parent=47 // pred_fallthru
          _
      $region48: #{tpu_custom_call.1} parent=5 // pred_fallthru
        _
    $region6: #{tpu_custom_call.1} parent=1 // loop_footer
      %s17 = sadd.s32 1, %s13
    $region7: #{tpu_custom_call.1} parent=1 // loop_footer_branch
      %12 = sbr.rel target = $region3
    $region8: #{tpu_custom_call.1} parent=1 // loop_exit
      _
    %4893 = vsyncpa [#allocation3], 1
    %s4894 = scalar_lea.sflag [#allocation3], 1
    %4895 = vsyncpa %s4894, 1

</llo_original>
